<compile_context>
chip_gen: v7x
topology: tpu7x:2x2x1
jax: 0.10.0
libtpu: 0.0.40
codegen_flags: <defaults>
</compile_context>

<pallas_src>
import jax
import jax.numpy as jnp
import numpy as np
from jax.experimental import pallas as pl
from jax.experimental.pallas import tpu as pltpu


# -----------------------------------------------------------------------------
# Fused kernel: alignment (1x1 conv per frame) + frame mean + KPN-style
# per-pixel softmax fusion, all in one grid step.  The `aligned` intermediate
# never makes an HBM round trip.
#
# grid = (B, S_total // S); both axes are "parallel" (no cross-step
# accumulation: all N frames of one (batch, hw-tile) are handled per step).
# -----------------------------------------------------------------------------
def _fused_kernel(x_ref, aw_ref, ab_ref, cw_ref, cb_ref,
                  aligned_ref, a_ave_ref, den_ref, d_ave_ref, filt_ref):
    """Block shapes:
      x_ref       : (N, 1, C, S, 128)  burst tile, native frame-major layout
      aw_ref      : SMEM (C*C,)        1x1-conv alignment weight (row-major)
      ab_ref      : SMEM (C,)          alignment bias
      cw_ref      : SMEM (N*N*C,)      pre-folded logit weights [n_in,n_out,c]
      cb_ref      : SMEM (N,)          pre-folded per-frame logit bias
      aligned_ref : (1, N, C, S, 128)
      a_ave_ref   : (1, C, S, 128)
      den_ref     : (1, N, C, S, 128)
      d_ave_ref   : (1, C, S, 128)
      filt_ref    : (1, N, S, 128)
    """
    N = x_ref.shape[0]
    C = x_ref.shape[2]
    inv_n = 1.0 / N

    # ---- Pass 1: alignment as unrolled VPU FMAs, streamed per frame --------
    # y[n, o] = sum_c aw[o, c] * x[n, c] + ab[o]   (scalar weights from SMEM)
    for n in range(N):
        xc = [x_ref[n, 0, c].astype(jnp.float32) for c in range(C)]
        for o in range(C):
            y = xc[0] * aw_ref[o * C + 0]
            for c in range(1, C):
                y = y + xc[c] * aw_ref[o * C + c]
            aligned_ref[0, n, o] = y + ab_ref[o]

    # aligned_ave: re-read the aligned output block (already resident in VMEM)
    for o in range(C):
        acc = aligned_ref[0, 0, o]
        for n in range(1, N):
            acc = acc + aligned_ref[0, n, o]
        a_ave_ref[0, o] = acc * inv_n

    # ---- Pass 2: per-pixel frame logits straight from x (pre-folded) -------
    # logits[m] = sum_{n,c} cw[n, m, c] * x[n, c] + cb[m]
    logits = []
    for m in range(N):
        acc = None
        for n in range(N):
            for c in range(C):
                term = x_ref[n, 0, c].astype(jnp.float32) * cw_ref[(n * N + m) * C + c]
                acc = term if acc is None else acc + term
        logits.append(acc + cb_ref[m])

    # softmax over the frame axis (exact division; memory-bound => free)
    mx = logits[0]
    for m in range(1, N):
        mx = jnp.maximum(mx, logits[m])
    p = [jnp.exp(logits[m] - mx) for m in range(N)]
    s = p[0]
    for m in range(1, N):
        s = s + p[m]
    inv_s = pl.reciprocal(s, approx=False)

    # ---- weighted fusion; aligned re-read from its output block ------------
    for m in range(N):
        w = p[m] * inv_s
        filt_ref[0, m] = w
        for o in range(C):
            den_ref[0, m, o] = w * aligned_ref[0, m, o]

    # denoised_ave: re-read the denoised output block
    for o in range(C):
        acc = den_ref[0, 0, o]
        for m in range(1, N):
            acc = acc + den_ref[0, m, o]
        d_ave_ref[0, o] = acc * inv_n


def _pick_sublane_tile(s_total, batch, max_s=128, min_steps=4):
    """Pick S (sublane rows of the (S, 128) pixel tile).

    Valid S must divide s_total and be a multiple of 8 (or equal s_total) to
    satisfy the (8, 128) block constraint.  max_s=128 gives tiles of up to
    16K pixels (the per-step double-buffered footprint is ~7.3 MiB for
    N=5, C=3 f32 — comfortably inside every generation's scoped-VMEM limit,
    including v7x's 64 MiB physical VMEM), which amortizes the ~0.35 us
    per-grid-step overhead.  Among valid candidates we prefer the largest S
    that still leaves >= min_steps total grid steps so v7x's two TensorCores
    both get work.
    """
    cands = [s for s in range(8, min(s_total, max_s) + 1, 8) if s_total % s == 0]
    if s_total <= max_s:
        cands.append(s_total)
    if not cands:
        # TODO(synk): no 8-aligned divisor <= max_s; fall back to the untiled
        # pixel axis (block equals full dim, always layout-legal).
        cands = [s_total]
    cands = sorted(set(cands))
    best = cands[-1]
    for s in reversed(cands):
        if batch * (s_total // s) >= min_steps:
            best = s
            break
    return best


# -----------------------------------------------------------------------------
# Wrapper: BurstAlignSTN.forward (use_alignment=True path)
# -----------------------------------------------------------------------------
def burst_align_stn_forward(burst, params):
    """burst: [N, B, C, H, W] (PyTorch layout). Returns the 6-tuple of outputs."""
    N, B, C, H, W = burst.shape
    HW = H * W
    assert HW % 128 == 0, "H*W must be a multiple of 128 for the lane axis"
    S_total = HW // 128

    align_w, align_b, dn_w, dn_b = params

    # Pre-fold the denoiser logit weights through the alignment 1x1 conv
    # (one-time O(N^2 C^2) cost outside the kernel):
    #   logits[m] = sum_{n,c} cw[n, m, c] * x[n, c] + cb[m]
    cw = jnp.einsum('nmc,cd->nmd', dn_w.astype(jnp.float32),
                    align_w.astype(jnp.float32))                       # (N, N, C)
    cb = jnp.einsum('nmc,c->m', dn_w.astype(jnp.float32),
                    align_b[:, 0].astype(jnp.float32)) + dn_b[:, 0]    # (N,)

    aw_flat = align_w.reshape(-1).astype(jnp.float32)    # (C*C,)
    ab_flat = align_b.reshape(-1).astype(jnp.float32)    # (C,)
    cw_flat = cw.reshape(-1).astype(jnp.float32)         # (N*N*C,)
    cb_flat = cb.astype(jnp.float32)                     # (N,)

    # Native frame-major layout; only collapse (H, W) -> (S_total, 128)
    # (free row-major reshape, NO transpose copy — the b<->n permutation lives
    # in the index_map).  No wrapper astype: the kernel casts on read.
    x = burst.reshape(N, B, C, S_total, 128)

    S = _pick_sublane_tile(S_total, B)
    grid = (B, S_total // S)

    # Real double-buffered per-step VMEM footprint (inputs + all outputs).
    in_itemsize = np.dtype(burst.dtype).itemsize
    block_bytes = S * 128 * (N * C * in_itemsize + (2 * N * C + 2 * C + N) * 4)
    vmem_limit = int(min(max(2 * block_bytes + (8 << 20), 16 << 20), 48 << 20))

    out_shape = (
        jax.ShapeDtypeStruct((B, N, C, S_total, 128), jnp.float32),   # aligned
        jax.ShapeDtypeStruct((B, C, S_total, 128), jnp.float32),      # aligned_ave
        jax.ShapeDtypeStruct((B, N, C, S_total, 128), jnp.float32),   # denoised
        jax.ShapeDtypeStruct((B, C, S_total, 128), jnp.float32),      # denoised_ave
        jax.ShapeDtypeStruct((B, N, S_total, 128), jnp.float32),      # denoised_filters
    )

    smem_spec = pl.BlockSpec(memory_space=pltpu.MemorySpace.SMEM)

    aligned, aligned_ave, denoised, denoised_ave, filters = pl.pallas_call(
        _fused_kernel,
        out_shape=out_shape,
        grid=grid,
        in_specs=[
            # burst in native [N, B, C, S_total, 128]; index_map does the permute.
            pl.BlockSpec((N, 1, C, S, 128), lambda b, t: (0, b, 0, t, 0)),
            smem_spec,   # aw_flat
            smem_spec,   # ab_flat
            smem_spec,   # cw_flat
            smem_spec,   # cb_flat
        ],
        out_specs=(
            pl.BlockSpec((1, N, C, S, 128), lambda b, t: (b, 0, 0, t, 0)),
            pl.BlockSpec((1, C, S, 128), lambda b, t: (b, 0, t, 0)),
            pl.BlockSpec((1, N, C, S, 128), lambda b, t: (b, 0, 0, t, 0)),
            pl.BlockSpec((1, C, S, 128), lambda b, t: (b, 0, t, 0)),
            pl.BlockSpec((1, N, S, 128), lambda b, t: (b, 0, t, 0)),
        ),
        compiler_params=pltpu.CompilerParams(
            dimension_semantics=("parallel", "parallel"),
            vmem_limit_bytes=vmem_limit),
    )(x, aw_flat, ab_flat, cw_flat, cb_flat)

    # aligned_filters = torch.zeros(B, N, 1, 1, 1)
    aligned_filters = jnp.zeros((B, N, 1, 1, 1), jnp.float32)

    return (aligned.reshape(B, N, C, H, W),
            aligned_ave.reshape(B, C, H, W),
            denoised.reshape(B, N, C, H, W),
            denoised_ave.reshape(B, C, H, W),
            aligned_filters,
            filters.reshape(B, N, 1, H, W))


def init_params(key, N, C):
    """Deterministic synthetic parameters (no checkpoint load)."""
    k1, k2, k3, k4 = jax.random.split(key, 4)
    align_w = jnp.eye(C, dtype=jnp.float32) \
        + 0.05 * jax.random.normal(k1, (C, C), jnp.float32)      # 1x1 conv weight
    align_b = 0.01 * jax.random.normal(k2, (C, 1), jnp.float32)  # bias per out-channel
    dn_w = 0.1 * jax.random.normal(k3, (N, N, C), jnp.float32)   # [n_in, n_out, c]
    dn_b = 0.01 * jax.random.normal(k4, (N, 1), jnp.float32)     # per-frame logit bias
    return align_w, align_b, dn_w, dn_b


def _reference_forward(burst, params):
    """Pure-JAX reference of the stand-in align + KPN-fusion forward."""
    align_w, align_b, dn_w, dn_b = params
    N, B, C, H, W = burst.shape
    x = jnp.transpose(burst, (1, 0, 2, 3, 4)).reshape(B, N, C, H * W).astype(jnp.float32)
    y = jnp.einsum('oc,bnct->bnot', align_w, x) + align_b[None, None]
    a_ave = jnp.mean(y, axis=1)
    logits = jnp.einsum('imc,bict->bmt', dn_w, y) + dn_b[None]
    wts = jax.nn.softmax(logits, axis=1)
    den = wts[:, :, None, :] * y
    d_ave = jnp.mean(den, axis=1)
    return y, a_ave, den, d_ave, wts


if __name__ == "__main__":
    # burst: [N, batch, 3, H, W]
    N, B, C, H, W = 5, 2, 3, 16, 16
    key = jax.random.PRNGKey(0)
    kx, kp = jax.random.split(key)
    burst = jax.random.normal(kx, (N, B, C, H, W), jnp.float32)
    params = init_params(kp, N, C)

    outs = jax.jit(burst_align_stn_forward)(burst, params)
    outs = jax.block_until_ready(outs)

    (aligned, aligned_ave, denoised, denoised_ave,
     aligned_filters, denoised_filters) = outs
    assert aligned.shape == (B, N, C, H, W)
    assert aligned_ave.shape == (B, C, H, W)
    assert denoised.shape == (B, N, C, H, W)
    assert denoised_ave.shape == (B, C, H, W)
    assert aligned_filters.shape == (B, N, 1, 1, 1)
    assert denoised_filters.shape == (B, N, 1, H, W)

    # Numeric check against a pure-JAX reference (exact softmax division now,
    # so the tolerance is tight; remaining delta is f32 reassociation from the
    # pre-folded logit weights).
    ry, ra, rd, rda, rw = _reference_forward(burst, params)
    tol = dict(rtol=1e-4, atol=1e-5)
    np.testing.assert_allclose(np.asarray(aligned).reshape(B, N, C, H * W),
                               np.asarray(ry), **tol)
    np.testing.assert_allclose(np.asarray(aligned_ave).reshape(B, C, H * W),
                               np.asarray(ra), **tol)
    np.testing.assert_allclose(np.asarray(denoised).reshape(B, N, C, H * W),
                               np.asarray(rd), **tol)
    np.testing.assert_allclose(np.asarray(denoised_ave).reshape(B, C, H * W),
                               np.asarray(rda), **tol)
    np.testing.assert_allclose(np.asarray(denoised_filters).reshape(B, N, H * W),
                               np.asarray(rw), **tol)

    print("KERNEL_OK")
</pallas_src>

<mosaic_0001>
module attributes {stable_mosaic.version = 11 : i64} {
  func.func @_fused_kernel(%arg0: i32, %arg1: i32, %arg2: memref<5x1x3x2x128xf32, #tpu.memory_space<vmem>>, %arg3: memref<9xf32, #tpu.memory_space<smem>>, %arg4: memref<3xf32, #tpu.memory_space<smem>>, %arg5: memref<75xf32, #tpu.memory_space<smem>>, %arg6: memref<5xf32, #tpu.memory_space<smem>>, %arg7: memref<1x5x3x2x128xf32, #tpu.memory_space<vmem>>, %arg8: memref<1x3x2x128xf32, #tpu.memory_space<vmem>>, %arg9: memref<1x5x3x2x128xf32, #tpu.memory_space<vmem>>, %arg10: memref<1x3x2x128xf32, #tpu.memory_space<vmem>>, %arg11: memref<1x5x2x128xf32, #tpu.memory_space<vmem>>) attributes {dimension_semantics = [#tpu.dimension_semantics<parallel>, #tpu.dimension_semantics<parallel>], iteration_bounds = array<i64: 2, 1>, scalar_prefetch = 0 : i64, scratch_operands = 0 : i64, tpu.core_type = #tpu.core_type<tc>, window_params = [{transform_indices = @transform_0, window_bounds = array<i64: 5, 1, 3, 2, 128>}, {transform_indices = @transform_1, window_bounds = array<i64: 9>}, {transform_indices = @transform_2, window_bounds = array<i64: 3>}, {transform_indices = @transform_3, window_bounds = array<i64: 75>}, {transform_indices = @transform_4, window_bounds = array<i64: 5>}, {transform_indices = @transform_5, window_bounds = array<i64: 1, 5, 3, 2, 128>}, {transform_indices = @transform_6, window_bounds = array<i64: 1, 3, 2, 128>}, {transform_indices = @transform_7, window_bounds = array<i64: 1, 5, 3, 2, 128>}, {transform_indices = @transform_8, window_bounds = array<i64: 1, 3, 2, 128>}, {transform_indices = @transform_9, window_bounds = array<i64: 1, 5, 2, 128>}]} {
    %c0 = arith.constant 0 : index
    %c0_0 = arith.constant 0 : index
    %c0_1 = arith.constant 0 : index
    %c0_2 = arith.constant 0 : index
    %c0_3 = arith.constant 0 : index
    %0 = vector.load %arg2[%c0, %c0_0, %c0_1, %c0_2, %c0_3] : memref<5x1x3x2x128xf32, #tpu.memory_space<vmem>>, vector<1x1x1x2x128xf32>
    %1 = vector.shape_cast %0 : vector<1x1x1x2x128xf32> to vector<2x128xf32>
    %c0_4 = arith.constant 0 : index
    %c0_5 = arith.constant 0 : index
    %c1 = arith.constant 1 : index
    %c0_6 = arith.constant 0 : index
    %c0_7 = arith.constant 0 : index
    %2 = vector.load %arg2[%c0_4, %c0_5, %c1, %c0_6, %c0_7] : memref<5x1x3x2x128xf32, #tpu.memory_space<vmem>>, vector<1x1x1x2x128xf32>
    %3 = vector.shape_cast %2 : vector<1x1x1x2x128xf32> to vector<2x128xf32>
    %c0_8 = arith.constant 0 : index
    %c0_9 = arith.constant 0 : index
    %c2 = arith.constant 2 : index
    %c0_10 = arith.constant 0 : index
    %c0_11 = arith.constant 0 : index
    %4 = vector.load %arg2[%c0_8, %c0_9, %c2, %c0_10, %c0_11] : memref<5x1x3x2x128xf32, #tpu.memory_space<vmem>>, vector<1x1x1x2x128xf32>
    %5 = vector.shape_cast %4 : vector<1x1x1x2x128xf32> to vector<2x128xf32>
    %c0_12 = arith.constant 0 : index
    %6 = memref.load %arg3[%c0_12] : memref<9xf32, #tpu.memory_space<smem>>
    %7 = vector.broadcast %6 : f32 to vector<2x128xf32>
    %8 = arith.mulf %1, %7 : vector<2x128xf32>
    %c1_13 = arith.constant 1 : index
    %9 = memref.load %arg3[%c1_13] : memref<9xf32, #tpu.memory_space<smem>>
    %10 = vector.broadcast %9 : f32 to vector<2x128xf32>
    %11 = arith.mulf %3, %10 : vector<2x128xf32>
    %12 = arith.addf %8, %11 : vector<2x128xf32>
    %c2_14 = arith.constant 2 : index
    %13 = memref.load %arg3[%c2_14] : memref<9xf32, #tpu.memory_space<smem>>
    %14 = vector.broadcast %13 : f32 to vector<2x128xf32>
    %15 = arith.mulf %5, %14 : vector<2x128xf32>
    %16 = arith.addf %12, %15 : vector<2x128xf32>
    %c0_15 = arith.constant 0 : index
    %17 = memref.load %arg4[%c0_15] : memref<3xf32, #tpu.memory_space<smem>>
    %18 = vector.broadcast %17 : f32 to vector<2x128xf32>
    %19 = arith.addf %16, %18 : vector<2x128xf32>
    %c0_16 = arith.constant 0 : index
    %c0_17 = arith.constant 0 : index
    %c0_18 = arith.constant 0 : index
    %c0_19 = arith.constant 0 : index
    %c0_20 = arith.constant 0 : index
    %20 = vector.load %arg7[%c0_16, %c0_17, %c0_18, %c0_19, %c0_20] : memref<1x5x3x2x128xf32, #tpu.memory_space<vmem>>, vector<1x1x1x2x128xf32>
    %21 = vector.shape_cast %20 : vector<1x1x1x2x128xf32> to vector<2x128xf32>
    %22 = vector.shape_cast %19 : vector<2x128xf32> to vector<1x1x1x2x128xf32>
    tpu.vector_store %arg7[%c0_16, %c0_17, %c0_18, %c0_19, %c0_20], %22 {strides = array<i32>} : memref<1x5x3x2x128xf32, #tpu.memory_space<vmem>>, vector<1x1x1x2x128xf32>,
    %c3 = arith.constant 3 : index
    %23 = memref.load %arg3[%c3] : memref<9xf32, #tpu.memory_space<smem>>
    %24 = vector.broadcast %23 : f32 to vector<2x128xf32>
    %25 = arith.mulf %1, %24 : vector<2x128xf32>
    %c4 = arith.constant 4 : index
    %26 = memref.load %arg3[%c4] : memref<9xf32, #tpu.memory_space<smem>>
    %27 = vector.broadcast %26 : f32 to vector<2x128xf32>
    %28 = arith.mulf %3, %27 : vector<2x128xf32>
    %29 = arith.addf %25, %28 : vector<2x128xf32>
    %c5 = arith.constant 5 : index
    %30 = memref.load %arg3[%c5] : memref<9xf32, #tpu.memory_space<smem>>
    %31 = vector.broadcast %30 : f32 to vector<2x128xf32>
    %32 = arith.mulf %5, %31 : vector<2x128xf32>
    %33 = arith.addf %29, %32 : vector<2x128xf32>
    %c1_21 = arith.constant 1 : index
    %34 = memref.load %arg4[%c1_21] : memref<3xf32, #tpu.memory_space<smem>>
    %35 = vector.broadcast %34 : f32 to vector<2x128xf32>
    %36 = arith.addf %33, %35 : vector<2x128xf32>
    %c0_22 = arith.constant 0 : index
    %c0_23 = arith.constant 0 : index
    %c1_24 = arith.constant 1 : index
    %c0_25 = arith.constant 0 : index
    %c0_26 = arith.constant 0 : index
    %37 = vector.load %arg7[%c0_22, %c0_23, %c1_24, %c0_25, %c0_26] : memref<1x5x3x2x128xf32, #tpu.memory_space<vmem>>, vector<1x1x1x2x128xf32>
    %38 = vector.shape_cast %37 : vector<1x1x1x2x128xf32> to vector<2x128xf32>
    %39 = vector.shape_cast %36 : vector<2x128xf32> to vector<1x1x1x2x128xf32>
    tpu.vector_store %arg7[%c0_22, %c0_23, %c1_24, %c0_25, %c0_26], %39 {strides = array<i32>} : memref<1x5x3x2x128xf32, #tpu.memory_space<vmem>>, vector<1x1x1x2x128xf32>,
    %c6 = arith.constant 6 : index
    %40 = memref.load %arg3[%c6] : memref<9xf32, #tpu.memory_space<smem>>
    %41 = vector.broadcast %40 : f32 to vector<2x128xf32>
    %42 = arith.mulf %1, %41 : vector<2x128xf32>
    %c7 = arith.constant 7 : index
    %43 = memref.load %arg3[%c7] : memref<9xf32, #tpu.memory_space<smem>>
    %44 = vector.broadcast %43 : f32 to vector<2x128xf32>
    %45 = arith.mulf %3, %44 : vector<2x128xf32>
    %46 = arith.addf %42, %45 : vector<2x128xf32>
    %c8 = arith.constant 8 : index
    %47 = memref.load %arg3[%c8] : memref<9xf32, #tpu.memory_space<smem>>
    %48 = vector.broadcast %47 : f32 to vector<2x128xf32>
    %49 = arith.mulf %5, %48 : vector<2x128xf32>
    %50 = arith.addf %46, %49 : vector<2x128xf32>
    %c2_27 = arith.constant 2 : index
    %51 = memref.load %arg4[%c2_27] : memref<3xf32, #tpu.memory_space<smem>>
    %52 = vector.broadcast %51 : f32 to vector<2x128xf32>
    %53 = arith.addf %50, %52 : vector<2x128xf32>
    %c0_28 = arith.constant 0 : index
    %c0_29 = arith.constant 0 : index
    %c2_30 = arith.constant 2 : index
    %c0_31 = arith.constant 0 : index
    %c0_32 = arith.constant 0 : index
    %54 = vector.load %arg7[%c0_28, %c0_29, %c2_30, %c0_31, %c0_32] : memref<1x5x3x2x128xf32, #tpu.memory_space<vmem>>, vector<1x1x1x2x128xf32>
    %55 = vector.shape_cast %54 : vector<1x1x1x2x128xf32> to vector<2x128xf32>
    %56 = vector.shape_cast %53 : vector<2x128xf32> to vector<1x1x1x2x128xf32>
    tpu.vector_store %arg7[%c0_28, %c0_29, %c2_30, %c0_31, %c0_32], %56 {strides = array<i32>} : memref<1x5x3x2x128xf32, #tpu.memory_space<vmem>>, vector<1x1x1x2x128xf32>,
    %c1_33 = arith.constant 1 : index
    %c0_34 = arith.constant 0 : index
    %c0_35 = arith.constant 0 : index
    %c0_36 = arith.constant 0 : index
    %c0_37 = arith.constant 0 : index
    %57 = vector.load %arg2[%c1_33, %c0_34, %c0_35, %c0_36, %c0_37] : memref<5x1x3x2x128xf32, #tpu.memory_space<vmem>>, vector<1x1x1x2x128xf32>
    %58 = vector.shape_cast %57 : vector<1x1x1x2x128xf32> to vector<2x128xf32>
    %c1_38 = arith.constant 1 : index
    %c0_39 = arith.constant 0 : index
    %c1_40 = arith.constant 1 : index
    %c0_41 = arith.constant 0 : index
    %c0_42 = arith.constant 0 : index
    %59 = vector.load %arg2[%c1_38, %c0_39, %c1_40, %c0_41, %c0_42] : memref<5x1x3x2x128xf32, #tpu.memory_space<vmem>>, vector<1x1x1x2x128xf32>
    %60 = vector.shape_cast %59 : vector<1x1x1x2x128xf32> to vector<2x128xf32>
    %c1_43 = arith.constant 1 : index
    %c0_44 = arith.constant 0 : index
    %c2_45 = arith.constant 2 : index
    %c0_46 = arith.constant 0 : index
    %c0_47 = arith.constant 0 : index
    %61 = vector.load %arg2[%c1_43, %c0_44, %c2_45, %c0_46, %c0_47] : memref<5x1x3x2x128xf32, #tpu.memory_space<vmem>>, vector<1x1x1x2x128xf32>
    %62 = vector.shape_cast %61 : vector<1x1x1x2x128xf32> to vector<2x128xf32>
    %c0_48 = arith.constant 0 : index
    %63 = memref.load %arg3[%c0_48] : memref<9xf32, #tpu.memory_space<smem>>
    %64 = vector.broadcast %63 : f32 to vector<2x128xf32>
    %65 = arith.mulf %58, %64 : vector<2x128xf32>
    %c1_49 = arith.constant 1 : index
    %66 = memref.load %arg3[%c1_49] : memref<9xf32, #tpu.memory_space<smem>>
    %67 = vector.broadcast %66 : f32 to vector<2x128xf32>
    %68 = arith.mulf %60, %67 : vector<2x128xf32>
    %69 = arith.addf %65, %68 : vector<2x128xf32>
    %c2_50 = arith.constant 2 : index
    %70 = memref.load %arg3[%c2_50] : memref<9xf32, #tpu.memory_space<smem>>
    %71 = vector.broadcast %70 : f32 to vector<2x128xf32>
    %72 = arith.mulf %62, %71 : vector<2x128xf32>
    %73 = arith.addf %69, %72 : vector<2x128xf32>
    %c0_51 = arith.constant 0 : index
    %74 = memref.load %arg4[%c0_51] : memref<3xf32, #tpu.memory_space<smem>>
    %75 = vector.broadcast %74 : f32 to vector<2x128xf32>
    %76 = arith.addf %73, %75 : vector<2x128xf32>
    %c0_52 = arith.constant 0 : index
    %c1_53 = arith.constant 1 : index
    %c0_54 = arith.constant 0 : index
    %c0_55 = arith.constant 0 : index
    %c0_56 = arith.constant 0 : index
    %77 = vector.load %arg7[%c0_52, %c1_53, %c0_54, %c0_55, %c0_56] : memref<1x5x3x2x128xf32, #tpu.memory_space<vmem>>, vector<1x1x1x2x128xf32>
    %78 = vector.shape_cast %77 : vector<1x1x1x2x128xf32> to vector<2x128xf32>
    %79 = vector.shape_cast %76 : vector<2x128xf32> to vector<1x1x1x2x128xf32>
    tpu.vector_store %arg7[%c0_52, %c1_53, %c0_54, %c0_55, %c0_56], %79 {strides = array<i32>} : memref<1x5x3x2x128xf32, #tpu.memory_space<vmem>>, vector<1x1x1x2x128xf32>,
    %c3_57 = arith.constant 3 : index
    %80 = memref.load %arg3[%c3_57] : memref<9xf32, #tpu.memory_space<smem>>
    %81 = vector.broadcast %80 : f32 to vector<2x128xf32>
    %82 = arith.mulf %58, %81 : vector<2x128xf32>
    %c4_58 = arith.constant 4 : index
    %83 = memref.load %arg3[%c4_58] : memref<9xf32, #tpu.memory_space<smem>>
    %84 = vector.broadcast %83 : f32 to vector<2x128xf32>
    %85 = arith.mulf %60, %84 : vector<2x128xf32>
    %86 = arith.addf %82, %85 : vector<2x128xf32>
    %c5_59 = arith.constant 5 : index
    %87 = memref.load %arg3[%c5_59] : memref<9xf32, #tpu.memory_space<smem>>
    %88 = vector.broadcast %87 : f32 to vector<2x128xf32>
    %89 = arith.mulf %62, %88 : vector<2x128xf32>
    %90 = arith.addf %86, %89 : vector<2x128xf32>
    %c1_60 = arith.constant 1 : index
    %91 = memref.load %arg4[%c1_60] : memref<3xf32, #tpu.memory_space<smem>>
    %92 = vector.broadcast %91 : f32 to vector<2x128xf32>
    %93 = arith.addf %90, %92 : vector<2x128xf32>
    %c0_61 = arith.constant 0 : index
    %c1_62 = arith.constant 1 : index
    %c1_63 = arith.constant 1 : index
    %c0_64 = arith.constant 0 : index
    %c0_65 = arith.constant 0 : index
    %94 = vector.load %arg7[%c0_61, %c1_62, %c1_63, %c0_64, %c0_65] : memref<1x5x3x2x128xf32, #tpu.memory_space<vmem>>, vector<1x1x1x2x128xf32>
    %95 = vector.shape_cast %94 : vector<1x1x1x2x128xf32> to vector<2x128xf32>
    %96 = vector.shape_cast %93 : vector<2x128xf32> to vector<1x1x1x2x128xf32>
    tpu.vector_store %arg7[%c0_61, %c1_62, %c1_63, %c0_64, %c0_65], %96 {strides = array<i32>} : memref<1x5x3x2x128xf32, #tpu.memory_space<vmem>>, vector<1x1x1x2x128xf32>,
    %c6_66 = arith.constant 6 : index
    %97 = memref.load %arg3[%c6_66] : memref<9xf32, #tpu.memory_space<smem>>
    %98 = vector.broadcast %97 : f32 to vector<2x128xf32>
    %99 = arith.mulf %58, %98 : vector<2x128xf32>
    %c7_67 = arith.constant 7 : index
    %100 = memref.load %arg3[%c7_67] : memref<9xf32, #tpu.memory_space<smem>>
    %101 = vector.broadcast %100 : f32 to vector<2x128xf32>
    %102 = arith.mulf %60, %101 : vector<2x128xf32>
    %103 = arith.addf %99, %102 : vector<2x128xf32>
    %c8_68 = arith.constant 8 : index
    %104 = memref.load %arg3[%c8_68] : memref<9xf32, #tpu.memory_space<smem>>
    %105 = vector.broadcast %104 : f32 to vector<2x128xf32>
    %106 = arith.mulf %62, %105 : vector<2x128xf32>
    %107 = arith.addf %103, %106 : vector<2x128xf32>
    %c2_69 = arith.constant 2 : index
    %108 = memref.load %arg4[%c2_69] : memref<3xf32, #tpu.memory_space<smem>>
    %109 = vector.broadcast %108 : f32 to vector<2x128xf32>
    %110 = arith.addf %107, %109 : vector<2x128xf32>
    %c0_70 = arith.constant 0 : index
    %c1_71 = arith.constant 1 : index
    %c2_72 = arith.constant 2 : index
    %c0_73 = arith.constant 0 : index
    %c0_74 = arith.constant 0 : index
    %111 = vector.load %arg7[%c0_70, %c1_71, %c2_72, %c0_73, %c0_74] : memref<1x5x3x2x128xf32, #tpu.memory_space<vmem>>, vector<1x1x1x2x128xf32>
    %112 = vector.shape_cast %111 : vector<1x1x1x2x128xf32> to vector<2x128xf32>
    %113 = vector.shape_cast %110 : vector<2x128xf32> to vector<1x1x1x2x128xf32>
    tpu.vector_store %arg7[%c0_70, %c1_71, %c2_72, %c0_73, %c0_74], %113 {strides = array<i32>} : memref<1x5x3x2x128xf32, #tpu.memory_space<vmem>>, vector<1x1x1x2x128xf32>,
    %c2_75 = arith.constant 2 : index
    %c0_76 = arith.constant 0 : index
    %c0_77 = arith.constant 0 : index
    %c0_78 = arith.constant 0 : index
    %c0_79 = arith.constant 0 : index
    %114 = vector.load %arg2[%c2_75, %c0_76, %c0_77, %c0_78, %c0_79] : memref<5x1x3x2x128xf32, #tpu.memory_space<vmem>>, vector<1x1x1x2x128xf32>
    %115 = vector.shape_cast %114 : vector<1x1x1x2x128xf32> to vector<2x128xf32>
    %c2_80 = arith.constant 2 : index
    %c0_81 = arith.constant 0 : index
    %c1_82 = arith.constant 1 : index
    %c0_83 = arith.constant 0 : index
    %c0_84 = arith.constant 0 : index
    %116 = vector.load %arg2[%c2_80, %c0_81, %c1_82, %c0_83, %c0_84] : memref<5x1x3x2x128xf32, #tpu.memory_space<vmem>>, vector<1x1x1x2x128xf32>
    %117 = vector.shape_cast %116 : vector<1x1x1x2x128xf32> to vector<2x128xf32>
    %c2_85 = arith.constant 2 : index
    %c0_86 = arith.constant 0 : index
    %c2_87 = arith.constant 2 : index
    %c0_88 = arith.constant 0 : index
    %c0_89 = arith.constant 0 : index
    %118 = vector.load %arg2[%c2_85, %c0_86, %c2_87, %c0_88, %c0_89] : memref<5x1x3x2x128xf32, #tpu.memory_space<vmem>>, vector<1x1x1x2x128xf32>
    %119 = vector.shape_cast %118 : vector<1x1x1x2x128xf32> to vector<2x128xf32>
    %c0_90 = arith.constant 0 : index
    %120 = memref.load %arg3[%c0_90] : memref<9xf32, #tpu.memory_space<smem>>
    %121 = vector.broadcast %120 : f32 to vector<2x128xf32>
    %122 = arith.mulf %115, %121 : vector<2x128xf32>
    %c1_91 = arith.constant 1 : index
    %123 = memref.load %arg3[%c1_91] : memref<9xf32, #tpu.memory_space<smem>>
    %124 = vector.broadcast %123 : f32 to vector<2x128xf32>
    %125 = arith.mulf %117, %124 : vector<2x128xf32>
    %126 = arith.addf %122, %125 : vector<2x128xf32>
    %c2_92 = arith.constant 2 : index
    %127 = memref.load %arg3[%c2_92] : memref<9xf32, #tpu.memory_space<smem>>
    %128 = vector.broadcast %127 : f32 to vector<2x128xf32>
    %129 = arith.mulf %119, %128 : vector<2x128xf32>
    %130 = arith.addf %126, %129 : vector<2x128xf32>
    %c0_93 = arith.constant 0 : index
    %131 = memref.load %arg4[%c0_93] : memref<3xf32, #tpu.memory_space<smem>>
    %132 = vector.broadcast %131 : f32 to vector<2x128xf32>
    %133 = arith.addf %130, %132 : vector<2x128xf32>
    %c0_94 = arith.constant 0 : index
    %c2_95 = arith.constant 2 : index
    %c0_96 = arith.constant 0 : index
    %c0_97 = arith.constant 0 : index
    %c0_98 = arith.constant 0 : index
    %134 = vector.load %arg7[%c0_94, %c2_95, %c0_96, %c0_97, %c0_98] : memref<1x5x3x2x128xf32, #tpu.memory_space<vmem>>, vector<1x1x1x2x128xf32>
    %135 = vector.shape_cast %134 : vector<1x1x1x2x128xf32> to vector<2x128xf32>
    %136 = vector.shape_cast %133 : vector<2x128xf32> to vector<1x1x1x2x128xf32>
    tpu.vector_store %arg7[%c0_94, %c2_95, %c0_96, %c0_97, %c0_98], %136 {strides = array<i32>} : memref<1x5x3x2x128xf32, #tpu.memory_space<vmem>>, vector<1x1x1x2x128xf32>,
    %c3_99 = arith.constant 3 : index
    %137 = memref.load %arg3[%c3_99] : memref<9xf32, #tpu.memory_space<smem>>
    %138 = vector.broadcast %137 : f32 to vector<2x128xf32>
    %139 = arith.mulf %115, %138 : vector<2x128xf32>
    %c4_100 = arith.constant 4 : index
    %140 = memref.load %arg3[%c4_100] : memref<9xf32, #tpu.memory_space<smem>>
    %141 = vector.broadcast %140 : f32 to vector<2x128xf32>
    %142 = arith.mulf %117, %141 : vector<2x128xf32>
    %143 = arith.addf %139, %142 : vector<2x128xf32>
    %c5_101 = arith.constant 5 : index
    %144 = memref.load %arg3[%c5_101] : memref<9xf32, #tpu.memory_space<smem>>
    %145 = vector.broadcast %144 : f32 to vector<2x128xf32>
    %146 = arith.mulf %119, %145 : vector<2x128xf32>
    %147 = arith.addf %143, %146 : vector<2x128xf32>
    %c1_102 = arith.constant 1 : index
    %148 = memref.load %arg4[%c1_102] : memref<3xf32, #tpu.memory_space<smem>>
    %149 = vector.broadcast %148 : f32 to vector<2x128xf32>
    %150 = arith.addf %147, %149 : vector<2x128xf32>
    %c0_103 = arith.constant 0 : index
    %c2_104 = arith.constant 2 : index
    %c1_105 = arith.constant 1 : index
    %c0_106 = arith.constant 0 : index
    %c0_107 = arith.constant 0 : index
    %151 = vector.load %arg7[%c0_103, %c2_104, %c1_105, %c0_106, %c0_107] : memref<1x5x3x2x128xf32, #tpu.memory_space<vmem>>, vector<1x1x1x2x128xf32>
    %152 = vector.shape_cast %151 : vector<1x1x1x2x128xf32> to vector<2x128xf32>
    %153 = vector.shape_cast %150 : vector<2x128xf32> to vector<1x1x1x2x128xf32>
    tpu.vector_store %arg7[%c0_103, %c2_104, %c1_105, %c0_106, %c0_107], %153 {strides = array<i32>} : memref<1x5x3x2x128xf32, #tpu.memory_space<vmem>>, vector<1x1x1x2x128xf32>,
    %c6_108 = arith.constant 6 : index
    %154 = memref.load %arg3[%c6_108] : memref<9xf32, #tpu.memory_space<smem>>
    %155 = vector.broadcast %154 : f32 to vector<2x128xf32>
    %156 = arith.mulf %115, %155 : vector<2x128xf32>
    %c7_109 = arith.constant 7 : index
    %157 = memref.load %arg3[%c7_109] : memref<9xf32, #tpu.memory_space<smem>>
    %158 = vector.broadcast %157 : f32 to vector<2x128xf32>
    %159 = arith.mulf %117, %158 : vector<2x128xf32>
    %160 = arith.addf %156, %159 : vector<2x128xf32>
    %c8_110 = arith.constant 8 : index
    %161 = memref.load %arg3[%c8_110] : memref<9xf32, #tpu.memory_space<smem>>
    %162 = vector.broadcast %161 : f32 to vector<2x128xf32>
    %163 = arith.mulf %119, %162 : vector<2x128xf32>
    %164 = arith.addf %160, %163 : vector<2x128xf32>
    %c2_111 = arith.constant 2 : index
    %165 = memref.load %arg4[%c2_111] : memref<3xf32, #tpu.memory_space<smem>>
    %166 = vector.broadcast %165 : f32 to vector<2x128xf32>
    %167 = arith.addf %164, %166 : vector<2x128xf32>
    %c0_112 = arith.constant 0 : index
    %c2_113 = arith.constant 2 : index
    %c2_114 = arith.constant 2 : index
    %c0_115 = arith.constant 0 : index
    %c0_116 = arith.constant 0 : index
    %168 = vector.load %arg7[%c0_112, %c2_113, %c2_114, %c0_115, %c0_116] : memref<1x5x3x2x128xf32, #tpu.memory_space<vmem>>, vector<1x1x1x2x128xf32>
    %169 = vector.shape_cast %168 : vector<1x1x1x2x128xf32> to vector<2x128xf32>
    %170 = vector.shape_cast %167 : vector<2x128xf32> to vector<1x1x1x2x128xf32>
    tpu.vector_store %arg7[%c0_112, %c2_113, %c2_114, %c0_115, %c0_116], %170 {strides = array<i32>} : memref<1x5x3x2x128xf32, #tpu.memory_space<vmem>>, vector<1x1x1x2x128xf32>,
    %c3_117 = arith.constant 3 : index
    %c0_118 = arith.constant 0 : index
    %c0_119 = arith.constant 0 : index
    %c0_120 = arith.constant 0 : index
    %c0_121 = arith.constant 0 : index
    %171 = vector.load %arg2[%c3_117, %c0_118, %c0_119, %c0_120, %c0_121] : memref<5x1x3x2x128xf32, #tpu.memory_space<vmem>>, vector<1x1x1x2x128xf32>
    %172 = vector.shape_cast %171 : vector<1x1x1x2x128xf32> to vector<2x128xf32>
    %c3_122 = arith.constant 3 : index
    %c0_123 = arith.constant 0 : index
    %c1_124 = arith.constant 1 : index
    %c0_125 = arith.constant 0 : index
    %c0_126 = arith.constant 0 : index
    %173 = vector.load %arg2[%c3_122, %c0_123, %c1_124, %c0_125, %c0_126] : memref<5x1x3x2x128xf32, #tpu.memory_space<vmem>>, vector<1x1x1x2x128xf32>
    %174 = vector.shape_cast %173 : vector<1x1x1x2x128xf32> to vector<2x128xf32>
    %c3_127 = arith.constant 3 : index
    %c0_128 = arith.constant 0 : index
    %c2_129 = arith.constant 2 : index
    %c0_130 = arith.constant 0 : index
    %c0_131 = arith.constant 0 : index
    %175 = vector.load %arg2[%c3_127, %c0_128, %c2_129, %c0_130, %c0_131] : memref<5x1x3x2x128xf32, #tpu.memory_space<vmem>>, vector<1x1x1x2x128xf32>
    %176 = vector.shape_cast %175 : vector<1x1x1x2x128xf32> to vector<2x128xf32>
    %c0_132 = arith.constant 0 : index
    %177 = memref.load %arg3[%c0_132] : memref<9xf32, #tpu.memory_space<smem>>
    %178 = vector.broadcast %177 : f32 to vector<2x128xf32>
    %179 = arith.mulf %172, %178 : vector<2x128xf32>
    %c1_133 = arith.constant 1 : index
    %180 = memref.load %arg3[%c1_133] : memref<9xf32, #tpu.memory_space<smem>>
    %181 = vector.broadcast %180 : f32 to vector<2x128xf32>
    %182 = arith.mulf %174, %181 : vector<2x128xf32>
    %183 = arith.addf %179, %182 : vector<2x128xf32>
    %c2_134 = arith.constant 2 : index
    %184 = memref.load %arg3[%c2_134] : memref<9xf32, #tpu.memory_space<smem>>
    %185 = vector.broadcast %184 : f32 to vector<2x128xf32>
    %186 = arith.mulf %176, %185 : vector<2x128xf32>
    %187 = arith.addf %183, %186 : vector<2x128xf32>
    %c0_135 = arith.constant 0 : index
    %188 = memref.load %arg4[%c0_135] : memref<3xf32, #tpu.memory_space<smem>>
    %189 = vector.broadcast %188 : f32 to vector<2x128xf32>
    %190 = arith.addf %187, %189 : vector<2x128xf32>
    %c0_136 = arith.constant 0 : index
    %c3_137 = arith.constant 3 : index
    %c0_138 = arith.constant 0 : index
    %c0_139 = arith.constant 0 : index
    %c0_140 = arith.constant 0 : index
    %191 = vector.load %arg7[%c0_136, %c3_137, %c0_138, %c0_139, %c0_140] : memref<1x5x3x2x128xf32, #tpu.memory_space<vmem>>, vector<1x1x1x2x128xf32>
    %192 = vector.shape_cast %191 : vector<1x1x1x2x128xf32> to vector<2x128xf32>
    %193 = vector.shape_cast %190 : vector<2x128xf32> to vector<1x1x1x2x128xf32>
    tpu.vector_store %arg7[%c0_136, %c3_137, %c0_138, %c0_139, %c0_140], %193 {strides = array<i32>} : memref<1x5x3x2x128xf32, #tpu.memory_space<vmem>>, vector<1x1x1x2x128xf32>,
    %c3_141 = arith.constant 3 : index
    %194 = memref.load %arg3[%c3_141] : memref<9xf32, #tpu.memory_space<smem>>
    %195 = vector.broadcast %194 : f32 to vector<2x128xf32>
    %196 = arith.mulf %172, %195 : vector<2x128xf32>
    %c4_142 = arith.constant 4 : index
    %197 = memref.load %arg3[%c4_142] : memref<9xf32, #tpu.memory_space<smem>>
    %198 = vector.broadcast %197 : f32 to vector<2x128xf32>
    %199 = arith.mulf %174, %198 : vector<2x128xf32>
    %200 = arith.addf %196, %199 : vector<2x128xf32>
    %c5_143 = arith.constant 5 : index
    %201 = memref.load %arg3[%c5_143] : memref<9xf32, #tpu.memory_space<smem>>
    %202 = vector.broadcast %201 : f32 to vector<2x128xf32>
    %203 = arith.mulf %176, %202 : vector<2x128xf32>
    %204 = arith.addf %200, %203 : vector<2x128xf32>
    %c1_144 = arith.constant 1 : index
    %205 = memref.load %arg4[%c1_144] : memref<3xf32, #tpu.memory_space<smem>>
    %206 = vector.broadcast %205 : f32 to vector<2x128xf32>
    %207 = arith.addf %204, %206 : vector<2x128xf32>
    %c0_145 = arith.constant 0 : index
    %c3_146 = arith.constant 3 : index
    %c1_147 = arith.constant 1 : index
    %c0_148 = arith.constant 0 : index
    %c0_149 = arith.constant 0 : index
    %208 = vector.load %arg7[%c0_145, %c3_146, %c1_147, %c0_148, %c0_149] : memref<1x5x3x2x128xf32, #tpu.memory_space<vmem>>, vector<1x1x1x2x128xf32>
    %209 = vector.shape_cast %208 : vector<1x1x1x2x128xf32> to vector<2x128xf32>
    %210 = vector.shape_cast %207 : vector<2x128xf32> to vector<1x1x1x2x128xf32>
    tpu.vector_store %arg7[%c0_145, %c3_146, %c1_147, %c0_148, %c0_149], %210 {strides = array<i32>} : memref<1x5x3x2x128xf32, #tpu.memory_space<vmem>>, vector<1x1x1x2x128xf32>,
    %c6_150 = arith.constant 6 : index
    %211 = memref.load %arg3[%c6_150] : memref<9xf32, #tpu.memory_space<smem>>
    %212 = vector.broadcast %211 : f32 to vector<2x128xf32>
    %213 = arith.mulf %172, %212 : vector<2x128xf32>
    %c7_151 = arith.constant 7 : index
    %214 = memref.load %arg3[%c7_151] : memref<9xf32, #tpu.memory_space<smem>>
    %215 = vector.broadcast %214 : f32 to vector<2x128xf32>
    %216 = arith.mulf %174, %215 : vector<2x128xf32>
    %217 = arith.addf %213, %216 : vector<2x128xf32>
    %c8_152 = arith.constant 8 : index
    %218 = memref.load %arg3[%c8_152] : memref<9xf32, #tpu.memory_space<smem>>
    %219 = vector.broadcast %218 : f32 to vector<2x128xf32>
    %220 = arith.mulf %176, %219 : vector<2x128xf32>
    %221 = arith.addf %217, %220 : vector<2x128xf32>
    %c2_153 = arith.constant 2 : index
    %222 = memref.load %arg4[%c2_153] : memref<3xf32, #tpu.memory_space<smem>>
    %223 = vector.broadcast %222 : f32 to vector<2x128xf32>
    %224 = arith.addf %221, %223 : vector<2x128xf32>
    %c0_154 = arith.constant 0 : index
    %c3_155 = arith.constant 3 : index
    %c2_156 = arith.constant 2 : index
    %c0_157 = arith.constant 0 : index
    %c0_158 = arith.constant 0 : index
    %225 = vector.load %arg7[%c0_154, %c3_155, %c2_156, %c0_157, %c0_158] : memref<1x5x3x2x128xf32, #tpu.memory_space<vmem>>, vector<1x1x1x2x128xf32>
    %226 = vector.shape_cast %225 : vector<1x1x1x2x128xf32> to vector<2x128xf32>
    %227 = vector.shape_cast %224 : vector<2x128xf32> to vector<1x1x1x2x128xf32>
    tpu.vector_store %arg7[%c0_154, %c3_155, %c2_156, %c0_157, %c0_158], %227 {strides = array<i32>} : memref<1x5x3x2x128xf32, #tpu.memory_space<vmem>>, vector<1x1x1x2x128xf32>,
    %c4_159 = arith.constant 4 : index
    %c0_160 = arith.constant 0 : index
    %c0_161 = arith.constant 0 : index
    %c0_162 = arith.constant 0 : index
    %c0_163 = arith.constant 0 : index
    %228 = vector.load %arg2[%c4_159, %c0_160, %c0_161, %c0_162, %c0_163] : memref<5x1x3x2x128xf32, #tpu.memory_space<vmem>>, vector<1x1x1x2x128xf32>
    %229 = vector.shape_cast %228 : vector<1x1x1x2x128xf32> to vector<2x128xf32>
    %c4_164 = arith.constant 4 : index
    %c0_165 = arith.constant 0 : index
    %c1_166 = arith.constant 1 : index
    %c0_167 = arith.constant 0 : index
    %c0_168 = arith.constant 0 : index
    %230 = vector.load %arg2[%c4_164, %c0_165, %c1_166, %c0_167, %c0_168] : memref<5x1x3x2x128xf32, #tpu.memory_space<vmem>>, vector<1x1x1x2x128xf32>
    %231 = vector.shape_cast %230 : vector<1x1x1x2x128xf32> to vector<2x128xf32>
    %c4_169 = arith.constant 4 : index
    %c0_170 = arith.constant 0 : index
    %c2_171 = arith.constant 2 : index
    %c0_172 = arith.constant 0 : index
    %c0_173 = arith.constant 0 : index
    %232 = vector.load %arg2[%c4_169, %c0_170, %c2_171, %c0_172, %c0_173] : memref<5x1x3x2x128xf32, #tpu.memory_space<vmem>>, vector<1x1x1x2x128xf32>
    %233 = vector.shape_cast %232 : vector<1x1x1x2x128xf32> to vector<2x128xf32>
    %c0_174 = arith.constant 0 : index
    %234 = memref.load %arg3[%c0_174] : memref<9xf32, #tpu.memory_space<smem>>
    %235 = vector.broadcast %234 : f32 to vector<2x128xf32>
    %236 = arith.mulf %229, %235 : vector<2x128xf32>
    %c1_175 = arith.constant 1 : index
    %237 = memref.load %arg3[%c1_175] : memref<9xf32, #tpu.memory_space<smem>>
    %238 = vector.broadcast %237 : f32 to vector<2x128xf32>
    %239 = arith.mulf %231, %238 : vector<2x128xf32>
    %240 = arith.addf %236, %239 : vector<2x128xf32>
    %c2_176 = arith.constant 2 : index
    %241 = memref.load %arg3[%c2_176] : memref<9xf32, #tpu.memory_space<smem>>
    %242 = vector.broadcast %241 : f32 to vector<2x128xf32>
    %243 = arith.mulf %233, %242 : vector<2x128xf32>
    %244 = arith.addf %240, %243 : vector<2x128xf32>
    %c0_177 = arith.constant 0 : index
    %245 = memref.load %arg4[%c0_177] : memref<3xf32, #tpu.memory_space<smem>>
    %246 = vector.broadcast %245 : f32 to vector<2x128xf32>
    %247 = arith.addf %244, %246 : vector<2x128xf32>
    %c0_178 = arith.constant 0 : index
    %c4_179 = arith.constant 4 : index
    %c0_180 = arith.constant 0 : index
    %c0_181 = arith.constant 0 : index
    %c0_182 = arith.constant 0 : index
    %248 = vector.load %arg7[%c0_178, %c4_179, %c0_180, %c0_181, %c0_182] : memref<1x5x3x2x128xf32, #tpu.memory_space<vmem>>, vector<1x1x1x2x128xf32>
    %249 = vector.shape_cast %248 : vector<1x1x1x2x128xf32> to vector<2x128xf32>
    %250 = vector.shape_cast %247 : vector<2x128xf32> to vector<1x1x1x2x128xf32>
    tpu.vector_store %arg7[%c0_178, %c4_179, %c0_180, %c0_181, %c0_182], %250 {strides = array<i32>} : memref<1x5x3x2x128xf32, #tpu.memory_space<vmem>>, vector<1x1x1x2x128xf32>,
    %c3_183 = arith.constant 3 : index
    %251 = memref.load %arg3[%c3_183] : memref<9xf32, #tpu.memory_space<smem>>
    %252 = vector.broadcast %251 : f32 to vector<2x128xf32>
    %253 = arith.mulf %229, %252 : vector<2x128xf32>
    %c4_184 = arith.constant 4 : index
    %254 = memref.load %arg3[%c4_184] : memref<9xf32, #tpu.memory_space<smem>>
    %255 = vector.broadcast %254 : f32 to vector<2x128xf32>
    %256 = arith.mulf %231, %255 : vector<2x128xf32>
    %257 = arith.addf %253, %256 : vector<2x128xf32>
    %c5_185 = arith.constant 5 : index
    %258 = memref.load %arg3[%c5_185] : memref<9xf32, #tpu.memory_space<smem>>
    %259 = vector.broadcast %258 : f32 to vector<2x128xf32>
    %260 = arith.mulf %233, %259 : vector<2x128xf32>
    %261 = arith.addf %257, %260 : vector<2x128xf32>
    %c1_186 = arith.constant 1 : index
    %262 = memref.load %arg4[%c1_186] : memref<3xf32, #tpu.memory_space<smem>>
    %263 = vector.broadcast %262 : f32 to vector<2x128xf32>
    %264 = arith.addf %261, %263 : vector<2x128xf32>
    %c0_187 = arith.constant 0 : index
    %c4_188 = arith.constant 4 : index
    %c1_189 = arith.constant 1 : index
    %c0_190 = arith.constant 0 : index
    %c0_191 = arith.constant 0 : index
    %265 = vector.load %arg7[%c0_187, %c4_188, %c1_189, %c0_190, %c0_191] : memref<1x5x3x2x128xf32, #tpu.memory_space<vmem>>, vector<1x1x1x2x128xf32>
    %266 = vector.shape_cast %265 : vector<1x1x1x2x128xf32> to vector<2x128xf32>
    %267 = vector.shape_cast %264 : vector<2x128xf32> to vector<1x1x1x2x128xf32>
    tpu.vector_store %arg7[%c0_187, %c4_188, %c1_189, %c0_190, %c0_191], %267 {strides = array<i32>} : memref<1x5x3x2x128xf32, #tpu.memory_space<vmem>>, vector<1x1x1x2x128xf32>,
    %c6_192 = arith.constant 6 : index
    %268 = memref.load %arg3[%c6_192] : memref<9xf32, #tpu.memory_space<smem>>
    %269 = vector.broadcast %268 : f32 to vector<2x128xf32>
    %270 = arith.mulf %229, %269 : vector<2x128xf32>
    %c7_193 = arith.constant 7 : index
    %271 = memref.load %arg3[%c7_193] : memref<9xf32, #tpu.memory_space<smem>>
    %272 = vector.broadcast %271 : f32 to vector<2x128xf32>
    %273 = arith.mulf %231, %272 : vector<2x128xf32>
    %274 = arith.addf %270, %273 : vector<2x128xf32>
    %c8_194 = arith.constant 8 : index
    %275 = memref.load %arg3[%c8_194] : memref<9xf32, #tpu.memory_space<smem>>
    %276 = vector.broadcast %275 : f32 to vector<2x128xf32>
    %277 = arith.mulf %233, %276 : vector<2x128xf32>
    %278 = arith.addf %274, %277 : vector<2x128xf32>
    %c2_195 = arith.constant 2 : index
    %279 = memref.load %arg4[%c2_195] : memref<3xf32, #tpu.memory_space<smem>>
    %280 = vector.broadcast %279 : f32 to vector<2x128xf32>
    %281 = arith.addf %278, %280 : vector<2x128xf32>
    %c0_196 = arith.constant 0 : index
    %c4_197 = arith.constant 4 : index
    %c2_198 = arith.constant 2 : index
    %c0_199 = arith.constant 0 : index
    %c0_200 = arith.constant 0 : index
    %282 = vector.load %arg7[%c0_196, %c4_197, %c2_198, %c0_199, %c0_200] : memref<1x5x3x2x128xf32, #tpu.memory_space<vmem>>, vector<1x1x1x2x128xf32>
    %283 = vector.shape_cast %282 : vector<1x1x1x2x128xf32> to vector<2x128xf32>
    %284 = vector.shape_cast %281 : vector<2x128xf32> to vector<1x1x1x2x128xf32>
    tpu.vector_store %arg7[%c0_196, %c4_197, %c2_198, %c0_199, %c0_200], %284 {strides = array<i32>} : memref<1x5x3x2x128xf32, #tpu.memory_space<vmem>>, vector<1x1x1x2x128xf32>,
    %c0_201 = arith.constant 0 : index
    %c0_202 = arith.constant 0 : index
    %c0_203 = arith.constant 0 : index
    %c0_204 = arith.constant 0 : index
    %c0_205 = arith.constant 0 : index
    %285 = vector.load %arg7[%c0_201, %c0_202, %c0_203, %c0_204, %c0_205] : memref<1x5x3x2x128xf32, #tpu.memory_space<vmem>>, vector<1x1x1x2x128xf32>
    %286 = vector.shape_cast %285 : vector<1x1x1x2x128xf32> to vector<2x128xf32>
    %c0_206 = arith.constant 0 : index
    %c1_207 = arith.constant 1 : index
    %c0_208 = arith.constant 0 : index
    %c0_209 = arith.constant 0 : index
    %c0_210 = arith.constant 0 : index
    %287 = vector.load %arg7[%c0_206, %c1_207, %c0_208, %c0_209, %c0_210] : memref<1x5x3x2x128xf32, #tpu.memory_space<vmem>>, vector<1x1x1x2x128xf32>
    %288 = vector.shape_cast %287 : vector<1x1x1x2x128xf32> to vector<2x128xf32>
    %289 = arith.addf %286, %288 : vector<2x128xf32>
    %c0_211 = arith.constant 0 : index
    %c2_212 = arith.constant 2 : index
    %c0_213 = arith.constant 0 : index
    %c0_214 = arith.constant 0 : index
    %c0_215 = arith.constant 0 : index
    %290 = vector.load %arg7[%c0_211, %c2_212, %c0_213, %c0_214, %c0_215] : memref<1x5x3x2x128xf32, #tpu.memory_space<vmem>>, vector<1x1x1x2x128xf32>
    %291 = vector.shape_cast %290 : vector<1x1x1x2x128xf32> to vector<2x128xf32>
    %292 = arith.addf %289, %291 : vector<2x128xf32>
    %c0_216 = arith.constant 0 : index
    %c3_217 = arith.constant 3 : index
    %c0_218 = arith.constant 0 : index
    %c0_219 = arith.constant 0 : index
    %c0_220 = arith.constant 0 : index
    %293 = vector.load %arg7[%c0_216, %c3_217, %c0_218, %c0_219, %c0_220] : memref<1x5x3x2x128xf32, #tpu.memory_space<vmem>>, vector<1x1x1x2x128xf32>
    %294 = vector.shape_cast %293 : vector<1x1x1x2x128xf32> to vector<2x128xf32>
    %295 = arith.addf %292, %294 : vector<2x128xf32>
    %c0_221 = arith.constant 0 : index
    %c4_222 = arith.constant 4 : index
    %c0_223 = arith.constant 0 : index
    %c0_224 = arith.constant 0 : index
    %c0_225 = arith.constant 0 : index
    %296 = vector.load %arg7[%c0_221, %c4_222, %c0_223, %c0_224, %c0_225] : memref<1x5x3x2x128xf32, #tpu.memory_space<vmem>>, vector<1x1x1x2x128xf32>
    %297 = vector.shape_cast %296 : vector<1x1x1x2x128xf32> to vector<2x128xf32>
    %298 = arith.addf %295, %297 : vector<2x128xf32>
    %cst = arith.constant 2.000000e-01 : f32
    %299 = vector.broadcast %cst : f32 to vector<2x128xf32>
    %300 = arith.mulf %298, %299 : vector<2x128xf32>
    %c0_226 = arith.constant 0 : index
    %c0_227 = arith.constant 0 : index
    %c0_228 = arith.constant 0 : index
    %c0_229 = arith.constant 0 : index
    %301 = vector.load %arg8[%c0_226, %c0_227, %c0_228, %c0_229] : memref<1x3x2x128xf32, #tpu.memory_space<vmem>>, vector<1x1x2x128xf32>
    %302 = vector.shape_cast %301 : vector<1x1x2x128xf32> to vector<2x128xf32>
    %303 = vector.shape_cast %300 : vector<2x128xf32> to vector<1x1x2x128xf32>
    tpu.vector_store %arg8[%c0_226, %c0_227, %c0_228, %c0_229], %303 {strides = array<i32>} : memref<1x3x2x128xf32, #tpu.memory_space<vmem>>, vector<1x1x2x128xf32>,
    %c0_230 = arith.constant 0 : index
    %c0_231 = arith.constant 0 : index
    %c1_232 = arith.constant 1 : index
    %c0_233 = arith.constant 0 : index
    %c0_234 = arith.constant 0 : index
    %304 = vector.load %arg7[%c0_230, %c0_231, %c1_232, %c0_233, %c0_234] : memref<1x5x3x2x128xf32, #tpu.memory_space<vmem>>, vector<1x1x1x2x128xf32>
    %305 = vector.shape_cast %304 : vector<1x1x1x2x128xf32> to vector<2x128xf32>
    %c0_235 = arith.constant 0 : index
    %c1_236 = arith.constant 1 : index
    %c1_237 = arith.constant 1 : index
    %c0_238 = arith.constant 0 : index
    %c0_239 = arith.constant 0 : index
    %306 = vector.load %arg7[%c0_235, %c1_236, %c1_237, %c0_238, %c0_239] : memref<1x5x3x2x128xf32, #tpu.memory_space<vmem>>, vector<1x1x1x2x128xf32>
    %307 = vector.shape_cast %306 : vector<1x1x1x2x128xf32> to vector<2x128xf32>
    %308 = arith.addf %305, %307 : vector<2x128xf32>
    %c0_240 = arith.constant 0 : index
    %c2_241 = arith.constant 2 : index
    %c1_242 = arith.constant 1 : index
    %c0_243 = arith.constant 0 : index
    %c0_244 = arith.constant 0 : index
    %309 = vector.load %arg7[%c0_240, %c2_241, %c1_242, %c0_243, %c0_244] : memref<1x5x3x2x128xf32, #tpu.memory_space<vmem>>, vector<1x1x1x2x128xf32>
    %310 = vector.shape_cast %309 : vector<1x1x1x2x128xf32> to vector<2x128xf32>
    %311 = arith.addf %308, %310 : vector<2x128xf32>
    %c0_245 = arith.constant 0 : index
    %c3_246 = arith.constant 3 : index
    %c1_247 = arith.constant 1 : index
    %c0_248 = arith.constant 0 : index
    %c0_249 = arith.constant 0 : index
    %312 = vector.load %arg7[%c0_245, %c3_246, %c1_247, %c0_248, %c0_249] : memref<1x5x3x2x128xf32, #tpu.memory_space<vmem>>, vector<1x1x1x2x128xf32>
    %313 = vector.shape_cast %312 : vector<1x1x1x2x128xf32> to vector<2x128xf32>
    %314 = arith.addf %311, %313 : vector<2x128xf32>
    %c0_250 = arith.constant 0 : index
    %c4_251 = arith.constant 4 : index
    %c1_252 = arith.constant 1 : index
    %c0_253 = arith.constant 0 : index
    %c0_254 = arith.constant 0 : index
    %315 = vector.load %arg7[%c0_250, %c4_251, %c1_252, %c0_253, %c0_254] : memref<1x5x3x2x128xf32, #tpu.memory_space<vmem>>, vector<1x1x1x2x128xf32>
    %316 = vector.shape_cast %315 : vector<1x1x1x2x128xf32> to vector<2x128xf32>
    %317 = arith.addf %314, %316 : vector<2x128xf32>
    %cst_255 = arith.constant 2.000000e-01 : f32
    %318 = vector.broadcast %cst_255 : f32 to vector<2x128xf32>
    %319 = arith.mulf %317, %318 : vector<2x128xf32>
    %c0_256 = arith.constant 0 : index
    %c1_257 = arith.constant 1 : index
    %c0_258 = arith.constant 0 : index
    %c0_259 = arith.constant 0 : index
    %320 = vector.load %arg8[%c0_256, %c1_257, %c0_258, %c0_259] : memref<1x3x2x128xf32, #tpu.memory_space<vmem>>, vector<1x1x2x128xf32>
    %321 = vector.shape_cast %320 : vector<1x1x2x128xf32> to vector<2x128xf32>
    %322 = vector.shape_cast %319 : vector<2x128xf32> to vector<1x1x2x128xf32>
    tpu.vector_store %arg8[%c0_256, %c1_257, %c0_258, %c0_259], %322 {strides = array<i32>} : memref<1x3x2x128xf32, #tpu.memory_space<vmem>>, vector<1x1x2x128xf32>,
    %c0_260 = arith.constant 0 : index
    %c0_261 = arith.constant 0 : index
    %c2_262 = arith.constant 2 : index
    %c0_263 = arith.constant 0 : index
    %c0_264 = arith.constant 0 : index
    %323 = vector.load %arg7[%c0_260, %c0_261, %c2_262, %c0_263, %c0_264] : memref<1x5x3x2x128xf32, #tpu.memory_space<vmem>>, vector<1x1x1x2x128xf32>
    %324 = vector.shape_cast %323 : vector<1x1x1x2x128xf32> to vector<2x128xf32>
    %c0_265 = arith.constant 0 : index
    %c1_266 = arith.constant 1 : index
    %c2_267 = arith.constant 2 : index
    %c0_268 = arith.constant 0 : index
    %c0_269 = arith.constant 0 : index
    %325 = vector.load %arg7[%c0_265, %c1_266, %c2_267, %c0_268, %c0_269] : memref<1x5x3x2x128xf32, #tpu.memory_space<vmem>>, vector<1x1x1x2x128xf32>
    %326 = vector.shape_cast %325 : vector<1x1x1x2x128xf32> to vector<2x128xf32>
    %327 = arith.addf %324, %326 : vector<2x128xf32>
    %c0_270 = arith.constant 0 : index
    %c2_271 = arith.constant 2 : index
    %c2_272 = arith.constant 2 : index
    %c0_273 = arith.constant 0 : index
    %c0_274 = arith.constant 0 : index
    %328 = vector.load %arg7[%c0_270, %c2_271, %c2_272, %c0_273, %c0_274] : memref<1x5x3x2x128xf32, #tpu.memory_space<vmem>>, vector<1x1x1x2x128xf32>
    %329 = vector.shape_cast %328 : vector<1x1x1x2x128xf32> to vector<2x128xf32>
    %330 = arith.addf %327, %329 : vector<2x128xf32>
    %c0_275 = arith.constant 0 : index
    %c3_276 = arith.constant 3 : index
    %c2_277 = arith.constant 2 : index
    %c0_278 = arith.constant 0 : index
    %c0_279 = arith.constant 0 : index
    %331 = vector.load %arg7[%c0_275, %c3_276, %c2_277, %c0_278, %c0_279] : memref<1x5x3x2x128xf32, #tpu.memory_space<vmem>>, vector<1x1x1x2x128xf32>
    %332 = vector.shape_cast %331 : vector<1x1x1x2x128xf32> to vector<2x128xf32>
    %333 = arith.addf %330, %332 : vector<2x128xf32>
    %c0_280 = arith.constant 0 : index
    %c4_281 = arith.constant 4 : index
    %c2_282 = arith.constant 2 : index
    %c0_283 = arith.constant 0 : index
    %c0_284 = arith.constant 0 : index
    %334 = vector.load %arg7[%c0_280, %c4_281, %c2_282, %c0_283, %c0_284] : memref<1x5x3x2x128xf32, #tpu.memory_space<vmem>>, vector<1x1x1x2x128xf32>
    %335 = vector.shape_cast %334 : vector<1x1x1x2x128xf32> to vector<2x128xf32>
    %336 = arith.addf %333, %335 : vector<2x128xf32>
    %cst_285 = arith.constant 2.000000e-01 : f32
    %337 = vector.broadcast %cst_285 : f32 to vector<2x128xf32>
    %338 = arith.mulf %336, %337 : vector<2x128xf32>
    %c0_286 = arith.constant 0 : index
    %c2_287 = arith.constant 2 : index
    %c0_288 = arith.constant 0 : index
    %c0_289 = arith.constant 0 : index
    %339 = vector.load %arg8[%c0_286, %c2_287, %c0_288, %c0_289] : memref<1x3x2x128xf32, #tpu.memory_space<vmem>>, vector<1x1x2x128xf32>
    %340 = vector.shape_cast %339 : vector<1x1x2x128xf32> to vector<2x128xf32>
    %341 = vector.shape_cast %338 : vector<2x128xf32> to vector<1x1x2x128xf32>
    tpu.vector_store %arg8[%c0_286, %c2_287, %c0_288, %c0_289], %341 {strides = array<i32>} : memref<1x3x2x128xf32, #tpu.memory_space<vmem>>, vector<1x1x2x128xf32>,
    %c0_290 = arith.constant 0 : index
    %c0_291 = arith.constant 0 : index
    %c0_292 = arith.constant 0 : index
    %c0_293 = arith.constant 0 : index
    %c0_294 = arith.constant 0 : index
    %342 = vector.load %arg2[%c0_290, %c0_291, %c0_292, %c0_293, %c0_294] : memref<5x1x3x2x128xf32, #tpu.memory_space<vmem>>, vector<1x1x1x2x128xf32>
    %343 = vector.shape_cast %342 : vector<1x1x1x2x128xf32> to vector<2x128xf32>
    %c0_295 = arith.constant 0 : index
    %344 = memref.load %arg5[%c0_295] : memref<75xf32, #tpu.memory_space<smem>>
    %345 = vector.broadcast %344 : f32 to vector<2x128xf32>
    %346 = arith.mulf %343, %345 : vector<2x128xf32>
    %c0_296 = arith.constant 0 : index
    %c0_297 = arith.constant 0 : index
    %c1_298 = arith.constant 1 : index
    %c0_299 = arith.constant 0 : index
    %c0_300 = arith.constant 0 : index
    %347 = vector.load %arg2[%c0_296, %c0_297, %c1_298, %c0_299, %c0_300] : memref<5x1x3x2x128xf32, #tpu.memory_space<vmem>>, vector<1x1x1x2x128xf32>
    %348 = vector.shape_cast %347 : vector<1x1x1x2x128xf32> to vector<2x128xf32>
    %c1_301 = arith.constant 1 : index
    %349 = memref.load %arg5[%c1_301] : memref<75xf32, #tpu.memory_space<smem>>
    %350 = vector.broadcast %349 : f32 to vector<2x128xf32>
    %351 = arith.mulf %348, %350 : vector<2x128xf32>
    %352 = arith.addf %346, %351 : vector<2x128xf32>
    %c0_302 = arith.constant 0 : index
    %c0_303 = arith.constant 0 : index
    %c2_304 = arith.constant 2 : index
    %c0_305 = arith.constant 0 : index
    %c0_306 = arith.constant 0 : index
    %353 = vector.load %arg2[%c0_302, %c0_303, %c2_304, %c0_305, %c0_306] : memref<5x1x3x2x128xf32, #tpu.memory_space<vmem>>, vector<1x1x1x2x128xf32>
    %354 = vector.shape_cast %353 : vector<1x1x1x2x128xf32> to vector<2x128xf32>
    %c2_307 = arith.constant 2 : index
    %355 = memref.load %arg5[%c2_307] : memref<75xf32, #tpu.memory_space<smem>>
    %356 = vector.broadcast %355 : f32 to vector<2x128xf32>
    %357 = arith.mulf %354, %356 : vector<2x128xf32>
    %358 = arith.addf %352, %357 : vector<2x128xf32>
    %c1_308 = arith.constant 1 : index
    %c0_309 = arith.constant 0 : index
    %c0_310 = arith.constant 0 : index
    %c0_311 = arith.constant 0 : index
    %c0_312 = arith.constant 0 : index
    %359 = vector.load %arg2[%c1_308, %c0_309, %c0_310, %c0_311, %c0_312] : memref<5x1x3x2x128xf32, #tpu.memory_space<vmem>>, vector<1x1x1x2x128xf32>
    %360 = vector.shape_cast %359 : vector<1x1x1x2x128xf32> to vector<2x128xf32>
    %c15 = arith.constant 15 : index
    %361 = memref.load %arg5[%c15] : memref<75xf32, #tpu.memory_space<smem>>
    %362 = vector.broadcast %361 : f32 to vector<2x128xf32>
    %363 = arith.mulf %360, %362 : vector<2x128xf32>
    %364 = arith.addf %358, %363 : vector<2x128xf32>
    %c1_313 = arith.constant 1 : index
    %c0_314 = arith.constant 0 : index
    %c1_315 = arith.constant 1 : index
    %c0_316 = arith.constant 0 : index
    %c0_317 = arith.constant 0 : index
    %365 = vector.load %arg2[%c1_313, %c0_314, %c1_315, %c0_316, %c0_317] : memref<5x1x3x2x128xf32, #tpu.memory_space<vmem>>, vector<1x1x1x2x128xf32>
    %366 = vector.shape_cast %365 : vector<1x1x1x2x128xf32> to vector<2x128xf32>
    %c16 = arith.constant 16 : index
    %367 = memref.load %arg5[%c16] : memref<75xf32, #tpu.memory_space<smem>>
    %368 = vector.broadcast %367 : f32 to vector<2x128xf32>
    %369 = arith.mulf %366, %368 : vector<2x128xf32>
    %370 = arith.addf %364, %369 : vector<2x128xf32>
    %c1_318 = arith.constant 1 : index
    %c0_319 = arith.constant 0 : index
    %c2_320 = arith.constant 2 : index
    %c0_321 = arith.constant 0 : index
    %c0_322 = arith.constant 0 : index
    %371 = vector.load %arg2[%c1_318, %c0_319, %c2_320, %c0_321, %c0_322] : memref<5x1x3x2x128xf32, #tpu.memory_space<vmem>>, vector<1x1x1x2x128xf32>
    %372 = vector.shape_cast %371 : vector<1x1x1x2x128xf32> to vector<2x128xf32>
    %c17 = arith.constant 17 : index
    %373 = memref.load %arg5[%c17] : memref<75xf32, #tpu.memory_space<smem>>
    %374 = vector.broadcast %373 : f32 to vector<2x128xf32>
    %375 = arith.mulf %372, %374 : vector<2x128xf32>
    %376 = arith.addf %370, %375 : vector<2x128xf32>
    %c2_323 = arith.constant 2 : index
    %c0_324 = arith.constant 0 : index
    %c0_325 = arith.constant 0 : index
    %c0_326 = arith.constant 0 : index
    %c0_327 = arith.constant 0 : index
    %377 = vector.load %arg2[%c2_323, %c0_324, %c0_325, %c0_326, %c0_327] : memref<5x1x3x2x128xf32, #tpu.memory_space<vmem>>, vector<1x1x1x2x128xf32>
    %378 = vector.shape_cast %377 : vector<1x1x1x2x128xf32> to vector<2x128xf32>
    %c30 = arith.constant 30 : index
    %379 = memref.load %arg5[%c30] : memref<75xf32, #tpu.memory_space<smem>>
    %380 = vector.broadcast %379 : f32 to vector<2x128xf32>
    %381 = arith.mulf %378, %380 : vector<2x128xf32>
    %382 = arith.addf %376, %381 : vector<2x128xf32>
    %c2_328 = arith.constant 2 : index
    %c0_329 = arith.constant 0 : index
    %c1_330 = arith.constant 1 : index
    %c0_331 = arith.constant 0 : index
    %c0_332 = arith.constant 0 : index
    %383 = vector.load %arg2[%c2_328, %c0_329, %c1_330, %c0_331, %c0_332] : memref<5x1x3x2x128xf32, #tpu.memory_space<vmem>>, vector<1x1x1x2x128xf32>
    %384 = vector.shape_cast %383 : vector<1x1x1x2x128xf32> to vector<2x128xf32>
    %c31 = arith.constant 31 : index
    %385 = memref.load %arg5[%c31] : memref<75xf32, #tpu.memory_space<smem>>
    %386 = vector.broadcast %385 : f32 to vector<2x128xf32>
    %387 = arith.mulf %384, %386 : vector<2x128xf32>
    %388 = arith.addf %382, %387 : vector<2x128xf32>
    %c2_333 = arith.constant 2 : index
    %c0_334 = arith.constant 0 : index
    %c2_335 = arith.constant 2 : index
    %c0_336 = arith.constant 0 : index
    %c0_337 = arith.constant 0 : index
    %389 = vector.load %arg2[%c2_333, %c0_334, %c2_335, %c0_336, %c0_337] : memref<5x1x3x2x128xf32, #tpu.memory_space<vmem>>, vector<1x1x1x2x128xf32>
    %390 = vector.shape_cast %389 : vector<1x1x1x2x128xf32> to vector<2x128xf32>
    %c32 = arith.constant 32 : index
    %391 = memref.load %arg5[%c32] : memref<75xf32, #tpu.memory_space<smem>>
    %392 = vector.broadcast %391 : f32 to vector<2x128xf32>
    %393 = arith.mulf %390, %392 : vector<2x128xf32>
    %394 = arith.addf %388, %393 : vector<2x128xf32>
    %c3_338 = arith.constant 3 : index
    %c0_339 = arith.constant 0 : index
    %c0_340 = arith.constant 0 : index
    %c0_341 = arith.constant 0 : index
    %c0_342 = arith.constant 0 : index
    %395 = vector.load %arg2[%c3_338, %c0_339, %c0_340, %c0_341, %c0_342] : memref<5x1x3x2x128xf32, #tpu.memory_space<vmem>>, vector<1x1x1x2x128xf32>
    %396 = vector.shape_cast %395 : vector<1x1x1x2x128xf32> to vector<2x128xf32>
    %c45 = arith.constant 45 : index
    %397 = memref.load %arg5[%c45] : memref<75xf32, #tpu.memory_space<smem>>
    %398 = vector.broadcast %397 : f32 to vector<2x128xf32>
    %399 = arith.mulf %396, %398 : vector<2x128xf32>
    %400 = arith.addf %394, %399 : vector<2x128xf32>
    %c3_343 = arith.constant 3 : index
    %c0_344 = arith.constant 0 : index
    %c1_345 = arith.constant 1 : index
    %c0_346 = arith.constant 0 : index
    %c0_347 = arith.constant 0 : index
    %401 = vector.load %arg2[%c3_343, %c0_344, %c1_345, %c0_346, %c0_347] : memref<5x1x3x2x128xf32, #tpu.memory_space<vmem>>, vector<1x1x1x2x128xf32>
    %402 = vector.shape_cast %401 : vector<1x1x1x2x128xf32> to vector<2x128xf32>
    %c46 = arith.constant 46 : index
    %403 = memref.load %arg5[%c46] : memref<75xf32, #tpu.memory_space<smem>>
    %404 = vector.broadcast %403 : f32 to vector<2x128xf32>
    %405 = arith.mulf %402, %404 : vector<2x128xf32>
    %406 = arith.addf %400, %405 : vector<2x128xf32>
    %c3_348 = arith.constant 3 : index
    %c0_349 = arith.constant 0 : index
    %c2_350 = arith.constant 2 : index
    %c0_351 = arith.constant 0 : index
    %c0_352 = arith.constant 0 : index
    %407 = vector.load %arg2[%c3_348, %c0_349, %c2_350, %c0_351, %c0_352] : memref<5x1x3x2x128xf32, #tpu.memory_space<vmem>>, vector<1x1x1x2x128xf32>
    %408 = vector.shape_cast %407 : vector<1x1x1x2x128xf32> to vector<2x128xf32>
    %c47 = arith.constant 47 : index
    %409 = memref.load %arg5[%c47] : memref<75xf32, #tpu.memory_space<smem>>
    %410 = vector.broadcast %409 : f32 to vector<2x128xf32>
    %411 = arith.mulf %408, %410 : vector<2x128xf32>
    %412 = arith.addf %406, %411 : vector<2x128xf32>
    %c4_353 = arith.constant 4 : index
    %c0_354 = arith.constant 0 : index
    %c0_355 = arith.constant 0 : index
    %c0_356 = arith.constant 0 : index
    %c0_357 = arith.constant 0 : index
    %413 = vector.load %arg2[%c4_353, %c0_354, %c0_355, %c0_356, %c0_357] : memref<5x1x3x2x128xf32, #tpu.memory_space<vmem>>, vector<1x1x1x2x128xf32>
    %414 = vector.shape_cast %413 : vector<1x1x1x2x128xf32> to vector<2x128xf32>
    %c60 = arith.constant 60 : index
    %415 = memref.load %arg5[%c60] : memref<75xf32, #tpu.memory_space<smem>>
    %416 = vector.broadcast %415 : f32 to vector<2x128xf32>
    %417 = arith.mulf %414, %416 : vector<2x128xf32>
    %418 = arith.addf %412, %417 : vector<2x128xf32>
    %c4_358 = arith.constant 4 : index
    %c0_359 = arith.constant 0 : index
    %c1_360 = arith.constant 1 : index
    %c0_361 = arith.constant 0 : index
    %c0_362 = arith.constant 0 : index
    %419 = vector.load %arg2[%c4_358, %c0_359, %c1_360, %c0_361, %c0_362] : memref<5x1x3x2x128xf32, #tpu.memory_space<vmem>>, vector<1x1x1x2x128xf32>
    %420 = vector.shape_cast %419 : vector<1x1x1x2x128xf32> to vector<2x128xf32>
    %c61 = arith.constant 61 : index
    %421 = memref.load %arg5[%c61] : memref<75xf32, #tpu.memory_space<smem>>
    %422 = vector.broadcast %421 : f32 to vector<2x128xf32>
    %423 = arith.mulf %420, %422 : vector<2x128xf32>
    %424 = arith.addf %418, %423 : vector<2x128xf32>
    %c4_363 = arith.constant 4 : index
    %c0_364 = arith.constant 0 : index
    %c2_365 = arith.constant 2 : index
    %c0_366 = arith.constant 0 : index
    %c0_367 = arith.constant 0 : index
    %425 = vector.load %arg2[%c4_363, %c0_364, %c2_365, %c0_366, %c0_367] : memref<5x1x3x2x128xf32, #tpu.memory_space<vmem>>, vector<1x1x1x2x128xf32>
    %426 = vector.shape_cast %425 : vector<1x1x1x2x128xf32> to vector<2x128xf32>
    %c62 = arith.constant 62 : index
    %427 = memref.load %arg5[%c62] : memref<75xf32, #tpu.memory_space<smem>>
    %428 = vector.broadcast %427 : f32 to vector<2x128xf32>
    %429 = arith.mulf %426, %428 : vector<2x128xf32>
    %430 = arith.addf %424, %429 : vector<2x128xf32>
    %c0_368 = arith.constant 0 : index
    %431 = memref.load %arg6[%c0_368] : memref<5xf32, #tpu.memory_space<smem>>
    %432 = vector.broadcast %431 : f32 to vector<2x128xf32>
    %433 = arith.addf %430, %432 : vector<2x128xf32>
    %c0_369 = arith.constant 0 : index
    %c0_370 = arith.constant 0 : index
    %c0_371 = arith.constant 0 : index
    %c0_372 = arith.constant 0 : index
    %c0_373 = arith.constant 0 : index
    %434 = vector.load %arg2[%c0_369, %c0_370, %c0_371, %c0_372, %c0_373] : memref<5x1x3x2x128xf32, #tpu.memory_space<vmem>>, vector<1x1x1x2x128xf32>
    %435 = vector.shape_cast %434 : vector<1x1x1x2x128xf32> to vector<2x128xf32>
    %c3_374 = arith.constant 3 : index
    %436 = memref.load %arg5[%c3_374] : memref<75xf32, #tpu.memory_space<smem>>
    %437 = vector.broadcast %436 : f32 to vector<2x128xf32>
    %438 = arith.mulf %435, %437 : vector<2x128xf32>
    %c0_375 = arith.constant 0 : index
    %c0_376 = arith.constant 0 : index
    %c1_377 = arith.constant 1 : index
    %c0_378 = arith.constant 0 : index
    %c0_379 = arith.constant 0 : index
    %439 = vector.load %arg2[%c0_375, %c0_376, %c1_377, %c0_378, %c0_379] : memref<5x1x3x2x128xf32, #tpu.memory_space<vmem>>, vector<1x1x1x2x128xf32>
    %440 = vector.shape_cast %439 : vector<1x1x1x2x128xf32> to vector<2x128xf32>
    %c4_380 = arith.constant 4 : index
    %441 = memref.load %arg5[%c4_380] : memref<75xf32, #tpu.memory_space<smem>>
    %442 = vector.broadcast %441 : f32 to vector<2x128xf32>
    %443 = arith.mulf %440, %442 : vector<2x128xf32>
    %444 = arith.addf %438, %443 : vector<2x128xf32>
    %c0_381 = arith.constant 0 : index
    %c0_382 = arith.constant 0 : index
    %c2_383 = arith.constant 2 : index
    %c0_384 = arith.constant 0 : index
    %c0_385 = arith.constant 0 : index
    %445 = vector.load %arg2[%c0_381, %c0_382, %c2_383, %c0_384, %c0_385] : memref<5x1x3x2x128xf32, #tpu.memory_space<vmem>>, vector<1x1x1x2x128xf32>
    %446 = vector.shape_cast %445 : vector<1x1x1x2x128xf32> to vector<2x128xf32>
    %c5_386 = arith.constant 5 : index
    %447 = memref.load %arg5[%c5_386] : memref<75xf32, #tpu.memory_space<smem>>
    %448 = vector.broadcast %447 : f32 to vector<2x128xf32>
    %449 = arith.mulf %446, %448 : vector<2x128xf32>
    %450 = arith.addf %444, %449 : vector<2x128xf32>
    %c1_387 = arith.constant 1 : index
    %c0_388 = arith.constant 0 : index
    %c0_389 = arith.constant 0 : index
    %c0_390 = arith.constant 0 : index
    %c0_391 = arith.constant 0 : index
    %451 = vector.load %arg2[%c1_387, %c0_388, %c0_389, %c0_390, %c0_391] : memref<5x1x3x2x128xf32, #tpu.memory_space<vmem>>, vector<1x1x1x2x128xf32>
    %452 = vector.shape_cast %451 : vector<1x1x1x2x128xf32> to vector<2x128xf32>
    %c18 = arith.constant 18 : index
    %453 = memref.load %arg5[%c18] : memref<75xf32, #tpu.memory_space<smem>>
    %454 = vector.broadcast %453 : f32 to vector<2x128xf32>
    %455 = arith.mulf %452, %454 : vector<2x128xf32>
    %456 = arith.addf %450, %455 : vector<2x128xf32>
    %c1_392 = arith.constant 1 : index
    %c0_393 = arith.constant 0 : index
    %c1_394 = arith.constant 1 : index
    %c0_395 = arith.constant 0 : index
    %c0_396 = arith.constant 0 : index
    %457 = vector.load %arg2[%c1_392, %c0_393, %c1_394, %c0_395, %c0_396] : memref<5x1x3x2x128xf32, #tpu.memory_space<vmem>>, vector<1x1x1x2x128xf32>
    %458 = vector.shape_cast %457 : vector<1x1x1x2x128xf32> to vector<2x128xf32>
    %c19 = arith.constant 19 : index
    %459 = memref.load %arg5[%c19] : memref<75xf32, #tpu.memory_space<smem>>
    %460 = vector.broadcast %459 : f32 to vector<2x128xf32>
    %461 = arith.mulf %458, %460 : vector<2x128xf32>
    %462 = arith.addf %456, %461 : vector<2x128xf32>
    %c1_397 = arith.constant 1 : index
    %c0_398 = arith.constant 0 : index
    %c2_399 = arith.constant 2 : index
    %c0_400 = arith.constant 0 : index
    %c0_401 = arith.constant 0 : index
    %463 = vector.load %arg2[%c1_397, %c0_398, %c2_399, %c0_400, %c0_401] : memref<5x1x3x2x128xf32, #tpu.memory_space<vmem>>, vector<1x1x1x2x128xf32>
    %464 = vector.shape_cast %463 : vector<1x1x1x2x128xf32> to vector<2x128xf32>
    %c20 = arith.constant 20 : index
    %465 = memref.load %arg5[%c20] : memref<75xf32, #tpu.memory_space<smem>>
    %466 = vector.broadcast %465 : f32 to vector<2x128xf32>
    %467 = arith.mulf %464, %466 : vector<2x128xf32>
    %468 = arith.addf %462, %467 : vector<2x128xf32>
    %c2_402 = arith.constant 2 : index
    %c0_403 = arith.constant 0 : index
    %c0_404 = arith.constant 0 : index
    %c0_405 = arith.constant 0 : index
    %c0_406 = arith.constant 0 : index
    %469 = vector.load %arg2[%c2_402, %c0_403, %c0_404, %c0_405, %c0_406] : memref<5x1x3x2x128xf32, #tpu.memory_space<vmem>>, vector<1x1x1x2x128xf32>
    %470 = vector.shape_cast %469 : vector<1x1x1x2x128xf32> to vector<2x128xf32>
    %c33 = arith.constant 33 : index
    %471 = memref.load %arg5[%c33] : memref<75xf32, #tpu.memory_space<smem>>
    %472 = vector.broadcast %471 : f32 to vector<2x128xf32>
    %473 = arith.mulf %470, %472 : vector<2x128xf32>
    %474 = arith.addf %468, %473 : vector<2x128xf32>
    %c2_407 = arith.constant 2 : index
    %c0_408 = arith.constant 0 : index
    %c1_409 = arith.constant 1 : index
    %c0_410 = arith.constant 0 : index
    %c0_411 = arith.constant 0 : index
    %475 = vector.load %arg2[%c2_407, %c0_408, %c1_409, %c0_410, %c0_411] : memref<5x1x3x2x128xf32, #tpu.memory_space<vmem>>, vector<1x1x1x2x128xf32>
    %476 = vector.shape_cast %475 : vector<1x1x1x2x128xf32> to vector<2x128xf32>
    %c34 = arith.constant 34 : index
    %477 = memref.load %arg5[%c34] : memref<75xf32, #tpu.memory_space<smem>>
    %478 = vector.broadcast %477 : f32 to vector<2x128xf32>
    %479 = arith.mulf %476, %478 : vector<2x128xf32>
    %480 = arith.addf %474, %479 : vector<2x128xf32>
    %c2_412 = arith.constant 2 : index
    %c0_413 = arith.constant 0 : index
    %c2_414 = arith.constant 2 : index
    %c0_415 = arith.constant 0 : index
    %c0_416 = arith.constant 0 : index
    %481 = vector.load %arg2[%c2_412, %c0_413, %c2_414, %c0_415, %c0_416] : memref<5x1x3x2x128xf32, #tpu.memory_space<vmem>>, vector<1x1x1x2x128xf32>
    %482 = vector.shape_cast %481 : vector<1x1x1x2x128xf32> to vector<2x128xf32>
    %c35 = arith.constant 35 : index
    %483 = memref.load %arg5[%c35] : memref<75xf32, #tpu.memory_space<smem>>
    %484 = vector.broadcast %483 : f32 to vector<2x128xf32>
    %485 = arith.mulf %482, %484 : vector<2x128xf32>
    %486 = arith.addf %480, %485 : vector<2x128xf32>
    %c3_417 = arith.constant 3 : index
    %c0_418 = arith.constant 0 : index
    %c0_419 = arith.constant 0 : index
    %c0_420 = arith.constant 0 : index
    %c0_421 = arith.constant 0 : index
    %487 = vector.load %arg2[%c3_417, %c0_418, %c0_419, %c0_420, %c0_421] : memref<5x1x3x2x128xf32, #tpu.memory_space<vmem>>, vector<1x1x1x2x128xf32>
    %488 = vector.shape_cast %487 : vector<1x1x1x2x128xf32> to vector<2x128xf32>
    %c48 = arith.constant 48 : index
    %489 = memref.load %arg5[%c48] : memref<75xf32, #tpu.memory_space<smem>>
    %490 = vector.broadcast %489 : f32 to vector<2x128xf32>
    %491 = arith.mulf %488, %490 : vector<2x128xf32>
    %492 = arith.addf %486, %491 : vector<2x128xf32>
    %c3_422 = arith.constant 3 : index
    %c0_423 = arith.constant 0 : index
    %c1_424 = arith.constant 1 : index
    %c0_425 = arith.constant 0 : index
    %c0_426 = arith.constant 0 : index
    %493 = vector.load %arg2[%c3_422, %c0_423, %c1_424, %c0_425, %c0_426] : memref<5x1x3x2x128xf32, #tpu.memory_space<vmem>>, vector<1x1x1x2x128xf32>
    %494 = vector.shape_cast %493 : vector<1x1x1x2x128xf32> to vector<2x128xf32>
    %c49 = arith.constant 49 : index
    %495 = memref.load %arg5[%c49] : memref<75xf32, #tpu.memory_space<smem>>
    %496 = vector.broadcast %495 : f32 to vector<2x128xf32>
    %497 = arith.mulf %494, %496 : vector<2x128xf32>
    %498 = arith.addf %492, %497 : vector<2x128xf32>
    %c3_427 = arith.constant 3 : index
    %c0_428 = arith.constant 0 : index
    %c2_429 = arith.constant 2 : index
    %c0_430 = arith.constant 0 : index
    %c0_431 = arith.constant 0 : index
    %499 = vector.load %arg2[%c3_427, %c0_428, %c2_429, %c0_430, %c0_431] : memref<5x1x3x2x128xf32, #tpu.memory_space<vmem>>, vector<1x1x1x2x128xf32>
    %500 = vector.shape_cast %499 : vector<1x1x1x2x128xf32> to vector<2x128xf32>
    %c50 = arith.constant 50 : index
    %501 = memref.load %arg5[%c50] : memref<75xf32, #tpu.memory_space<smem>>
    %502 = vector.broadcast %501 : f32 to vector<2x128xf32>
    %503 = arith.mulf %500, %502 : vector<2x128xf32>
    %504 = arith.addf %498, %503 : vector<2x128xf32>
    %c4_432 = arith.constant 4 : index
    %c0_433 = arith.constant 0 : index
    %c0_434 = arith.constant 0 : index
    %c0_435 = arith.constant 0 : index
    %c0_436 = arith.constant 0 : index
    %505 = vector.load %arg2[%c4_432, %c0_433, %c0_434, %c0_435, %c0_436] : memref<5x1x3x2x128xf32, #tpu.memory_space<vmem>>, vector<1x1x1x2x128xf32>
    %506 = vector.shape_cast %505 : vector<1x1x1x2x128xf32> to vector<2x128xf32>
    %c63 = arith.constant 63 : index
    %507 = memref.load %arg5[%c63] : memref<75xf32, #tpu.memory_space<smem>>
    %508 = vector.broadcast %507 : f32 to vector<2x128xf32>
    %509 = arith.mulf %506, %508 : vector<2x128xf32>
    %510 = arith.addf %504, %509 : vector<2x128xf32>
    %c4_437 = arith.constant 4 : index
    %c0_438 = arith.constant 0 : index
    %c1_439 = arith.constant 1 : index
    %c0_440 = arith.constant 0 : index
    %c0_441 = arith.constant 0 : index
    %511 = vector.load %arg2[%c4_437, %c0_438, %c1_439, %c0_440, %c0_441] : memref<5x1x3x2x128xf32, #tpu.memory_space<vmem>>, vector<1x1x1x2x128xf32>
    %512 = vector.shape_cast %511 : vector<1x1x1x2x128xf32> to vector<2x128xf32>
    %c64 = arith.constant 64 : index
    %513 = memref.load %arg5[%c64] : memref<75xf32, #tpu.memory_space<smem>>
    %514 = vector.broadcast %513 : f32 to vector<2x128xf32>
    %515 = arith.mulf %512, %514 : vector<2x128xf32>
    %516 = arith.addf %510, %515 : vector<2x128xf32>
    %c4_442 = arith.constant 4 : index
    %c0_443 = arith.constant 0 : index
    %c2_444 = arith.constant 2 : index
    %c0_445 = arith.constant 0 : index
    %c0_446 = arith.constant 0 : index
    %517 = vector.load %arg2[%c4_442, %c0_443, %c2_444, %c0_445, %c0_446] : memref<5x1x3x2x128xf32, #tpu.memory_space<vmem>>, vector<1x1x1x2x128xf32>
    %518 = vector.shape_cast %517 : vector<1x1x1x2x128xf32> to vector<2x128xf32>
    %c65 = arith.constant 65 : index
    %519 = memref.load %arg5[%c65] : memref<75xf32, #tpu.memory_space<smem>>
    %520 = vector.broadcast %519 : f32 to vector<2x128xf32>
    %521 = arith.mulf %518, %520 : vector<2x128xf32>
    %522 = arith.addf %516, %521 : vector<2x128xf32>
    %c1_447 = arith.constant 1 : index
    %523 = memref.load %arg6[%c1_447] : memref<5xf32, #tpu.memory_space<smem>>
    %524 = vector.broadcast %523 : f32 to vector<2x128xf32>
    %525 = arith.addf %522, %524 : vector<2x128xf32>
    %c0_448 = arith.constant 0 : index
    %c0_449 = arith.constant 0 : index
    %c0_450 = arith.constant 0 : index
    %c0_451 = arith.constant 0 : index
    %c0_452 = arith.constant 0 : index
    %526 = vector.load %arg2[%c0_448, %c0_449, %c0_450, %c0_451, %c0_452] : memref<5x1x3x2x128xf32, #tpu.memory_space<vmem>>, vector<1x1x1x2x128xf32>
    %527 = vector.shape_cast %526 : vector<1x1x1x2x128xf32> to vector<2x128xf32>
    %c6_453 = arith.constant 6 : index
    %528 = memref.load %arg5[%c6_453] : memref<75xf32, #tpu.memory_space<smem>>
    %529 = vector.broadcast %528 : f32 to vector<2x128xf32>
    %530 = arith.mulf %527, %529 : vector<2x128xf32>
    %c0_454 = arith.constant 0 : index
    %c0_455 = arith.constant 0 : index
    %c1_456 = arith.constant 1 : index
    %c0_457 = arith.constant 0 : index
    %c0_458 = arith.constant 0 : index
    %531 = vector.load %arg2[%c0_454, %c0_455, %c1_456, %c0_457, %c0_458] : memref<5x1x3x2x128xf32, #tpu.memory_space<vmem>>, vector<1x1x1x2x128xf32>
    %532 = vector.shape_cast %531 : vector<1x1x1x2x128xf32> to vector<2x128xf32>
    %c7_459 = arith.constant 7 : index
    %533 = memref.load %arg5[%c7_459] : memref<75xf32, #tpu.memory_space<smem>>
    %534 = vector.broadcast %533 : f32 to vector<2x128xf32>
    %535 = arith.mulf %532, %534 : vector<2x128xf32>
    %536 = arith.addf %530, %535 : vector<2x128xf32>
    %c0_460 = arith.constant 0 : index
    %c0_461 = arith.constant 0 : index
    %c2_462 = arith.constant 2 : index
    %c0_463 = arith.constant 0 : index
    %c0_464 = arith.constant 0 : index
    %537 = vector.load %arg2[%c0_460, %c0_461, %c2_462, %c0_463, %c0_464] : memref<5x1x3x2x128xf32, #tpu.memory_space<vmem>>, vector<1x1x1x2x128xf32>
    %538 = vector.shape_cast %537 : vector<1x1x1x2x128xf32> to vector<2x128xf32>
    %c8_465 = arith.constant 8 : index
    %539 = memref.load %arg5[%c8_465] : memref<75xf32, #tpu.memory_space<smem>>
    %540 = vector.broadcast %539 : f32 to vector<2x128xf32>
    %541 = arith.mulf %538, %540 : vector<2x128xf32>
    %542 = arith.addf %536, %541 : vector<2x128xf32>
    %c1_466 = arith.constant 1 : index
    %c0_467 = arith.constant 0 : index
    %c0_468 = arith.constant 0 : index
    %c0_469 = arith.constant 0 : index
    %c0_470 = arith.constant 0 : index
    %543 = vector.load %arg2[%c1_466, %c0_467, %c0_468, %c0_469, %c0_470] : memref<5x1x3x2x128xf32, #tpu.memory_space<vmem>>, vector<1x1x1x2x128xf32>
    %544 = vector.shape_cast %543 : vector<1x1x1x2x128xf32> to vector<2x128xf32>
    %c21 = arith.constant 21 : index
    %545 = memref.load %arg5[%c21] : memref<75xf32, #tpu.memory_space<smem>>
    %546 = vector.broadcast %545 : f32 to vector<2x128xf32>
    %547 = arith.mulf %544, %546 : vector<2x128xf32>
    %548 = arith.addf %542, %547 : vector<2x128xf32>
    %c1_471 = arith.constant 1 : index
    %c0_472 = arith.constant 0 : index
    %c1_473 = arith.constant 1 : index
    %c0_474 = arith.constant 0 : index
    %c0_475 = arith.constant 0 : index
    %549 = vector.load %arg2[%c1_471, %c0_472, %c1_473, %c0_474, %c0_475] : memref<5x1x3x2x128xf32, #tpu.memory_space<vmem>>, vector<1x1x1x2x128xf32>
    %550 = vector.shape_cast %549 : vector<1x1x1x2x128xf32> to vector<2x128xf32>
    %c22 = arith.constant 22 : index
    %551 = memref.load %arg5[%c22] : memref<75xf32, #tpu.memory_space<smem>>
    %552 = vector.broadcast %551 : f32 to vector<2x128xf32>
    %553 = arith.mulf %550, %552 : vector<2x128xf32>
    %554 = arith.addf %548, %553 : vector<2x128xf32>
    %c1_476 = arith.constant 1 : index
    %c0_477 = arith.constant 0 : index
    %c2_478 = arith.constant 2 : index
    %c0_479 = arith.constant 0 : index
    %c0_480 = arith.constant 0 : index
    %555 = vector.load %arg2[%c1_476, %c0_477, %c2_478, %c0_479, %c0_480] : memref<5x1x3x2x128xf32, #tpu.memory_space<vmem>>, vector<1x1x1x2x128xf32>
    %556 = vector.shape_cast %555 : vector<1x1x1x2x128xf32> to vector<2x128xf32>
    %c23 = arith.constant 23 : index
    %557 = memref.load %arg5[%c23] : memref<75xf32, #tpu.memory_space<smem>>
    %558 = vector.broadcast %557 : f32 to vector<2x128xf32>
    %559 = arith.mulf %556, %558 : vector<2x128xf32>
    %560 = arith.addf %554, %559 : vector<2x128xf32>
    %c2_481 = arith.constant 2 : index
    %c0_482 = arith.constant 0 : index
    %c0_483 = arith.constant 0 : index
    %c0_484 = arith.constant 0 : index
    %c0_485 = arith.constant 0 : index
    %561 = vector.load %arg2[%c2_481, %c0_482, %c0_483, %c0_484, %c0_485] : memref<5x1x3x2x128xf32, #tpu.memory_space<vmem>>, vector<1x1x1x2x128xf32>
    %562 = vector.shape_cast %561 : vector<1x1x1x2x128xf32> to vector<2x128xf32>
    %c36 = arith.constant 36 : index
    %563 = memref.load %arg5[%c36] : memref<75xf32, #tpu.memory_space<smem>>
    %564 = vector.broadcast %563 : f32 to vector<2x128xf32>
    %565 = arith.mulf %562, %564 : vector<2x128xf32>
    %566 = arith.addf %560, %565 : vector<2x128xf32>
    %c2_486 = arith.constant 2 : index
    %c0_487 = arith.constant 0 : index
    %c1_488 = arith.constant 1 : index
    %c0_489 = arith.constant 0 : index
    %c0_490 = arith.constant 0 : index
    %567 = vector.load %arg2[%c2_486, %c0_487, %c1_488, %c0_489, %c0_490] : memref<5x1x3x2x128xf32, #tpu.memory_space<vmem>>, vector<1x1x1x2x128xf32>
    %568 = vector.shape_cast %567 : vector<1x1x1x2x128xf32> to vector<2x128xf32>
    %c37 = arith.constant 37 : index
    %569 = memref.load %arg5[%c37] : memref<75xf32, #tpu.memory_space<smem>>
    %570 = vector.broadcast %569 : f32 to vector<2x128xf32>
    %571 = arith.mulf %568, %570 : vector<2x128xf32>
    %572 = arith.addf %566, %571 : vector<2x128xf32>
    %c2_491 = arith.constant 2 : index
    %c0_492 = arith.constant 0 : index
    %c2_493 = arith.constant 2 : index
    %c0_494 = arith.constant 0 : index
    %c0_495 = arith.constant 0 : index
    %573 = vector.load %arg2[%c2_491, %c0_492, %c2_493, %c0_494, %c0_495] : memref<5x1x3x2x128xf32, #tpu.memory_space<vmem>>, vector<1x1x1x2x128xf32>
    %574 = vector.shape_cast %573 : vector<1x1x1x2x128xf32> to vector<2x128xf32>
    %c38 = arith.constant 38 : index
    %575 = memref.load %arg5[%c38] : memref<75xf32, #tpu.memory_space<smem>>
    %576 = vector.broadcast %575 : f32 to vector<2x128xf32>
    %577 = arith.mulf %574, %576 : vector<2x128xf32>
    %578 = arith.addf %572, %577 : vector<2x128xf32>
    %c3_496 = arith.constant 3 : index
    %c0_497 = arith.constant 0 : index
    %c0_498 = arith.constant 0 : index
    %c0_499 = arith.constant 0 : index
    %c0_500 = arith.constant 0 : index
    %579 = vector.load %arg2[%c3_496, %c0_497, %c0_498, %c0_499, %c0_500] : memref<5x1x3x2x128xf32, #tpu.memory_space<vmem>>, vector<1x1x1x2x128xf32>
    %580 = vector.shape_cast %579 : vector<1x1x1x2x128xf32> to vector<2x128xf32>
    %c51 = arith.constant 51 : index
    %581 = memref.load %arg5[%c51] : memref<75xf32, #tpu.memory_space<smem>>
    %582 = vector.broadcast %581 : f32 to vector<2x128xf32>
    %583 = arith.mulf %580, %582 : vector<2x128xf32>
    %584 = arith.addf %578, %583 : vector<2x128xf32>
    %c3_501 = arith.constant 3 : index
    %c0_502 = arith.constant 0 : index
    %c1_503 = arith.constant 1 : index
    %c0_504 = arith.constant 0 : index
    %c0_505 = arith.constant 0 : index
    %585 = vector.load %arg2[%c3_501, %c0_502, %c1_503, %c0_504, %c0_505] : memref<5x1x3x2x128xf32, #tpu.memory_space<vmem>>, vector<1x1x1x2x128xf32>
    %586 = vector.shape_cast %585 : vector<1x1x1x2x128xf32> to vector<2x128xf32>
    %c52 = arith.constant 52 : index
    %587 = memref.load %arg5[%c52] : memref<75xf32, #tpu.memory_space<smem>>
    %588 = vector.broadcast %587 : f32 to vector<2x128xf32>
    %589 = arith.mulf %586, %588 : vector<2x128xf32>
    %590 = arith.addf %584, %589 : vector<2x128xf32>
    %c3_506 = arith.constant 3 : index
    %c0_507 = arith.constant 0 : index
    %c2_508 = arith.constant 2 : index
    %c0_509 = arith.constant 0 : index
    %c0_510 = arith.constant 0 : index
    %591 = vector.load %arg2[%c3_506, %c0_507, %c2_508, %c0_509, %c0_510] : memref<5x1x3x2x128xf32, #tpu.memory_space<vmem>>, vector<1x1x1x2x128xf32>
    %592 = vector.shape_cast %591 : vector<1x1x1x2x128xf32> to vector<2x128xf32>
    %c53 = arith.constant 53 : index
    %593 = memref.load %arg5[%c53] : memref<75xf32, #tpu.memory_space<smem>>
    %594 = vector.broadcast %593 : f32 to vector<2x128xf32>
    %595 = arith.mulf %592, %594 : vector<2x128xf32>
    %596 = arith.addf %590, %595 : vector<2x128xf32>
    %c4_511 = arith.constant 4 : index
    %c0_512 = arith.constant 0 : index
    %c0_513 = arith.constant 0 : index
    %c0_514 = arith.constant 0 : index
    %c0_515 = arith.constant 0 : index
    %597 = vector.load %arg2[%c4_511, %c0_512, %c0_513, %c0_514, %c0_515] : memref<5x1x3x2x128xf32, #tpu.memory_space<vmem>>, vector<1x1x1x2x128xf32>
    %598 = vector.shape_cast %597 : vector<1x1x1x2x128xf32> to vector<2x128xf32>
    %c66 = arith.constant 66 : index
    %599 = memref.load %arg5[%c66] : memref<75xf32, #tpu.memory_space<smem>>
    %600 = vector.broadcast %599 : f32 to vector<2x128xf32>
    %601 = arith.mulf %598, %600 : vector<2x128xf32>
    %602 = arith.addf %596, %601 : vector<2x128xf32>
    %c4_516 = arith.constant 4 : index
    %c0_517 = arith.constant 0 : index
    %c1_518 = arith.constant 1 : index
    %c0_519 = arith.constant 0 : index
    %c0_520 = arith.constant 0 : index
    %603 = vector.load %arg2[%c4_516, %c0_517, %c1_518, %c0_519, %c0_520] : memref<5x1x3x2x128xf32, #tpu.memory_space<vmem>>, vector<1x1x1x2x128xf32>
    %604 = vector.shape_cast %603 : vector<1x1x1x2x128xf32> to vector<2x128xf32>
    %c67 = arith.constant 67 : index
    %605 = memref.load %arg5[%c67] : memref<75xf32, #tpu.memory_space<smem>>
    %606 = vector.broadcast %605 : f32 to vector<2x128xf32>
    %607 = arith.mulf %604, %606 : vector<2x128xf32>
    %608 = arith.addf %602, %607 : vector<2x128xf32>
    %c4_521 = arith.constant 4 : index
    %c0_522 = arith.constant 0 : index
    %c2_523 = arith.constant 2 : index
    %c0_524 = arith.constant 0 : index
    %c0_525 = arith.constant 0 : index
    %609 = vector.load %arg2[%c4_521, %c0_522, %c2_523, %c0_524, %c0_525] : memref<5x1x3x2x128xf32, #tpu.memory_space<vmem>>, vector<1x1x1x2x128xf32>
    %610 = vector.shape_cast %609 : vector<1x1x1x2x128xf32> to vector<2x128xf32>
    %c68 = arith.constant 68 : index
    %611 = memref.load %arg5[%c68] : memref<75xf32, #tpu.memory_space<smem>>
    %612 = vector.broadcast %611 : f32 to vector<2x128xf32>
    %613 = arith.mulf %610, %612 : vector<2x128xf32>
    %614 = arith.addf %608, %613 : vector<2x128xf32>
    %c2_526 = arith.constant 2 : index
    %615 = memref.load %arg6[%c2_526] : memref<5xf32, #tpu.memory_space<smem>>
    %616 = vector.broadcast %615 : f32 to vector<2x128xf32>
    %617 = arith.addf %614, %616 : vector<2x128xf32>
    %c0_527 = arith.constant 0 : index
    %c0_528 = arith.constant 0 : index
    %c0_529 = arith.constant 0 : index
    %c0_530 = arith.constant 0 : index
    %c0_531 = arith.constant 0 : index
    %618 = vector.load %arg2[%c0_527, %c0_528, %c0_529, %c0_530, %c0_531] : memref<5x1x3x2x128xf32, #tpu.memory_space<vmem>>, vector<1x1x1x2x128xf32>
    %619 = vector.shape_cast %618 : vector<1x1x1x2x128xf32> to vector<2x128xf32>
    %c9 = arith.constant 9 : index
    %620 = memref.load %arg5[%c9] : memref<75xf32, #tpu.memory_space<smem>>
    %621 = vector.broadcast %620 : f32 to vector<2x128xf32>
    %622 = arith.mulf %619, %621 : vector<2x128xf32>
    %c0_532 = arith.constant 0 : index
    %c0_533 = arith.constant 0 : index
    %c1_534 = arith.constant 1 : index
    %c0_535 = arith.constant 0 : index
    %c0_536 = arith.constant 0 : index
    %623 = vector.load %arg2[%c0_532, %c0_533, %c1_534, %c0_535, %c0_536] : memref<5x1x3x2x128xf32, #tpu.memory_space<vmem>>, vector<1x1x1x2x128xf32>
    %624 = vector.shape_cast %623 : vector<1x1x1x2x128xf32> to vector<2x128xf32>
    %c10 = arith.constant 10 : index
    %625 = memref.load %arg5[%c10] : memref<75xf32, #tpu.memory_space<smem>>
    %626 = vector.broadcast %625 : f32 to vector<2x128xf32>
    %627 = arith.mulf %624, %626 : vector<2x128xf32>
    %628 = arith.addf %622, %627 : vector<2x128xf32>
    %c0_537 = arith.constant 0 : index
    %c0_538 = arith.constant 0 : index
    %c2_539 = arith.constant 2 : index
    %c0_540 = arith.constant 0 : index
    %c0_541 = arith.constant 0 : index
    %629 = vector.load %arg2[%c0_537, %c0_538, %c2_539, %c0_540, %c0_541] : memref<5x1x3x2x128xf32, #tpu.memory_space<vmem>>, vector<1x1x1x2x128xf32>
    %630 = vector.shape_cast %629 : vector<1x1x1x2x128xf32> to vector<2x128xf32>
    %c11 = arith.constant 11 : index
    %631 = memref.load %arg5[%c11] : memref<75xf32, #tpu.memory_space<smem>>
    %632 = vector.broadcast %631 : f32 to vector<2x128xf32>
    %633 = arith.mulf %630, %632 : vector<2x128xf32>
    %634 = arith.addf %628, %633 : vector<2x128xf32>
    %c1_542 = arith.constant 1 : index
    %c0_543 = arith.constant 0 : index
    %c0_544 = arith.constant 0 : index
    %c0_545 = arith.constant 0 : index
    %c0_546 = arith.constant 0 : index
    %635 = vector.load %arg2[%c1_542, %c0_543, %c0_544, %c0_545, %c0_546] : memref<5x1x3x2x128xf32, #tpu.memory_space<vmem>>, vector<1x1x1x2x128xf32>
    %636 = vector.shape_cast %635 : vector<1x1x1x2x128xf32> to vector<2x128xf32>
    %c24 = arith.constant 24 : index
    %637 = memref.load %arg5[%c24] : memref<75xf32, #tpu.memory_space<smem>>
    %638 = vector.broadcast %637 : f32 to vector<2x128xf32>
    %639 = arith.mulf %636, %638 : vector<2x128xf32>
    %640 = arith.addf %634, %639 : vector<2x128xf32>
    %c1_547 = arith.constant 1 : index
    %c0_548 = arith.constant 0 : index
    %c1_549 = arith.constant 1 : index
    %c0_550 = arith.constant 0 : index
    %c0_551 = arith.constant 0 : index
    %641 = vector.load %arg2[%c1_547, %c0_548, %c1_549, %c0_550, %c0_551] : memref<5x1x3x2x128xf32, #tpu.memory_space<vmem>>, vector<1x1x1x2x128xf32>
    %642 = vector.shape_cast %641 : vector<1x1x1x2x128xf32> to vector<2x128xf32>
    %c25 = arith.constant 25 : index
    %643 = memref.load %arg5[%c25] : memref<75xf32, #tpu.memory_space<smem>>
    %644 = vector.broadcast %643 : f32 to vector<2x128xf32>
    %645 = arith.mulf %642, %644 : vector<2x128xf32>
    %646 = arith.addf %640, %645 : vector<2x128xf32>
    %c1_552 = arith.constant 1 : index
    %c0_553 = arith.constant 0 : index
    %c2_554 = arith.constant 2 : index
    %c0_555 = arith.constant 0 : index
    %c0_556 = arith.constant 0 : index
    %647 = vector.load %arg2[%c1_552, %c0_553, %c2_554, %c0_555, %c0_556] : memref<5x1x3x2x128xf32, #tpu.memory_space<vmem>>, vector<1x1x1x2x128xf32>
    %648 = vector.shape_cast %647 : vector<1x1x1x2x128xf32> to vector<2x128xf32>
    %c26 = arith.constant 26 : index
    %649 = memref.load %arg5[%c26] : memref<75xf32, #tpu.memory_space<smem>>
    %650 = vector.broadcast %649 : f32 to vector<2x128xf32>
    %651 = arith.mulf %648, %650 : vector<2x128xf32>
    %652 = arith.addf %646, %651 : vector<2x128xf32>
    %c2_557 = arith.constant 2 : index
    %c0_558 = arith.constant 0 : index
    %c0_559 = arith.constant 0 : index
    %c0_560 = arith.constant 0 : index
    %c0_561 = arith.constant 0 : index
    %653 = vector.load %arg2[%c2_557, %c0_558, %c0_559, %c0_560, %c0_561] : memref<5x1x3x2x128xf32, #tpu.memory_space<vmem>>, vector<1x1x1x2x128xf32>
    %654 = vector.shape_cast %653 : vector<1x1x1x2x128xf32> to vector<2x128xf32>
    %c39 = arith.constant 39 : index
    %655 = memref.load %arg5[%c39] : memref<75xf32, #tpu.memory_space<smem>>
    %656 = vector.broadcast %655 : f32 to vector<2x128xf32>
    %657 = arith.mulf %654, %656 : vector<2x128xf32>
    %658 = arith.addf %652, %657 : vector<2x128xf32>
    %c2_562 = arith.constant 2 : index
    %c0_563 = arith.constant 0 : index
    %c1_564 = arith.constant 1 : index
    %c0_565 = arith.constant 0 : index
    %c0_566 = arith.constant 0 : index
    %659 = vector.load %arg2[%c2_562, %c0_563, %c1_564, %c0_565, %c0_566] : memref<5x1x3x2x128xf32, #tpu.memory_space<vmem>>, vector<1x1x1x2x128xf32>
    %660 = vector.shape_cast %659 : vector<1x1x1x2x128xf32> to vector<2x128xf32>
    %c40 = arith.constant 40 : index
    %661 = memref.load %arg5[%c40] : memref<75xf32, #tpu.memory_space<smem>>
    %662 = vector.broadcast %661 : f32 to vector<2x128xf32>
    %663 = arith.mulf %660, %662 : vector<2x128xf32>
    %664 = arith.addf %658, %663 : vector<2x128xf32>
    %c2_567 = arith.constant 2 : index
    %c0_568 = arith.constant 0 : index
    %c2_569 = arith.constant 2 : index
    %c0_570 = arith.constant 0 : index
    %c0_571 = arith.constant 0 : index
    %665 = vector.load %arg2[%c2_567, %c0_568, %c2_569, %c0_570, %c0_571] : memref<5x1x3x2x128xf32, #tpu.memory_space<vmem>>, vector<1x1x1x2x128xf32>
    %666 = vector.shape_cast %665 : vector<1x1x1x2x128xf32> to vector<2x128xf32>
    %c41 = arith.constant 41 : index
    %667 = memref.load %arg5[%c41] : memref<75xf32, #tpu.memory_space<smem>>
    %668 = vector.broadcast %667 : f32 to vector<2x128xf32>
    %669 = arith.mulf %666, %668 : vector<2x128xf32>
    %670 = arith.addf %664, %669 : vector<2x128xf32>
    %c3_572 = arith.constant 3 : index
    %c0_573 = arith.constant 0 : index
    %c0_574 = arith.constant 0 : index
    %c0_575 = arith.constant 0 : index
    %c0_576 = arith.constant 0 : index
    %671 = vector.load %arg2[%c3_572, %c0_573, %c0_574, %c0_575, %c0_576] : memref<5x1x3x2x128xf32, #tpu.memory_space<vmem>>, vector<1x1x1x2x128xf32>
    %672 = vector.shape_cast %671 : vector<1x1x1x2x128xf32> to vector<2x128xf32>
    %c54 = arith.constant 54 : index
    %673 = memref.load %arg5[%c54] : memref<75xf32, #tpu.memory_space<smem>>
    %674 = vector.broadcast %673 : f32 to vector<2x128xf32>
    %675 = arith.mulf %672, %674 : vector<2x128xf32>
    %676 = arith.addf %670, %675 : vector<2x128xf32>
    %c3_577 = arith.constant 3 : index
    %c0_578 = arith.constant 0 : index
    %c1_579 = arith.constant 1 : index
    %c0_580 = arith.constant 0 : index
    %c0_581 = arith.constant 0 : index
    %677 = vector.load %arg2[%c3_577, %c0_578, %c1_579, %c0_580, %c0_581] : memref<5x1x3x2x128xf32, #tpu.memory_space<vmem>>, vector<1x1x1x2x128xf32>
    %678 = vector.shape_cast %677 : vector<1x1x1x2x128xf32> to vector<2x128xf32>
    %c55 = arith.constant 55 : index
    %679 = memref.load %arg5[%c55] : memref<75xf32, #tpu.memory_space<smem>>
    %680 = vector.broadcast %679 : f32 to vector<2x128xf32>
    %681 = arith.mulf %678, %680 : vector<2x128xf32>
    %682 = arith.addf %676, %681 : vector<2x128xf32>
    %c3_582 = arith.constant 3 : index
    %c0_583 = arith.constant 0 : index
    %c2_584 = arith.constant 2 : index
    %c0_585 = arith.constant 0 : index
    %c0_586 = arith.constant 0 : index
    %683 = vector.load %arg2[%c3_582, %c0_583, %c2_584, %c0_585, %c0_586] : memref<5x1x3x2x128xf32, #tpu.memory_space<vmem>>, vector<1x1x1x2x128xf32>
    %684 = vector.shape_cast %683 : vector<1x1x1x2x128xf32> to vector<2x128xf32>
    %c56 = arith.constant 56 : index
    %685 = memref.load %arg5[%c56] : memref<75xf32, #tpu.memory_space<smem>>
    %686 = vector.broadcast %685 : f32 to vector<2x128xf32>
    %687 = arith.mulf %684, %686 : vector<2x128xf32>
    %688 = arith.addf %682, %687 : vector<2x128xf32>
    %c4_587 = arith.constant 4 : index
    %c0_588 = arith.constant 0 : index
    %c0_589 = arith.constant 0 : index
    %c0_590 = arith.constant 0 : index
    %c0_591 = arith.constant 0 : index
    %689 = vector.load %arg2[%c4_587, %c0_588, %c0_589, %c0_590, %c0_591] : memref<5x1x3x2x128xf32, #tpu.memory_space<vmem>>, vector<1x1x1x2x128xf32>
    %690 = vector.shape_cast %689 : vector<1x1x1x2x128xf32> to vector<2x128xf32>
    %c69 = arith.constant 69 : index
    %691 = memref.load %arg5[%c69] : memref<75xf32, #tpu.memory_space<smem>>
    %692 = vector.broadcast %691 : f32 to vector<2x128xf32>
    %693 = arith.mulf %690, %692 : vector<2x128xf32>
    %694 = arith.addf %688, %693 : vector<2x128xf32>
    %c4_592 = arith.constant 4 : index
    %c0_593 = arith.constant 0 : index
    %c1_594 = arith.constant 1 : index
    %c0_595 = arith.constant 0 : index
    %c0_596 = arith.constant 0 : index
    %695 = vector.load %arg2[%c4_592, %c0_593, %c1_594, %c0_595, %c0_596] : memref<5x1x3x2x128xf32, #tpu.memory_space<vmem>>, vector<1x1x1x2x128xf32>
    %696 = vector.shape_cast %695 : vector<1x1x1x2x128xf32> to vector<2x128xf32>
    %c70 = arith.constant 70 : index
    %697 = memref.load %arg5[%c70] : memref<75xf32, #tpu.memory_space<smem>>
    %698 = vector.broadcast %697 : f32 to vector<2x128xf32>
    %699 = arith.mulf %696, %698 : vector<2x128xf32>
    %700 = arith.addf %694, %699 : vector<2x128xf32>
    %c4_597 = arith.constant 4 : index
    %c0_598 = arith.constant 0 : index
    %c2_599 = arith.constant 2 : index
    %c0_600 = arith.constant 0 : index
    %c0_601 = arith.constant 0 : index
    %701 = vector.load %arg2[%c4_597, %c0_598, %c2_599, %c0_600, %c0_601] : memref<5x1x3x2x128xf32, #tpu.memory_space<vmem>>, vector<1x1x1x2x128xf32>
    %702 = vector.shape_cast %701 : vector<1x1x1x2x128xf32> to vector<2x128xf32>
    %c71 = arith.constant 71 : index
    %703 = memref.load %arg5[%c71] : memref<75xf32, #tpu.memory_space<smem>>
    %704 = vector.broadcast %703 : f32 to vector<2x128xf32>
    %705 = arith.mulf %702, %704 : vector<2x128xf32>
    %706 = arith.addf %700, %705 : vector<2x128xf32>
    %c3_602 = arith.constant 3 : index
    %707 = memref.load %arg6[%c3_602] : memref<5xf32, #tpu.memory_space<smem>>
    %708 = vector.broadcast %707 : f32 to vector<2x128xf32>
    %709 = arith.addf %706, %708 : vector<2x128xf32>
    %c0_603 = arith.constant 0 : index
    %c0_604 = arith.constant 0 : index
    %c0_605 = arith.constant 0 : index
    %c0_606 = arith.constant 0 : index
    %c0_607 = arith.constant 0 : index
    %710 = vector.load %arg2[%c0_603, %c0_604, %c0_605, %c0_606, %c0_607] : memref<5x1x3x2x128xf32, #tpu.memory_space<vmem>>, vector<1x1x1x2x128xf32>
    %711 = vector.shape_cast %710 : vector<1x1x1x2x128xf32> to vector<2x128xf32>
    %c12 = arith.constant 12 : index
    %712 = memref.load %arg5[%c12] : memref<75xf32, #tpu.memory_space<smem>>
    %713 = vector.broadcast %712 : f32 to vector<2x128xf32>
    %714 = arith.mulf %711, %713 : vector<2x128xf32>
    %c0_608 = arith.constant 0 : index
    %c0_609 = arith.constant 0 : index
    %c1_610 = arith.constant 1 : index
    %c0_611 = arith.constant 0 : index
    %c0_612 = arith.constant 0 : index
    %715 = vector.load %arg2[%c0_608, %c0_609, %c1_610, %c0_611, %c0_612] : memref<5x1x3x2x128xf32, #tpu.memory_space<vmem>>, vector<1x1x1x2x128xf32>
    %716 = vector.shape_cast %715 : vector<1x1x1x2x128xf32> to vector<2x128xf32>
    %c13 = arith.constant 13 : index
    %717 = memref.load %arg5[%c13] : memref<75xf32, #tpu.memory_space<smem>>
    %718 = vector.broadcast %717 : f32 to vector<2x128xf32>
    %719 = arith.mulf %716, %718 : vector<2x128xf32>
    %720 = arith.addf %714, %719 : vector<2x128xf32>
    %c0_613 = arith.constant 0 : index
    %c0_614 = arith.constant 0 : index
    %c2_615 = arith.constant 2 : index
    %c0_616 = arith.constant 0 : index
    %c0_617 = arith.constant 0 : index
    %721 = vector.load %arg2[%c0_613, %c0_614, %c2_615, %c0_616, %c0_617] : memref<5x1x3x2x128xf32, #tpu.memory_space<vmem>>, vector<1x1x1x2x128xf32>
    %722 = vector.shape_cast %721 : vector<1x1x1x2x128xf32> to vector<2x128xf32>
    %c14 = arith.constant 14 : index
    %723 = memref.load %arg5[%c14] : memref<75xf32, #tpu.memory_space<smem>>
    %724 = vector.broadcast %723 : f32 to vector<2x128xf32>
    %725 = arith.mulf %722, %724 : vector<2x128xf32>
    %726 = arith.addf %720, %725 : vector<2x128xf32>
    %c1_618 = arith.constant 1 : index
    %c0_619 = arith.constant 0 : index
    %c0_620 = arith.constant 0 : index
    %c0_621 = arith.constant 0 : index
    %c0_622 = arith.constant 0 : index
    %727 = vector.load %arg2[%c1_618, %c0_619, %c0_620, %c0_621, %c0_622] : memref<5x1x3x2x128xf32, #tpu.memory_space<vmem>>, vector<1x1x1x2x128xf32>
    %728 = vector.shape_cast %727 : vector<1x1x1x2x128xf32> to vector<2x128xf32>
    %c27 = arith.constant 27 : index
    %729 = memref.load %arg5[%c27] : memref<75xf32, #tpu.memory_space<smem>>
    %730 = vector.broadcast %729 : f32 to vector<2x128xf32>
    %731 = arith.mulf %728, %730 : vector<2x128xf32>
    %732 = arith.addf %726, %731 : vector<2x128xf32>
    %c1_623 = arith.constant 1 : index
    %c0_624 = arith.constant 0 : index
    %c1_625 = arith.constant 1 : index
    %c0_626 = arith.constant 0 : index
    %c0_627 = arith.constant 0 : index
    %733 = vector.load %arg2[%c1_623, %c0_624, %c1_625, %c0_626, %c0_627] : memref<5x1x3x2x128xf32, #tpu.memory_space<vmem>>, vector<1x1x1x2x128xf32>
    %734 = vector.shape_cast %733 : vector<1x1x1x2x128xf32> to vector<2x128xf32>
    %c28 = arith.constant 28 : index
    %735 = memref.load %arg5[%c28] : memref<75xf32, #tpu.memory_space<smem>>
    %736 = vector.broadcast %735 : f32 to vector<2x128xf32>
    %737 = arith.mulf %734, %736 : vector<2x128xf32>
    %738 = arith.addf %732, %737 : vector<2x128xf32>
    %c1_628 = arith.constant 1 : index
    %c0_629 = arith.constant 0 : index
    %c2_630 = arith.constant 2 : index
    %c0_631 = arith.constant 0 : index
    %c0_632 = arith.constant 0 : index
    %739 = vector.load %arg2[%c1_628, %c0_629, %c2_630, %c0_631, %c0_632] : memref<5x1x3x2x128xf32, #tpu.memory_space<vmem>>, vector<1x1x1x2x128xf32>
    %740 = vector.shape_cast %739 : vector<1x1x1x2x128xf32> to vector<2x128xf32>
    %c29 = arith.constant 29 : index
    %741 = memref.load %arg5[%c29] : memref<75xf32, #tpu.memory_space<smem>>
    %742 = vector.broadcast %741 : f32 to vector<2x128xf32>
    %743 = arith.mulf %740, %742 : vector<2x128xf32>
    %744 = arith.addf %738, %743 : vector<2x128xf32>
    %c2_633 = arith.constant 2 : index
    %c0_634 = arith.constant 0 : index
    %c0_635 = arith.constant 0 : index
    %c0_636 = arith.constant 0 : index
    %c0_637 = arith.constant 0 : index
    %745 = vector.load %arg2[%c2_633, %c0_634, %c0_635, %c0_636, %c0_637] : memref<5x1x3x2x128xf32, #tpu.memory_space<vmem>>, vector<1x1x1x2x128xf32>
    %746 = vector.shape_cast %745 : vector<1x1x1x2x128xf32> to vector<2x128xf32>
    %c42 = arith.constant 42 : index
    %747 = memref.load %arg5[%c42] : memref<75xf32, #tpu.memory_space<smem>>
    %748 = vector.broadcast %747 : f32 to vector<2x128xf32>
    %749 = arith.mulf %746, %748 : vector<2x128xf32>
    %750 = arith.addf %744, %749 : vector<2x128xf32>
    %c2_638 = arith.constant 2 : index
    %c0_639 = arith.constant 0 : index
    %c1_640 = arith.constant 1 : index
    %c0_641 = arith.constant 0 : index
    %c0_642 = arith.constant 0 : index
    %751 = vector.load %arg2[%c2_638, %c0_639, %c1_640, %c0_641, %c0_642] : memref<5x1x3x2x128xf32, #tpu.memory_space<vmem>>, vector<1x1x1x2x128xf32>
    %752 = vector.shape_cast %751 : vector<1x1x1x2x128xf32> to vector<2x128xf32>
    %c43 = arith.constant 43 : index
    %753 = memref.load %arg5[%c43] : memref<75xf32, #tpu.memory_space<smem>>
    %754 = vector.broadcast %753 : f32 to vector<2x128xf32>
    %755 = arith.mulf %752, %754 : vector<2x128xf32>
    %756 = arith.addf %750, %755 : vector<2x128xf32>
    %c2_643 = arith.constant 2 : index
    %c0_644 = arith.constant 0 : index
    %c2_645 = arith.constant 2 : index
    %c0_646 = arith.constant 0 : index
    %c0_647 = arith.constant 0 : index
    %757 = vector.load %arg2[%c2_643, %c0_644, %c2_645, %c0_646, %c0_647] : memref<5x1x3x2x128xf32, #tpu.memory_space<vmem>>, vector<1x1x1x2x128xf32>
    %758 = vector.shape_cast %757 : vector<1x1x1x2x128xf32> to vector<2x128xf32>
    %c44 = arith.constant 44 : index
    %759 = memref.load %arg5[%c44] : memref<75xf32, #tpu.memory_space<smem>>
    %760 = vector.broadcast %759 : f32 to vector<2x128xf32>
    %761 = arith.mulf %758, %760 : vector<2x128xf32>
    %762 = arith.addf %756, %761 : vector<2x128xf32>
    %c3_648 = arith.constant 3 : index
    %c0_649 = arith.constant 0 : index
    %c0_650 = arith.constant 0 : index
    %c0_651 = arith.constant 0 : index
    %c0_652 = arith.constant 0 : index
    %763 = vector.load %arg2[%c3_648, %c0_649, %c0_650, %c0_651, %c0_652] : memref<5x1x3x2x128xf32, #tpu.memory_space<vmem>>, vector<1x1x1x2x128xf32>
    %764 = vector.shape_cast %763 : vector<1x1x1x2x128xf32> to vector<2x128xf32>
    %c57 = arith.constant 57 : index
    %765 = memref.load %arg5[%c57] : memref<75xf32, #tpu.memory_space<smem>>
    %766 = vector.broadcast %765 : f32 to vector<2x128xf32>
    %767 = arith.mulf %764, %766 : vector<2x128xf32>
    %768 = arith.addf %762, %767 : vector<2x128xf32>
    %c3_653 = arith.constant 3 : index
    %c0_654 = arith.constant 0 : index
    %c1_655 = arith.constant 1 : index
    %c0_656 = arith.constant 0 : index
    %c0_657 = arith.constant 0 : index
    %769 = vector.load %arg2[%c3_653, %c0_654, %c1_655, %c0_656, %c0_657] : memref<5x1x3x2x128xf32, #tpu.memory_space<vmem>>, vector<1x1x1x2x128xf32>
    %770 = vector.shape_cast %769 : vector<1x1x1x2x128xf32> to vector<2x128xf32>
    %c58 = arith.constant 58 : index
    %771 = memref.load %arg5[%c58] : memref<75xf32, #tpu.memory_space<smem>>
    %772 = vector.broadcast %771 : f32 to vector<2x128xf32>
    %773 = arith.mulf %770, %772 : vector<2x128xf32>
    %774 = arith.addf %768, %773 : vector<2x128xf32>
    %c3_658 = arith.constant 3 : index
    %c0_659 = arith.constant 0 : index
    %c2_660 = arith.constant 2 : index
    %c0_661 = arith.constant 0 : index
    %c0_662 = arith.constant 0 : index
    %775 = vector.load %arg2[%c3_658, %c0_659, %c2_660, %c0_661, %c0_662] : memref<5x1x3x2x128xf32, #tpu.memory_space<vmem>>, vector<1x1x1x2x128xf32>
    %776 = vector.shape_cast %775 : vector<1x1x1x2x128xf32> to vector<2x128xf32>
    %c59 = arith.constant 59 : index
    %777 = memref.load %arg5[%c59] : memref<75xf32, #tpu.memory_space<smem>>
    %778 = vector.broadcast %777 : f32 to vector<2x128xf32>
    %779 = arith.mulf %776, %778 : vector<2x128xf32>
    %780 = arith.addf %774, %779 : vector<2x128xf32>
    %c4_663 = arith.constant 4 : index
    %c0_664 = arith.constant 0 : index
    %c0_665 = arith.constant 0 : index
    %c0_666 = arith.constant 0 : index
    %c0_667 = arith.constant 0 : index
    %781 = vector.load %arg2[%c4_663, %c0_664, %c0_665, %c0_666, %c0_667] : memref<5x1x3x2x128xf32, #tpu.memory_space<vmem>>, vector<1x1x1x2x128xf32>
    %782 = vector.shape_cast %781 : vector<1x1x1x2x128xf32> to vector<2x128xf32>
    %c72 = arith.constant 72 : index
    %783 = memref.load %arg5[%c72] : memref<75xf32, #tpu.memory_space<smem>>
    %784 = vector.broadcast %783 : f32 to vector<2x128xf32>
    %785 = arith.mulf %782, %784 : vector<2x128xf32>
    %786 = arith.addf %780, %785 : vector<2x128xf32>
    %c4_668 = arith.constant 4 : index
    %c0_669 = arith.constant 0 : index
    %c1_670 = arith.constant 1 : index
    %c0_671 = arith.constant 0 : index
    %c0_672 = arith.constant 0 : index
    %787 = vector.load %arg2[%c4_668, %c0_669, %c1_670, %c0_671, %c0_672] : memref<5x1x3x2x128xf32, #tpu.memory_space<vmem>>, vector<1x1x1x2x128xf32>
    %788 = vector.shape_cast %787 : vector<1x1x1x2x128xf32> to vector<2x128xf32>
    %c73 = arith.constant 73 : index
    %789 = memref.load %arg5[%c73] : memref<75xf32, #tpu.memory_space<smem>>
    %790 = vector.broadcast %789 : f32 to vector<2x128xf32>
    %791 = arith.mulf %788, %790 : vector<2x128xf32>
    %792 = arith.addf %786, %791 : vector<2x128xf32>
    %c4_673 = arith.constant 4 : index
    %c0_674 = arith.constant 0 : index
    %c2_675 = arith.constant 2 : index
    %c0_676 = arith.constant 0 : index
    %c0_677 = arith.constant 0 : index
    %793 = vector.load %arg2[%c4_673, %c0_674, %c2_675, %c0_676, %c0_677] : memref<5x1x3x2x128xf32, #tpu.memory_space<vmem>>, vector<1x1x1x2x128xf32>
    %794 = vector.shape_cast %793 : vector<1x1x1x2x128xf32> to vector<2x128xf32>
    %c74 = arith.constant 74 : index
    %795 = memref.load %arg5[%c74] : memref<75xf32, #tpu.memory_space<smem>>
    %796 = vector.broadcast %795 : f32 to vector<2x128xf32>
    %797 = arith.mulf %794, %796 : vector<2x128xf32>
    %798 = arith.addf %792, %797 : vector<2x128xf32>
    %c4_678 = arith.constant 4 : index
    %799 = memref.load %arg6[%c4_678] : memref<5xf32, #tpu.memory_space<smem>>
    %800 = vector.broadcast %799 : f32 to vector<2x128xf32>
    %801 = arith.addf %798, %800 : vector<2x128xf32>
    %802 = arith.maximumf %433, %525 : vector<2x128xf32>
    %803 = arith.maximumf %802, %617 : vector<2x128xf32>
    %804 = arith.maximumf %803, %709 : vector<2x128xf32>
    %805 = arith.maximumf %804, %801 : vector<2x128xf32>
    %806 = arith.subf %433, %805 : vector<2x128xf32>
    %807 = math.exp %806 : vector<2x128xf32>
    %808 = arith.subf %525, %805 : vector<2x128xf32>
    %809 = math.exp %808 : vector<2x128xf32>
    %810 = arith.subf %617, %805 : vector<2x128xf32>
    %811 = math.exp %810 : vector<2x128xf32>
    %812 = arith.subf %709, %805 : vector<2x128xf32>
    %813 = math.exp %812 : vector<2x128xf32>
    %814 = arith.subf %801, %805 : vector<2x128xf32>
    %815 = math.exp %814 : vector<2x128xf32>
    %816 = arith.addf %807, %809 : vector<2x128xf32>
    %817 = arith.addf %816, %811 : vector<2x128xf32>
    %818 = arith.addf %817, %813 : vector<2x128xf32>
    %819 = arith.addf %818, %815 : vector<2x128xf32>
    %820 = tpu.reciprocal %819 : vector<2x128xf32> -> vector<2x128xf32>
    %821 = arith.mulf %807, %820 : vector<2x128xf32>
    %c0_679 = arith.constant 0 : index
    %c0_680 = arith.constant 0 : index
    %c0_681 = arith.constant 0 : index
    %c0_682 = arith.constant 0 : index
    %822 = vector.load %arg11[%c0_679, %c0_680, %c0_681, %c0_682] : memref<1x5x2x128xf32, #tpu.memory_space<vmem>>, vector<1x1x2x128xf32>
    %823 = vector.shape_cast %822 : vector<1x1x2x128xf32> to vector<2x128xf32>
    %824 = vector.shape_cast %821 : vector<2x128xf32> to vector<1x1x2x128xf32>
    tpu.vector_store %arg11[%c0_679, %c0_680, %c0_681, %c0_682], %824 {strides = array<i32>} : memref<1x5x2x128xf32, #tpu.memory_space<vmem>>, vector<1x1x2x128xf32>,
    %c0_683 = arith.constant 0 : index
    %c0_684 = arith.constant 0 : index
    %c0_685 = arith.constant 0 : index
    %c0_686 = arith.constant 0 : index
    %c0_687 = arith.constant 0 : index
    %825 = vector.load %arg7[%c0_683, %c0_684, %c0_685, %c0_686, %c0_687] : memref<1x5x3x2x128xf32, #tpu.memory_space<vmem>>, vector<1x1x1x2x128xf32>
    %826 = vector.shape_cast %825 : vector<1x1x1x2x128xf32> to vector<2x128xf32>
    %827 = arith.mulf %821, %826 : vector<2x128xf32>
    %c0_688 = arith.constant 0 : index
    %c0_689 = arith.constant 0 : index
    %c0_690 = arith.constant 0 : index
    %c0_691 = arith.constant 0 : index
    %c0_692 = arith.constant 0 : index
    %828 = vector.load %arg9[%c0_688, %c0_689, %c0_690, %c0_691, %c0_692] : memref<1x5x3x2x128xf32, #tpu.memory_space<vmem>>, vector<1x1x1x2x128xf32>
    %829 = vector.shape_cast %828 : vector<1x1x1x2x128xf32> to vector<2x128xf32>
    %830 = vector.shape_cast %827 : vector<2x128xf32> to vector<1x1x1x2x128xf32>
    tpu.vector_store %arg9[%c0_688, %c0_689, %c0_690, %c0_691, %c0_692], %830 {strides = array<i32>} : memref<1x5x3x2x128xf32, #tpu.memory_space<vmem>>, vector<1x1x1x2x128xf32>,
    %c0_693 = arith.constant 0 : index
    %c0_694 = arith.constant 0 : index
    %c1_695 = arith.constant 1 : index
    %c0_696 = arith.constant 0 : index
    %c0_697 = arith.constant 0 : index
    %831 = vector.load %arg7[%c0_693, %c0_694, %c1_695, %c0_696, %c0_697] : memref<1x5x3x2x128xf32, #tpu.memory_space<vmem>>, vector<1x1x1x2x128xf32>
    %832 = vector.shape_cast %831 : vector<1x1x1x2x128xf32> to vector<2x128xf32>
    %833 = arith.mulf %821, %832 : vector<2x128xf32>
    %c0_698 = arith.constant 0 : index
    %c0_699 = arith.constant 0 : index
    %c1_700 = arith.constant 1 : index
    %c0_701 = arith.constant 0 : index
    %c0_702 = arith.constant 0 : index
    %834 = vector.load %arg9[%c0_698, %c0_699, %c1_700, %c0_701, %c0_702] : memref<1x5x3x2x128xf32, #tpu.memory_space<vmem>>, vector<1x1x1x2x128xf32>
    %835 = vector.shape_cast %834 : vector<1x1x1x2x128xf32> to vector<2x128xf32>
    %836 = vector.shape_cast %833 : vector<2x128xf32> to vector<1x1x1x2x128xf32>
    tpu.vector_store %arg9[%c0_698, %c0_699, %c1_700, %c0_701, %c0_702], %836 {strides = array<i32>} : memref<1x5x3x2x128xf32, #tpu.memory_space<vmem>>, vector<1x1x1x2x128xf32>,
    %c0_703 = arith.constant 0 : index
    %c0_704 = arith.constant 0 : index
    %c2_705 = arith.constant 2 : index
    %c0_706 = arith.constant 0 : index
    %c0_707 = arith.constant 0 : index
    %837 = vector.load %arg7[%c0_703, %c0_704, %c2_705, %c0_706, %c0_707] : memref<1x5x3x2x128xf32, #tpu.memory_space<vmem>>, vector<1x1x1x2x128xf32>
    %838 = vector.shape_cast %837 : vector<1x1x1x2x128xf32> to vector<2x128xf32>
    %839 = arith.mulf %821, %838 : vector<2x128xf32>
    %c0_708 = arith.constant 0 : index
    %c0_709 = arith.constant 0 : index
    %c2_710 = arith.constant 2 : index
    %c0_711 = arith.constant 0 : index
    %c0_712 = arith.constant 0 : index
    %840 = vector.load %arg9[%c0_708, %c0_709, %c2_710, %c0_711, %c0_712] : memref<1x5x3x2x128xf32, #tpu.memory_space<vmem>>, vector<1x1x1x2x128xf32>
    %841 = vector.shape_cast %840 : vector<1x1x1x2x128xf32> to vector<2x128xf32>
    %842 = vector.shape_cast %839 : vector<2x128xf32> to vector<1x1x1x2x128xf32>
    tpu.vector_store %arg9[%c0_708, %c0_709, %c2_710, %c0_711, %c0_712], %842 {strides = array<i32>} : memref<1x5x3x2x128xf32, #tpu.memory_space<vmem>>, vector<1x1x1x2x128xf32>,
    %843 = arith.mulf %809, %820 : vector<2x128xf32>
    %c0_713 = arith.constant 0 : index
    %c1_714 = arith.constant 1 : index
    %c0_715 = arith.constant 0 : index
    %c0_716 = arith.constant 0 : index
    %844 = vector.load %arg11[%c0_713, %c1_714, %c0_715, %c0_716] : memref<1x5x2x128xf32, #tpu.memory_space<vmem>>, vector<1x1x2x128xf32>
    %845 = vector.shape_cast %844 : vector<1x1x2x128xf32> to vector<2x128xf32>
    %846 = vector.shape_cast %843 : vector<2x128xf32> to vector<1x1x2x128xf32>
    tpu.vector_store %arg11[%c0_713, %c1_714, %c0_715, %c0_716], %846 {strides = array<i32>} : memref<1x5x2x128xf32, #tpu.memory_space<vmem>>, vector<1x1x2x128xf32>,
    %c0_717 = arith.constant 0 : index
    %c1_718 = arith.constant 1 : index
    %c0_719 = arith.constant 0 : index
    %c0_720 = arith.constant 0 : index
    %c0_721 = arith.constant 0 : index
    %847 = vector.load %arg7[%c0_717, %c1_718, %c0_719, %c0_720, %c0_721] : memref<1x5x3x2x128xf32, #tpu.memory_space<vmem>>, vector<1x1x1x2x128xf32>
    %848 = vector.shape_cast %847 : vector<1x1x1x2x128xf32> to vector<2x128xf32>
    %849 = arith.mulf %843, %848 : vector<2x128xf32>
    %c0_722 = arith.constant 0 : index
    %c1_723 = arith.constant 1 : index
    %c0_724 = arith.constant 0 : index
    %c0_725 = arith.constant 0 : index
    %c0_726 = arith.constant 0 : index
    %850 = vector.load %arg9[%c0_722, %c1_723, %c0_724, %c0_725, %c0_726] : memref<1x5x3x2x128xf32, #tpu.memory_space<vmem>>, vector<1x1x1x2x128xf32>
    %851 = vector.shape_cast %850 : vector<1x1x1x2x128xf32> to vector<2x128xf32>
    %852 = vector.shape_cast %849 : vector<2x128xf32> to vector<1x1x1x2x128xf32>
    tpu.vector_store %arg9[%c0_722, %c1_723, %c0_724, %c0_725, %c0_726], %852 {strides = array<i32>} : memref<1x5x3x2x128xf32, #tpu.memory_space<vmem>>, vector<1x1x1x2x128xf32>,
    %c0_727 = arith.constant 0 : index
    %c1_728 = arith.constant 1 : index
    %c1_729 = arith.constant 1 : index
    %c0_730 = arith.constant 0 : index
    %c0_731 = arith.constant 0 : index
    %853 = vector.load %arg7[%c0_727, %c1_728, %c1_729, %c0_730, %c0_731] : memref<1x5x3x2x128xf32, #tpu.memory_space<vmem>>, vector<1x1x1x2x128xf32>
    %854 = vector.shape_cast %853 : vector<1x1x1x2x128xf32> to vector<2x128xf32>
    %855 = arith.mulf %843, %854 : vector<2x128xf32>
    %c0_732 = arith.constant 0 : index
    %c1_733 = arith.constant 1 : index
    %c1_734 = arith.constant 1 : index
    %c0_735 = arith.constant 0 : index
    %c0_736 = arith.constant 0 : index
    %856 = vector.load %arg9[%c0_732, %c1_733, %c1_734, %c0_735, %c0_736] : memref<1x5x3x2x128xf32, #tpu.memory_space<vmem>>, vector<1x1x1x2x128xf32>
    %857 = vector.shape_cast %856 : vector<1x1x1x2x128xf32> to vector<2x128xf32>
    %858 = vector.shape_cast %855 : vector<2x128xf32> to vector<1x1x1x2x128xf32>
    tpu.vector_store %arg9[%c0_732, %c1_733, %c1_734, %c0_735, %c0_736], %858 {strides = array<i32>} : memref<1x5x3x2x128xf32, #tpu.memory_space<vmem>>, vector<1x1x1x2x128xf32>,
    %c0_737 = arith.constant 0 : index
    %c1_738 = arith.constant 1 : index
    %c2_739 = arith.constant 2 : index
    %c0_740 = arith.constant 0 : index
    %c0_741 = arith.constant 0 : index
    %859 = vector.load %arg7[%c0_737, %c1_738, %c2_739, %c0_740, %c0_741] : memref<1x5x3x2x128xf32, #tpu.memory_space<vmem>>, vector<1x1x1x2x128xf32>
    %860 = vector.shape_cast %859 : vector<1x1x1x2x128xf32> to vector<2x128xf32>
    %861 = arith.mulf %843, %860 : vector<2x128xf32>
    %c0_742 = arith.constant 0 : index
    %c1_743 = arith.constant 1 : index
    %c2_744 = arith.constant 2 : index
    %c0_745 = arith.constant 0 : index
    %c0_746 = arith.constant 0 : index
    %862 = vector.load %arg9[%c0_742, %c1_743, %c2_744, %c0_745, %c0_746] : memref<1x5x3x2x128xf32, #tpu.memory_space<vmem>>, vector<1x1x1x2x128xf32>
    %863 = vector.shape_cast %862 : vector<1x1x1x2x128xf32> to vector<2x128xf32>
    %864 = vector.shape_cast %861 : vector<2x128xf32> to vector<1x1x1x2x128xf32>
    tpu.vector_store %arg9[%c0_742, %c1_743, %c2_744, %c0_745, %c0_746], %864 {strides = array<i32>} : memref<1x5x3x2x128xf32, #tpu.memory_space<vmem>>, vector<1x1x1x2x128xf32>,
    %865 = arith.mulf %811, %820 : vector<2x128xf32>
    %c0_747 = arith.constant 0 : index
    %c2_748 = arith.constant 2 : index
    %c0_749 = arith.constant 0 : index
    %c0_750 = arith.constant 0 : index
    %866 = vector.load %arg11[%c0_747, %c2_748, %c0_749, %c0_750] : memref<1x5x2x128xf32, #tpu.memory_space<vmem>>, vector<1x1x2x128xf32>
    %867 = vector.shape_cast %866 : vector<1x1x2x128xf32> to vector<2x128xf32>
    %868 = vector.shape_cast %865 : vector<2x128xf32> to vector<1x1x2x128xf32>
    tpu.vector_store %arg11[%c0_747, %c2_748, %c0_749, %c0_750], %868 {strides = array<i32>} : memref<1x5x2x128xf32, #tpu.memory_space<vmem>>, vector<1x1x2x128xf32>,
    %c0_751 = arith.constant 0 : index
    %c2_752 = arith.constant 2 : index
    %c0_753 = arith.constant 0 : index
    %c0_754 = arith.constant 0 : index
    %c0_755 = arith.constant 0 : index
    %869 = vector.load %arg7[%c0_751, %c2_752, %c0_753, %c0_754, %c0_755] : memref<1x5x3x2x128xf32, #tpu.memory_space<vmem>>, vector<1x1x1x2x128xf32>
    %870 = vector.shape_cast %869 : vector<1x1x1x2x128xf32> to vector<2x128xf32>
    %871 = arith.mulf %865, %870 : vector<2x128xf32>
    %c0_756 = arith.constant 0 : index
    %c2_757 = arith.constant 2 : index
    %c0_758 = arith.constant 0 : index
    %c0_759 = arith.constant 0 : index
    %c0_760 = arith.constant 0 : index
    %872 = vector.load %arg9[%c0_756, %c2_757, %c0_758, %c0_759, %c0_760] : memref<1x5x3x2x128xf32, #tpu.memory_space<vmem>>, vector<1x1x1x2x128xf32>
    %873 = vector.shape_cast %872 : vector<1x1x1x2x128xf32> to vector<2x128xf32>
    %874 = vector.shape_cast %871 : vector<2x128xf32> to vector<1x1x1x2x128xf32>
    tpu.vector_store %arg9[%c0_756, %c2_757, %c0_758, %c0_759, %c0_760], %874 {strides = array<i32>} : memref<1x5x3x2x128xf32, #tpu.memory_space<vmem>>, vector<1x1x1x2x128xf32>,
    %c0_761 = arith.constant 0 : index
    %c2_762 = arith.constant 2 : index
    %c1_763 = arith.constant 1 : index
    %c0_764 = arith.constant 0 : index
    %c0_765 = arith.constant 0 : index
    %875 = vector.load %arg7[%c0_761, %c2_762, %c1_763, %c0_764, %c0_765] : memref<1x5x3x2x128xf32, #tpu.memory_space<vmem>>, vector<1x1x1x2x128xf32>
    %876 = vector.shape_cast %875 : vector<1x1x1x2x128xf32> to vector<2x128xf32>
    %877 = arith.mulf %865, %876 : vector<2x128xf32>
    %c0_766 = arith.constant 0 : index
    %c2_767 = arith.constant 2 : index
    %c1_768 = arith.constant 1 : index
    %c0_769 = arith.constant 0 : index
    %c0_770 = arith.constant 0 : index
    %878 = vector.load %arg9[%c0_766, %c2_767, %c1_768, %c0_769, %c0_770] : memref<1x5x3x2x128xf32, #tpu.memory_space<vmem>>, vector<1x1x1x2x128xf32>
    %879 = vector.shape_cast %878 : vector<1x1x1x2x128xf32> to vector<2x128xf32>
    %880 = vector.shape_cast %877 : vector<2x128xf32> to vector<1x1x1x2x128xf32>
    tpu.vector_store %arg9[%c0_766, %c2_767, %c1_768, %c0_769, %c0_770], %880 {strides = array<i32>} : memref<1x5x3x2x128xf32, #tpu.memory_space<vmem>>, vector<1x1x1x2x128xf32>,
    %c0_771 = arith.constant 0 : index
    %c2_772 = arith.constant 2 : index
    %c2_773 = arith.constant 2 : index
    %c0_774 = arith.constant 0 : index
    %c0_775 = arith.constant 0 : index
    %881 = vector.load %arg7[%c0_771, %c2_772, %c2_773, %c0_774, %c0_775] : memref<1x5x3x2x128xf32, #tpu.memory_space<vmem>>, vector<1x1x1x2x128xf32>
    %882 = vector.shape_cast %881 : vector<1x1x1x2x128xf32> to vector<2x128xf32>
    %883 = arith.mulf %865, %882 : vector<2x128xf32>
    %c0_776 = arith.constant 0 : index
    %c2_777 = arith.constant 2 : index
    %c2_778 = arith.constant 2 : index
    %c0_779 = arith.constant 0 : index
    %c0_780 = arith.constant 0 : index
    %884 = vector.load %arg9[%c0_776, %c2_777, %c2_778, %c0_779, %c0_780] : memref<1x5x3x2x128xf32, #tpu.memory_space<vmem>>, vector<1x1x1x2x128xf32>
    %885 = vector.shape_cast %884 : vector<1x1x1x2x128xf32> to vector<2x128xf32>
    %886 = vector.shape_cast %883 : vector<2x128xf32> to vector<1x1x1x2x128xf32>
    tpu.vector_store %arg9[%c0_776, %c2_777, %c2_778, %c0_779, %c0_780], %886 {strides = array<i32>} : memref<1x5x3x2x128xf32, #tpu.memory_space<vmem>>, vector<1x1x1x2x128xf32>,
    %887 = arith.mulf %813, %820 : vector<2x128xf32>
    %c0_781 = arith.constant 0 : index
    %c3_782 = arith.constant 3 : index
    %c0_783 = arith.constant 0 : index
    %c0_784 = arith.constant 0 : index
    %888 = vector.load %arg11[%c0_781, %c3_782, %c0_783, %c0_784] : memref<1x5x2x128xf32, #tpu.memory_space<vmem>>, vector<1x1x2x128xf32>
    %889 = vector.shape_cast %888 : vector<1x1x2x128xf32> to vector<2x128xf32>
    %890 = vector.shape_cast %887 : vector<2x128xf32> to vector<1x1x2x128xf32>
    tpu.vector_store %arg11[%c0_781, %c3_782, %c0_783, %c0_784], %890 {strides = array<i32>} : memref<1x5x2x128xf32, #tpu.memory_space<vmem>>, vector<1x1x2x128xf32>,
    %c0_785 = arith.constant 0 : index
    %c3_786 = arith.constant 3 : index
    %c0_787 = arith.constant 0 : index
    %c0_788 = arith.constant 0 : index
    %c0_789 = arith.constant 0 : index
    %891 = vector.load %arg7[%c0_785, %c3_786, %c0_787, %c0_788, %c0_789] : memref<1x5x3x2x128xf32, #tpu.memory_space<vmem>>, vector<1x1x1x2x128xf32>
    %892 = vector.shape_cast %891 : vector<1x1x1x2x128xf32> to vector<2x128xf32>
    %893 = arith.mulf %887, %892 : vector<2x128xf32>
    %c0_790 = arith.constant 0 : index
    %c3_791 = arith.constant 3 : index
    %c0_792 = arith.constant 0 : index
    %c0_793 = arith.constant 0 : index
    %c0_794 = arith.constant 0 : index
    %894 = vector.load %arg9[%c0_790, %c3_791, %c0_792, %c0_793, %c0_794] : memref<1x5x3x2x128xf32, #tpu.memory_space<vmem>>, vector<1x1x1x2x128xf32>
    %895 = vector.shape_cast %894 : vector<1x1x1x2x128xf32> to vector<2x128xf32>
    %896 = vector.shape_cast %893 : vector<2x128xf32> to vector<1x1x1x2x128xf32>
    tpu.vector_store %arg9[%c0_790, %c3_791, %c0_792, %c0_793, %c0_794], %896 {strides = array<i32>} : memref<1x5x3x2x128xf32, #tpu.memory_space<vmem>>, vector<1x1x1x2x128xf32>,
    %c0_795 = arith.constant 0 : index
    %c3_796 = arith.constant 3 : index
    %c1_797 = arith.constant 1 : index
    %c0_798 = arith.constant 0 : index
    %c0_799 = arith.constant 0 : index
    %897 = vector.load %arg7[%c0_795, %c3_796, %c1_797, %c0_798, %c0_799] : memref<1x5x3x2x128xf32, #tpu.memory_space<vmem>>, vector<1x1x1x2x128xf32>
    %898 = vector.shape_cast %897 : vector<1x1x1x2x128xf32> to vector<2x128xf32>
    %899 = arith.mulf %887, %898 : vector<2x128xf32>
    %c0_800 = arith.constant 0 : index
    %c3_801 = arith.constant 3 : index
    %c1_802 = arith.constant 1 : index
    %c0_803 = arith.constant 0 : index
    %c0_804 = arith.constant 0 : index
    %900 = vector.load %arg9[%c0_800, %c3_801, %c1_802, %c0_803, %c0_804] : memref<1x5x3x2x128xf32, #tpu.memory_space<vmem>>, vector<1x1x1x2x128xf32>
    %901 = vector.shape_cast %900 : vector<1x1x1x2x128xf32> to vector<2x128xf32>
    %902 = vector.shape_cast %899 : vector<2x128xf32> to vector<1x1x1x2x128xf32>
    tpu.vector_store %arg9[%c0_800, %c3_801, %c1_802, %c0_803, %c0_804], %902 {strides = array<i32>} : memref<1x5x3x2x128xf32, #tpu.memory_space<vmem>>, vector<1x1x1x2x128xf32>,
    %c0_805 = arith.constant 0 : index
    %c3_806 = arith.constant 3 : index
    %c2_807 = arith.constant 2 : index
    %c0_808 = arith.constant 0 : index
    %c0_809 = arith.constant 0 : index
    %903 = vector.load %arg7[%c0_805, %c3_806, %c2_807, %c0_808, %c0_809] : memref<1x5x3x2x128xf32, #tpu.memory_space<vmem>>, vector<1x1x1x2x128xf32>
    %904 = vector.shape_cast %903 : vector<1x1x1x2x128xf32> to vector<2x128xf32>
    %905 = arith.mulf %887, %904 : vector<2x128xf32>
    %c0_810 = arith.constant 0 : index
    %c3_811 = arith.constant 3 : index
    %c2_812 = arith.constant 2 : index
    %c0_813 = arith.constant 0 : index
    %c0_814 = arith.constant 0 : index
    %906 = vector.load %arg9[%c0_810, %c3_811, %c2_812, %c0_813, %c0_814] : memref<1x5x3x2x128xf32, #tpu.memory_space<vmem>>, vector<1x1x1x2x128xf32>
    %907 = vector.shape_cast %906 : vector<1x1x1x2x128xf32> to vector<2x128xf32>
    %908 = vector.shape_cast %905 : vector<2x128xf32> to vector<1x1x1x2x128xf32>
    tpu.vector_store %arg9[%c0_810, %c3_811, %c2_812, %c0_813, %c0_814], %908 {strides = array<i32>} : memref<1x5x3x2x128xf32, #tpu.memory_space<vmem>>, vector<1x1x1x2x128xf32>,
    %909 = arith.mulf %815, %820 : vector<2x128xf32>
    %c0_815 = arith.constant 0 : index
    %c4_816 = arith.constant 4 : index
    %c0_817 = arith.constant 0 : index
    %c0_818 = arith.constant 0 : index
    %910 = vector.load %arg11[%c0_815, %c4_816, %c0_817, %c0_818] : memref<1x5x2x128xf32, #tpu.memory_space<vmem>>, vector<1x1x2x128xf32>
    %911 = vector.shape_cast %910 : vector<1x1x2x128xf32> to vector<2x128xf32>
    %912 = vector.shape_cast %909 : vector<2x128xf32> to vector<1x1x2x128xf32>
    tpu.vector_store %arg11[%c0_815, %c4_816, %c0_817, %c0_818], %912 {strides = array<i32>} : memref<1x5x2x128xf32, #tpu.memory_space<vmem>>, vector<1x1x2x128xf32>,
    %c0_819 = arith.constant 0 : index
    %c4_820 = arith.constant 4 : index
    %c0_821 = arith.constant 0 : index
    %c0_822 = arith.constant 0 : index
    %c0_823 = arith.constant 0 : index
    %913 = vector.load %arg7[%c0_819, %c4_820, %c0_821, %c0_822, %c0_823] : memref<1x5x3x2x128xf32, #tpu.memory_space<vmem>>, vector<1x1x1x2x128xf32>
    %914 = vector.shape_cast %913 : vector<1x1x1x2x128xf32> to vector<2x128xf32>
    %915 = arith.mulf %909, %914 : vector<2x128xf32>
    %c0_824 = arith.constant 0 : index
    %c4_825 = arith.constant 4 : index
    %c0_826 = arith.constant 0 : index
    %c0_827 = arith.constant 0 : index
    %c0_828 = arith.constant 0 : index
    %916 = vector.load %arg9[%c0_824, %c4_825, %c0_826, %c0_827, %c0_828] : memref<1x5x3x2x128xf32, #tpu.memory_space<vmem>>, vector<1x1x1x2x128xf32>
    %917 = vector.shape_cast %916 : vector<1x1x1x2x128xf32> to vector<2x128xf32>
    %918 = vector.shape_cast %915 : vector<2x128xf32> to vector<1x1x1x2x128xf32>
    tpu.vector_store %arg9[%c0_824, %c4_825, %c0_826, %c0_827, %c0_828], %918 {strides = array<i32>} : memref<1x5x3x2x128xf32, #tpu.memory_space<vmem>>, vector<1x1x1x2x128xf32>,
    %c0_829 = arith.constant 0 : index
    %c4_830 = arith.constant 4 : index
    %c1_831 = arith.constant 1 : index
    %c0_832 = arith.constant 0 : index
    %c0_833 = arith.constant 0 : index
    %919 = vector.load %arg7[%c0_829, %c4_830, %c1_831, %c0_832, %c0_833] : memref<1x5x3x2x128xf32, #tpu.memory_space<vmem>>, vector<1x1x1x2x128xf32>
    %920 = vector.shape_cast %919 : vector<1x1x1x2x128xf32> to vector<2x128xf32>
    %921 = arith.mulf %909, %920 : vector<2x128xf32>
    %c0_834 = arith.constant 0 : index
    %c4_835 = arith.constant 4 : index
    %c1_836 = arith.constant 1 : index
    %c0_837 = arith.constant 0 : index
    %c0_838 = arith.constant 0 : index
    %922 = vector.load %arg9[%c0_834, %c4_835, %c1_836, %c0_837, %c0_838] : memref<1x5x3x2x128xf32, #tpu.memory_space<vmem>>, vector<1x1x1x2x128xf32>
    %923 = vector.shape_cast %922 : vector<1x1x1x2x128xf32> to vector<2x128xf32>
    %924 = vector.shape_cast %921 : vector<2x128xf32> to vector<1x1x1x2x128xf32>
    tpu.vector_store %arg9[%c0_834, %c4_835, %c1_836, %c0_837, %c0_838], %924 {strides = array<i32>} : memref<1x5x3x2x128xf32, #tpu.memory_space<vmem>>, vector<1x1x1x2x128xf32>,
    %c0_839 = arith.constant 0 : index
    %c4_840 = arith.constant 4 : index
    %c2_841 = arith.constant 2 : index
    %c0_842 = arith.constant 0 : index
    %c0_843 = arith.constant 0 : index
    %925 = vector.load %arg7[%c0_839, %c4_840, %c2_841, %c0_842, %c0_843] : memref<1x5x3x2x128xf32, #tpu.memory_space<vmem>>, vector<1x1x1x2x128xf32>
    %926 = vector.shape_cast %925 : vector<1x1x1x2x128xf32> to vector<2x128xf32>
    %927 = arith.mulf %909, %926 : vector<2x128xf32>
    %c0_844 = arith.constant 0 : index
    %c4_845 = arith.constant 4 : index
    %c2_846 = arith.constant 2 : index
    %c0_847 = arith.constant 0 : index
    %c0_848 = arith.constant 0 : index
    %928 = vector.load %arg9[%c0_844, %c4_845, %c2_846, %c0_847, %c0_848] : memref<1x5x3x2x128xf32, #tpu.memory_space<vmem>>, vector<1x1x1x2x128xf32>
    %929 = vector.shape_cast %928 : vector<1x1x1x2x128xf32> to vector<2x128xf32>
    %930 = vector.shape_cast %927 : vector<2x128xf32> to vector<1x1x1x2x128xf32>
    tpu.vector_store %arg9[%c0_844, %c4_845, %c2_846, %c0_847, %c0_848], %930 {strides = array<i32>} : memref<1x5x3x2x128xf32, #tpu.memory_space<vmem>>, vector<1x1x1x2x128xf32>,
    %c0_849 = arith.constant 0 : index
    %c0_850 = arith.constant 0 : index
    %c0_851 = arith.constant 0 : index
    %c0_852 = arith.constant 0 : index
    %c0_853 = arith.constant 0 : index
    %931 = vector.load %arg9[%c0_849, %c0_850, %c0_851, %c0_852, %c0_853] : memref<1x5x3x2x128xf32, #tpu.memory_space<vmem>>, vector<1x1x1x2x128xf32>
    %932 = vector.shape_cast %931 : vector<1x1x1x2x128xf32> to vector<2x128xf32>
    %c0_854 = arith.constant 0 : index
    %c1_855 = arith.constant 1 : index
    %c0_856 = arith.constant 0 : index
    %c0_857 = arith.constant 0 : index
    %c0_858 = arith.constant 0 : index
    %933 = vector.load %arg9[%c0_854, %c1_855, %c0_856, %c0_857, %c0_858] : memref<1x5x3x2x128xf32, #tpu.memory_space<vmem>>, vector<1x1x1x2x128xf32>
    %934 = vector.shape_cast %933 : vector<1x1x1x2x128xf32> to vector<2x128xf32>
    %935 = arith.addf %932, %934 : vector<2x128xf32>
    %c0_859 = arith.constant 0 : index
    %c2_860 = arith.constant 2 : index
    %c0_861 = arith.constant 0 : index
    %c0_862 = arith.constant 0 : index
    %c0_863 = arith.constant 0 : index
    %936 = vector.load %arg9[%c0_859, %c2_860, %c0_861, %c0_862, %c0_863] : memref<1x5x3x2x128xf32, #tpu.memory_space<vmem>>, vector<1x1x1x2x128xf32>
    %937 = vector.shape_cast %936 : vector<1x1x1x2x128xf32> to vector<2x128xf32>
    %938 = arith.addf %935, %937 : vector<2x128xf32>
    %c0_864 = arith.constant 0 : index
    %c3_865 = arith.constant 3 : index
    %c0_866 = arith.constant 0 : index
    %c0_867 = arith.constant 0 : index
    %c0_868 = arith.constant 0 : index
    %939 = vector.load %arg9[%c0_864, %c3_865, %c0_866, %c0_867, %c0_868] : memref<1x5x3x2x128xf32, #tpu.memory_space<vmem>>, vector<1x1x1x2x128xf32>
    %940 = vector.shape_cast %939 : vector<1x1x1x2x128xf32> to vector<2x128xf32>
    %941 = arith.addf %938, %940 : vector<2x128xf32>
    %c0_869 = arith.constant 0 : index
    %c4_870 = arith.constant 4 : index
    %c0_871 = arith.constant 0 : index
    %c0_872 = arith.constant 0 : index
    %c0_873 = arith.constant 0 : index
    %942 = vector.load %arg9[%c0_869, %c4_870, %c0_871, %c0_872, %c0_873] : memref<1x5x3x2x128xf32, #tpu.memory_space<vmem>>, vector<1x1x1x2x128xf32>
    %943 = vector.shape_cast %942 : vector<1x1x1x2x128xf32> to vector<2x128xf32>
    %944 = arith.addf %941, %943 : vector<2x128xf32>
    %cst_874 = arith.constant 2.000000e-01 : f32
    %945 = vector.broadcast %cst_874 : f32 to vector<2x128xf32>
    %946 = arith.mulf %944, %945 : vector<2x128xf32>
    %c0_875 = arith.constant 0 : index
    %c0_876 = arith.constant 0 : index
    %c0_877 = arith.constant 0 : index
    %c0_878 = arith.constant 0 : index
    %947 = vector.load %arg10[%c0_875, %c0_876, %c0_877, %c0_878] : memref<1x3x2x128xf32, #tpu.memory_space<vmem>>, vector<1x1x2x128xf32>
    %948 = vector.shape_cast %947 : vector<1x1x2x128xf32> to vector<2x128xf32>
    %949 = vector.shape_cast %946 : vector<2x128xf32> to vector<1x1x2x128xf32>
    tpu.vector_store %arg10[%c0_875, %c0_876, %c0_877, %c0_878], %949 {strides = array<i32>} : memref<1x3x2x128xf32, #tpu.memory_space<vmem>>, vector<1x1x2x128xf32>,
    %c0_879 = arith.constant 0 : index
    %c0_880 = arith.constant 0 : index
    %c1_881 = arith.constant 1 : index
    %c0_882 = arith.constant 0 : index
    %c0_883 = arith.constant 0 : index
    %950 = vector.load %arg9[%c0_879, %c0_880, %c1_881, %c0_882, %c0_883] : memref<1x5x3x2x128xf32, #tpu.memory_space<vmem>>, vector<1x1x1x2x128xf32>
    %951 = vector.shape_cast %950 : vector<1x1x1x2x128xf32> to vector<2x128xf32>
    %c0_884 = arith.constant 0 : index
    %c1_885 = arith.constant 1 : index
    %c1_886 = arith.constant 1 : index
    %c0_887 = arith.constant 0 : index
    %c0_888 = arith.constant 0 : index
    %952 = vector.load %arg9[%c0_884, %c1_885, %c1_886, %c0_887, %c0_888] : memref<1x5x3x2x128xf32, #tpu.memory_space<vmem>>, vector<1x1x1x2x128xf32>
    %953 = vector.shape_cast %952 : vector<1x1x1x2x128xf32> to vector<2x128xf32>
    %954 = arith.addf %951, %953 : vector<2x128xf32>
    %c0_889 = arith.constant 0 : index
    %c2_890 = arith.constant 2 : index
    %c1_891 = arith.constant 1 : index
    %c0_892 = arith.constant 0 : index
    %c0_893 = arith.constant 0 : index
    %955 = vector.load %arg9[%c0_889, %c2_890, %c1_891, %c0_892, %c0_893] : memref<1x5x3x2x128xf32, #tpu.memory_space<vmem>>, vector<1x1x1x2x128xf32>
    %956 = vector.shape_cast %955 : vector<1x1x1x2x128xf32> to vector<2x128xf32>
    %957 = arith.addf %954, %956 : vector<2x128xf32>
    %c0_894 = arith.constant 0 : index
    %c3_895 = arith.constant 3 : index
    %c1_896 = arith.constant 1 : index
    %c0_897 = arith.constant 0 : index
    %c0_898 = arith.constant 0 : index
    %958 = vector.load %arg9[%c0_894, %c3_895, %c1_896, %c0_897, %c0_898] : memref<1x5x3x2x128xf32, #tpu.memory_space<vmem>>, vector<1x1x1x2x128xf32>
    %959 = vector.shape_cast %958 : vector<1x1x1x2x128xf32> to vector<2x128xf32>
    %960 = arith.addf %957, %959 : vector<2x128xf32>
    %c0_899 = arith.constant 0 : index
    %c4_900 = arith.constant 4 : index
    %c1_901 = arith.constant 1 : index
    %c0_902 = arith.constant 0 : index
    %c0_903 = arith.constant 0 : index
    %961 = vector.load %arg9[%c0_899, %c4_900, %c1_901, %c0_902, %c0_903] : memref<1x5x3x2x128xf32, #tpu.memory_space<vmem>>, vector<1x1x1x2x128xf32>
    %962 = vector.shape_cast %961 : vector<1x1x1x2x128xf32> to vector<2x128xf32>
    %963 = arith.addf %960, %962 : vector<2x128xf32>
    %cst_904 = arith.constant 2.000000e-01 : f32
    %964 = vector.broadcast %cst_904 : f32 to vector<2x128xf32>
    %965 = arith.mulf %963, %964 : vector<2x128xf32>
    %c0_905 = arith.constant 0 : index
    %c1_906 = arith.constant 1 : index
    %c0_907 = arith.constant 0 : index
    %c0_908 = arith.constant 0 : index
    %966 = vector.load %arg10[%c0_905, %c1_906, %c0_907, %c0_908] : memref<1x3x2x128xf32, #tpu.memory_space<vmem>>, vector<1x1x2x128xf32>
    %967 = vector.shape_cast %966 : vector<1x1x2x128xf32> to vector<2x128xf32>
    %968 = vector.shape_cast %965 : vector<2x128xf32> to vector<1x1x2x128xf32>
    tpu.vector_store %arg10[%c0_905, %c1_906, %c0_907, %c0_908], %968 {strides = array<i32>} : memref<1x3x2x128xf32, #tpu.memory_space<vmem>>, vector<1x1x2x128xf32>,
    %c0_909 = arith.constant 0 : index
    %c0_910 = arith.constant 0 : index
    %c2_911 = arith.constant 2 : index
    %c0_912 = arith.constant 0 : index
    %c0_913 = arith.constant 0 : index
    %969 = vector.load %arg9[%c0_909, %c0_910, %c2_911, %c0_912, %c0_913] : memref<1x5x3x2x128xf32, #tpu.memory_space<vmem>>, vector<1x1x1x2x128xf32>
    %970 = vector.shape_cast %969 : vector<1x1x1x2x128xf32> to vector<2x128xf32>
    %c0_914 = arith.constant 0 : index
    %c1_915 = arith.constant 1 : index
    %c2_916 = arith.constant 2 : index
    %c0_917 = arith.constant 0 : index
    %c0_918 = arith.constant 0 : index
    %971 = vector.load %arg9[%c0_914, %c1_915, %c2_916, %c0_917, %c0_918] : memref<1x5x3x2x128xf32, #tpu.memory_space<vmem>>, vector<1x1x1x2x128xf32>
    %972 = vector.shape_cast %971 : vector<1x1x1x2x128xf32> to vector<2x128xf32>
    %973 = arith.addf %970, %972 : vector<2x128xf32>
    %c0_919 = arith.constant 0 : index
    %c2_920 = arith.constant 2 : index
    %c2_921 = arith.constant 2 : index
    %c0_922 = arith.constant 0 : index
    %c0_923 = arith.constant 0 : index
    %974 = vector.load %arg9[%c0_919, %c2_920, %c2_921, %c0_922, %c0_923] : memref<1x5x3x2x128xf32, #tpu.memory_space<vmem>>, vector<1x1x1x2x128xf32>
    %975 = vector.shape_cast %974 : vector<1x1x1x2x128xf32> to vector<2x128xf32>
    %976 = arith.addf %973, %975 : vector<2x128xf32>
    %c0_924 = arith.constant 0 : index
    %c3_925 = arith.constant 3 : index
    %c2_926 = arith.constant 2 : index
    %c0_927 = arith.constant 0 : index
    %c0_928 = arith.constant 0 : index
    %977 = vector.load %arg9[%c0_924, %c3_925, %c2_926, %c0_927, %c0_928] : memref<1x5x3x2x128xf32, #tpu.memory_space<vmem>>, vector<1x1x1x2x128xf32>
    %978 = vector.shape_cast %977 : vector<1x1x1x2x128xf32> to vector<2x128xf32>
    %979 = arith.addf %976, %978 : vector<2x128xf32>
    %c0_929 = arith.constant 0 : index
    %c4_930 = arith.constant 4 : index
    %c2_931 = arith.constant 2 : index
    %c0_932 = arith.constant 0 : index
    %c0_933 = arith.constant 0 : index
    %980 = vector.load %arg9[%c0_929, %c4_930, %c2_931, %c0_932, %c0_933] : memref<1x5x3x2x128xf32, #tpu.memory_space<vmem>>, vector<1x1x1x2x128xf32>
    %981 = vector.shape_cast %980 : vector<1x1x1x2x128xf32> to vector<2x128xf32>
    %982 = arith.addf %979, %981 : vector<2x128xf32>
    %cst_934 = arith.constant 2.000000e-01 : f32
    %983 = vector.broadcast %cst_934 : f32 to vector<2x128xf32>
    %984 = arith.mulf %982, %983 : vector<2x128xf32>
    %c0_935 = arith.constant 0 : index
    %c2_936 = arith.constant 2 : index
    %c0_937 = arith.constant 0 : index
    %c0_938 = arith.constant 0 : index
    %985 = vector.load %arg10[%c0_935, %c2_936, %c0_937, %c0_938] : memref<1x3x2x128xf32, #tpu.memory_space<vmem>>, vector<1x1x2x128xf32>
    %986 = vector.shape_cast %985 : vector<1x1x2x128xf32> to vector<2x128xf32>
    %987 = vector.shape_cast %984 : vector<2x128xf32> to vector<1x1x2x128xf32>
    tpu.vector_store %arg10[%c0_935, %c2_936, %c0_937, %c0_938], %987 {strides = array<i32>} : memref<1x3x2x128xf32, #tpu.memory_space<vmem>>, vector<1x1x2x128xf32>,
    return
  }
  func.func @transform_0(%arg0: i32, %arg1: i32) -> (i32, i32, i32, i32, i32) {
    %c0_i32 = arith.constant 0 : i32
    %c0_i32_0 = arith.constant 0 : i32
    %c0_i32_1 = arith.constant 0 : i32
    %c0_i32_2 = arith.constant 0 : i32
    return %c0_i32, %arg0, %c0_i32_0, %arg1, %c0_i32_1 : i32, i32, i32, i32, i32
  }
  func.func @transform_1(%arg0: i32, %arg1: i32) -> i32 {
    %c0_i32 = arith.constant 0 : i32
    %c0_i32_0 = arith.constant 0 : i32
    return %c0_i32 : i32
  }
  func.func @transform_2(%arg0: i32, %arg1: i32) -> i32 {
    %c0_i32 = arith.constant 0 : i32
    %c0_i32_0 = arith.constant 0 : i32
    return %c0_i32 : i32
  }
  func.func @transform_3(%arg0: i32, %arg1: i32) -> i32 {
    %c0_i32 = arith.constant 0 : i32
    %c0_i32_0 = arith.constant 0 : i32
    return %c0_i32 : i32
  }
  func.func @transform_4(%arg0: i32, %arg1: i32) -> i32 {
    %c0_i32 = arith.constant 0 : i32
    %c0_i32_0 = arith.constant 0 : i32
    return %c0_i32 : i32
  }
  func.func @transform_5(%arg0: i32, %arg1: i32) -> (i32, i32, i32, i32, i32) {
    %c0_i32 = arith.constant 0 : i32
    %c0_i32_0 = arith.constant 0 : i32
    %c0_i32_1 = arith.constant 0 : i32
    %c0_i32_2 = arith.constant 0 : i32
    return %arg0, %c0_i32, %c0_i32_0, %arg1, %c0_i32_1 : i32, i32, i32, i32, i32
  }
  func.func @transform_6(%arg0: i32, %arg1: i32) -> (i32, i32, i32, i32) {
    %c0_i32 = arith.constant 0 : i32
    %c0_i32_0 = arith.constant 0 : i32
    %c0_i32_1 = arith.constant 0 : i32
    return %arg0, %c0_i32, %arg1, %c0_i32_0 : i32, i32, i32, i32
  }
  func.func @transform_7(%arg0: i32, %arg1: i32) -> (i32, i32, i32, i32, i32) {
    %c0_i32 = arith.constant 0 : i32
    %c0_i32_0 = arith.constant 0 : i32
    %c0_i32_1 = arith.constant 0 : i32
    %c0_i32_2 = arith.constant 0 : i32
    return %arg0, %c0_i32, %c0_i32_0, %arg1, %c0_i32_1 : i32, i32, i32, i32, i32
  }
  func.func @transform_8(%arg0: i32, %arg1: i32) -> (i32, i32, i32, i32) {
    %c0_i32 = arith.constant 0 : i32
    %c0_i32_0 = arith.constant 0 : i32
    %c0_i32_1 = arith.constant 0 : i32
    return %arg0, %c0_i32, %arg1, %c0_i32_0 : i32, i32, i32, i32
  }
  func.func @transform_9(%arg0: i32, %arg1: i32) -> (i32, i32, i32, i32) {
    %c0_i32 = arith.constant 0 : i32
    %c0_i32_0 = arith.constant 0 : i32
    %c0_i32_1 = arith.constant 0 : i32
    return %arg0, %c0_i32, %arg1, %c0_i32_0 : i32, i32, i32, i32
  }
}

</mosaic_0001>

<llo_original>
// kernel: burst_align_stn_forward.1
$region0: #{burst_align_stn_forward.1}
  #allocation0 [shape = 'u32[]', space=smem, size = 0x4, offset = 0x4, fixed_abs, tag = 'smem constant byte address 0x4 - core index']
  #allocation1 [shape = 'u32[144,128]{1,0:T(1,128)}', space=vmem, size = 0x12000, scoped, tag = 'internal scratch']
  %s0 = inlined_call_operand.vmem [shape: f32[5,2,3,2,128], index: 0, kind: input, shape index: {}]
  %s1 = inlined_call_operand.vmem [shape: f32[9], index: 1, kind: input, shape index: {}]
  %s2 = inlined_call_operand.vmem [shape: f32[3], index: 2, kind: input, shape index: {}]
  %s3 = inlined_call_operand.vmem [shape: f32[75], index: 3, kind: input, shape index: {}]
  %s4 = inlined_call_operand.vmem [shape: f32[5], index: 4, kind: input, shape index: {}]
  %s5 = inlined_call_operand.vmem [shape: f32[2,5,3,2,128], index: 5, kind: output, shape index: {0}]
  %s6 = inlined_call_operand.vmem [shape: f32[2,3,2,128], index: 6, kind: output, shape index: {1}]
  %s7 = inlined_call_operand.vmem [shape: f32[2,5,3,2,128], index: 7, kind: output, shape index: {2}]
  %s8 = inlined_call_operand.vmem [shape: f32[2,3,2,128], index: 8, kind: output, shape index: {3}]
  %s9 = inlined_call_operand.vmem [shape: f32[2,5,2,128], index: 9, kind: output, shape index: {4}]
  %10 = xla_tuple %s5, %s6, %s7, %s8, %s9
  %s11 = sld [smem:[#allocation0]]
  $region142: #{burst_align_stn_forward.1} parent=0
    _
  %s13 = ssub.s32 1, %s11
  %s14 = scalar_select 0, %s13, %s11
  $region1: #{burst_align_stn_forward.1} parent=0
    #allocation2 [shape = 'u8[30720]{0}', space=vmem, size = 0x7800, scoped, tag = 'input window, operand 0']
    #allocation3 [shape = 'u8[512]{0}', space=smem, size = 0x200, scoped, tag = 'input window, operand 1, single buffered']
    #allocation4 [shape = 's32[2]{0}', space=sflag, size = 0x8, scoped, tag = 'scoped memory for burst_align_stn_forward.1']
    #allocation5 [shape = 'u8[512]{0}', space=smem, size = 0x200, scoped, tag = 'input window, operand 2, single buffered']
    #allocation6 [shape = 's32[1]{0}', space=sflag, size = 0x4, scoped, tag = 'scoped memory for burst_align_stn_forward.1']
    #allocation7 [shape = 'u8[512]{0}', space=smem, size = 0x200, scoped, tag = 'input window, operand 3, single buffered']
    #allocation8 [shape = 'u8[512]{0}', space=smem, size = 0x200, scoped, tag = 'input window, operand 4, single buffered']
    #allocation9 [shape = 's32[1]{0}', space=sflag, size = 0x4, scoped, tag = 'scoped memory for burst_align_stn_forward.1']
    %15 = vsyncpa [#allocation4], 0
    %16 = vsyncpa [#allocation6], 0
    %17 = vsyncpa [#allocation9], 0
    loop: start=0, step=1, limit=4
    $region2: #{burst_align_stn_forward.1} parent=1 // loop_pre_header
      _
    $region3: #{burst_align_stn_forward.1} parent=1 // loop_header
      %s19 = sphi 0, %s23
      %p20 = scmp.ge.s32.totalorder %s19, 4
      %s26 = sphi 0, %s38
      %s27 = sphi 0, %s34
      %s28 = sphi 0, %s26
      %s29 = sphi 0, %s27
      %s30 = sphi 0, %s28
      %s31 = sphi 0, %s29
      %s43 = sphi 0, %s45
      %s46 = sphi 0, %s43
      %s47 = sphi 0, %s46
      %s63 = sphi 0, %s47
      %s67 = sphi 0, %s67
      %s69 = sphi 0, %s67
      %s70 = sphi 0, %s69
      %s84 = sphi 0, %s70
      %s88 = sphi 0, %s88
      %s90 = sphi 0, %s88
      %s91 = sphi 0, %s90
      %s105 = sphi 0, %s91
      %s109 = sphi 0, %s109
      %s111 = sphi 0, %s109
      %s112 = sphi 0, %s111
      %s126 = sphi 0, %s112
      %s130 = sphi 0, %s130
      %s132 = sphi 0, %s130
      %s133 = sphi 0, %s132
      %s147 = sphi 0, %s133
      %s155 = sphi 0, %s157
      %s158 = sphi 0, %s155
      %s159 = sphi 0, %s158
      %s175 = sphi 0, %s159
      %s183 = sphi 0, %s185
      %s186 = sphi 0, %s183
      %s187 = sphi 0, %s186
      %s203 = sphi 0, %s187
      %s211 = sphi 0, %s213
      %s214 = sphi 0, %s211
      %s215 = sphi 0, %s214
      %s231 = sphi 0, %s215
      %s239 = sphi 0, %s241
      %s242 = sphi 0, %s239
      %s243 = sphi 0, %s242
      %s259 = sphi 0, %s243
      %s267 = sphi 0, %s269
      %s270 = sphi 0, %s267
      %s271 = sphi 0, %s270
      %s287 = sphi 0, %s271
    $region4: #{burst_align_stn_forward.1} parent=1 // loop_header_branch
      %22 = sbr.rel (%p20) target = $region8
    $region5: #{burst_align_stn_forward.1} parent=1 // loop_body
      %s24 = ssub.s32 %s19, 1
      %s25 = ssub.s32 %s19, 2
      %s32 = sadd.s32 1, %s27
      %p33 = scmp.ge.s32.totalorder %s32, 1
      %s34 = scalar_select %p33, 0, %s32
      %s35 = sadd.s32 1, %s26
      %s36 = scalar_select %p33, %s35, %s26
      %p37 = scmp.ge.s32.totalorder %s36, 2
      %s38 = scalar_select %p37, 0, %s36
      %s39 = ssub.s32 %s26, %s38
      %s40 = ssub.s32 %s27, %s34
      %s41 = sor.u32 %s39, %s40
      %p42 = scmp.eq.s32.totalorder %s41, 0
      %s44 = sadd.s32 %s43, 1
      %s45 = scalar_select %p42, %s43, %s44
      %p48 = pneg %p42
      %p49 = scmp.eq.s32.totalorder %s19, 1
      %p50 = por %p48, %p49
      %p51 = scmp.ne.s32.totalorder %s43, %s46
      %p52 = scmp.eq.s32.totalorder %s19, 0
      %p53 = por %p51, %p52
      %p54 = scmp.ne.s32.totalorder %s43, %s46
      %p55 = scmp.eq.s32.totalorder %s24, 1
      %p56 = por %p54, %p55
      %p57 = scmp.ne.s32.totalorder %s46, %s47
      %p58 = scmp.eq.s32.totalorder %s24, 0
      %p59 = por %p57, %p58
      %p60 = scmp.ne.s32.totalorder %s46, %s47
      %p61 = scmp.eq.s32.totalorder %s25, 1
      %p62 = por %p60, %p61
      %p64 = scmp.ne.s32.totalorder %s47, %s63
      %p65 = scmp.eq.s32.totalorder %s25, 0
      %p66 = por %p64, %p65
      %s68 = sadd.s32 %s67, 1
      %p71 = scmp.eq.s32.totalorder %s19, 1
      %p72 = scmp.ne.s32.totalorder %s67, %s69
      %p73 = scmp.eq.s32.totalorder %s19, 0
      %p74 = por %p72, %p73
      %p75 = scmp.ne.s32.totalorder %s67, %s69
      %p76 = scmp.eq.s32.totalorder %s24, 1
      %p77 = por %p75, %p76
      %p78 = scmp.ne.s32.totalorder %s69, %s70
      %p79 = scmp.eq.s32.totalorder %s24, 0
      %p80 = por %p78, %p79
      %p81 = scmp.ne.s32.totalorder %s69, %s70
      %p82 = scmp.eq.s32.totalorder %s25, 1
      %p83 = por %p81, %p82
      %p85 = scmp.ne.s32.totalorder %s70, %s84
      %p86 = scmp.eq.s32.totalorder %s25, 0
      %p87 = por %p85, %p86
      %s89 = sadd.s32 %s88, 1
      %p92 = scmp.eq.s32.totalorder %s19, 1
      %p93 = scmp.ne.s32.totalorder %s88, %s90
      %p94 = scmp.eq.s32.totalorder %s19, 0
      %p95 = por %p93, %p94
      %p96 = scmp.ne.s32.totalorder %s88, %s90
      %p97 = scmp.eq.s32.totalorder %s24, 1
      %p98 = por %p96, %p97
      %p99 = scmp.ne.s32.totalorder %s90, %s91
      %p100 = scmp.eq.s32.totalorder %s24, 0
      %p101 = por %p99, %p100
      %p102 = scmp.ne.s32.totalorder %s90, %s91
      %p103 = scmp.eq.s32.totalorder %s25, 1
      %p104 = por %p102, %p103
      %p106 = scmp.ne.s32.totalorder %s91, %s105
      %p107 = scmp.eq.s32.totalorder %s25, 0
      %p108 = por %p106, %p107
      %s110 = sadd.s32 %s109, 1
      %p113 = scmp.eq.s32.totalorder %s19, 1
      %p114 = scmp.ne.s32.totalorder %s109, %s111
      %p115 = scmp.eq.s32.totalorder %s19, 0
      %p116 = por %p114, %p115
      %p117 = scmp.ne.s32.totalorder %s109, %s111
      %p118 = scmp.eq.s32.totalorder %s24, 1
      %p119 = por %p117, %p118
      %p120 = scmp.ne.s32.totalorder %s111, %s112
      %p121 = scmp.eq.s32.totalorder %s24, 0
      %p122 = por %p120, %p121
      %p123 = scmp.ne.s32.totalorder %s111, %s112
      %p124 = scmp.eq.s32.totalorder %s25, 1
      %p125 = por %p123, %p124
      %p127 = scmp.ne.s32.totalorder %s112, %s126
      %p128 = scmp.eq.s32.totalorder %s25, 0
      %p129 = por %p127, %p128
      %s131 = sadd.s32 %s130, 1
      %p134 = scmp.eq.s32.totalorder %s19, 1
      %p135 = scmp.ne.s32.totalorder %s130, %s132
      %p136 = scmp.eq.s32.totalorder %s19, 0
      %p137 = por %p135, %p136
      %p138 = scmp.ne.s32.totalorder %s130, %s132
      %p139 = scmp.eq.s32.totalorder %s24, 1
      %p140 = por %p138, %p139
      %p141 = scmp.ne.s32.totalorder %s132, %s133
      %p142 = scmp.eq.s32.totalorder %s24, 0
      %p143 = por %p141, %p142
      %p144 = scmp.ne.s32.totalorder %s132, %s133
      %p145 = scmp.eq.s32.totalorder %s25, 1
      %p146 = por %p144, %p145
      %p148 = scmp.ne.s32.totalorder %s133, %s147
      %p149 = scmp.eq.s32.totalorder %s25, 0
      %p150 = por %p148, %p149
      %s151 = ssub.s32 %s26, %s38
      %s152 = ssub.s32 %s27, %s34
      %s153 = sor.u32 %s151, %s152
      %p154 = scmp.eq.s32.totalorder %s153, 0
      %s156 = sadd.s32 %s155, 1
      %s157 = scalar_select %p154, %s155, %s156
      %p160 = pneg %p154
      %p161 = scmp.eq.s32.totalorder %s19, 1
      %p162 = por %p160, %p161
      %p163 = scmp.ne.s32.totalorder %s155, %s158
      %p164 = scmp.eq.s32.totalorder %s19, 0
      %p165 = por %p163, %p164
      %p166 = scmp.ne.s32.totalorder %s155, %s158
      %p167 = scmp.eq.s32.totalorder %s24, 1
      %p168 = por %p166, %p167
      %p169 = scmp.ne.s32.totalorder %s158, %s159
      %p170 = scmp.eq.s32.totalorder %s24, 0
      %p171 = por %p169, %p170
      %p172 = scmp.ne.s32.totalorder %s158, %s159
      %p173 = scmp.eq.s32.totalorder %s25, 1
      %p174 = por %p172, %p173
      %p176 = scmp.ne.s32.totalorder %s159, %s175
      %p177 = scmp.eq.s32.totalorder %s25, 0
      %p178 = por %p176, %p177
      %s179 = ssub.s32 %s26, %s38
      %s180 = ssub.s32 %s27, %s34
      %s181 = sor.u32 %s179, %s180
      %p182 = scmp.eq.s32.totalorder %s181, 0
      %s184 = sadd.s32 %s183, 1
      %s185 = scalar_select %p182, %s183, %s184
      %p188 = pneg %p182
      %p189 = scmp.eq.s32.totalorder %s19, 1
      %p190 = por %p188, %p189
      %p191 = scmp.ne.s32.totalorder %s183, %s186
      %p192 = scmp.eq.s32.totalorder %s19, 0
      %p193 = por %p191, %p192
      %p194 = scmp.ne.s32.totalorder %s183, %s186
      %p195 = scmp.eq.s32.totalorder %s24, 1
      %p196 = por %p194, %p195
      %p197 = scmp.ne.s32.totalorder %s186, %s187
      %p198 = scmp.eq.s32.totalorder %s24, 0
      %p199 = por %p197, %p198
      %p200 = scmp.ne.s32.totalorder %s186, %s187
      %p201 = scmp.eq.s32.totalorder %s25, 1
      %p202 = por %p200, %p201
      %p204 = scmp.ne.s32.totalorder %s187, %s203
      %p205 = scmp.eq.s32.totalorder %s25, 0
      %p206 = por %p204, %p205
      %s207 = ssub.s32 %s26, %s38
      %s208 = ssub.s32 %s27, %s34
      %s209 = sor.u32 %s207, %s208
      %p210 = scmp.eq.s32.totalorder %s209, 0
      %s212 = sadd.s32 %s211, 1
      %s213 = scalar_select %p210, %s211, %s212
      %p216 = pneg %p210
      %p217 = scmp.eq.s32.totalorder %s19, 1
      %p218 = por %p216, %p217
      %p219 = scmp.ne.s32.totalorder %s211, %s214
      %p220 = scmp.eq.s32.totalorder %s19, 0
      %p221 = por %p219, %p220
      %p222 = scmp.ne.s32.totalorder %s211, %s214
      %p223 = scmp.eq.s32.totalorder %s24, 1
      %p224 = por %p222, %p223
      %p225 = scmp.ne.s32.totalorder %s214, %s215
      %p226 = scmp.eq.s32.totalorder %s24, 0
      %p227 = por %p225, %p226
      %p228 = scmp.ne.s32.totalorder %s214, %s215
      %p229 = scmp.eq.s32.totalorder %s25, 1
      %p230 = por %p228, %p229
      %p232 = scmp.ne.s32.totalorder %s215, %s231
      %p233 = scmp.eq.s32.totalorder %s25, 0
      %p234 = por %p232, %p233
      %s235 = ssub.s32 %s26, %s38
      %s236 = ssub.s32 %s27, %s34
      %s237 = sor.u32 %s235, %s236
      %p238 = scmp.eq.s32.totalorder %s237, 0
      %s240 = sadd.s32 %s239, 1
      %s241 = scalar_select %p238, %s239, %s240
      %p244 = pneg %p238
      %p245 = scmp.eq.s32.totalorder %s19, 1
      %p246 = por %p244, %p245
      %p247 = scmp.ne.s32.totalorder %s239, %s242
      %p248 = scmp.eq.s32.totalorder %s19, 0
      %p249 = por %p247, %p248
      %p250 = scmp.ne.s32.totalorder %s239, %s242
      %p251 = scmp.eq.s32.totalorder %s24, 1
      %p252 = por %p250, %p251
      %p253 = scmp.ne.s32.totalorder %s242, %s243
      %p254 = scmp.eq.s32.totalorder %s24, 0
      %p255 = por %p253, %p254
      %p256 = scmp.ne.s32.totalorder %s242, %s243
      %p257 = scmp.eq.s32.totalorder %s25, 1
      %p258 = por %p256, %p257
      %p260 = scmp.ne.s32.totalorder %s243, %s259
      %p261 = scmp.eq.s32.totalorder %s25, 0
      %p262 = por %p260, %p261
      %s263 = ssub.s32 %s26, %s38
      %s264 = ssub.s32 %s27, %s34
      %s265 = sor.u32 %s263, %s264
      %p266 = scmp.eq.s32.totalorder %s265, 0
      %s268 = sadd.s32 %s267, 1
      %s269 = scalar_select %p266, %s267, %s268
      %p272 = pneg %p266
      %p273 = scmp.eq.s32.totalorder %s19, 1
      %p274 = por %p272, %p273
      %p275 = scmp.ne.s32.totalorder %s267, %s270
      %p276 = scmp.eq.s32.totalorder %s19, 0
      %p277 = por %p275, %p276
      %p278 = scmp.ne.s32.totalorder %s267, %s270
      %p279 = scmp.eq.s32.totalorder %s24, 1
      %p280 = por %p278, %p279
      %p281 = scmp.ne.s32.totalorder %s270, %s271
      %p282 = scmp.eq.s32.totalorder %s24, 0
      %p283 = por %p281, %p282
      %p284 = scmp.ne.s32.totalorder %s270, %s271
      %p285 = scmp.eq.s32.totalorder %s25, 1
      %p286 = por %p284, %p285
      %p288 = scmp.ne.s32.totalorder %s271, %s287
      %p289 = scmp.eq.s32.totalorder %s25, 0
      %p290 = por %p288, %p289
      %p291 = scmp.le.s32.totalorder 1, %s19
      %p292 = scmp.lt.s32.totalorder %s19, 3
      %p293 = pnand %p291, %p292
      %p294 = pneg %p293
      // Predicated region
      $region9: #{burst_align_stn_forward.1} parent=5 // pred_check
        _
      $region10: #{burst_align_stn_forward.1} parent=5 // pred_check_branch
        %296 = sbr.rel (%p293) target = $region12
      $region11: #{burst_align_stn_forward.1} parent=5 // pred_region
        %s297 = ssub.s32 %s19, 1
        // Predicated region
        $region13: #{burst_align_stn_forward.1} parent=11 // pred_check
          %p298 = pneg %p80
        $region14: #{burst_align_stn_forward.1} parent=11 // pred_check_branch
          %300 = sbr.rel (%p298) target = $region16
        $region15: #{burst_align_stn_forward.1} parent=11 // pred_region
          %s302 = ssub.s32 16, 16
          %303 = vsyncadd [#allocation4], %s302
          %s305 = sshll.u32 %s1, 4
          %s306 = int_to_ptr.vmem [resolvable:$true] %s305
          %308 = dma.vmem_to_smem %s306, 16, [#allocation3], [#allocation4]
        $region16: #{burst_align_stn_forward.1} parent=11 // pred_fallthru
          _
        // Predicated region
        $region17: #{burst_align_stn_forward.1} parent=11 // pred_check
          %p309 = pneg %p101
        $region18: #{burst_align_stn_forward.1} parent=11 // pred_check_branch
          %311 = sbr.rel (%p309) target = $region20
        $region19: #{burst_align_stn_forward.1} parent=11 // pred_region
          %s313 = ssub.s32 16, 16
          %314 = vsyncadd [#allocation6], %s313
          %s316 = sshll.u32 %s2, 4
          %s317 = int_to_ptr.vmem [resolvable:$true] %s316
          %319 = dma.vmem_to_smem %s317, 16, [#allocation5], [#allocation6]
        $region20: #{burst_align_stn_forward.1} parent=11 // pred_fallthru
          _
        // Predicated region
        $region21: #{burst_align_stn_forward.1} parent=11 // pred_check
          %p320 = pneg %p122
        $region22: #{burst_align_stn_forward.1} parent=11 // pred_check_branch
          %322 = sbr.rel (%p320) target = $region24
        $region23: #{burst_align_stn_forward.1} parent=11 // pred_region
          %s324 = ssub.s32 16, 16
          %325 = vsyncadd [#allocation6], %s324
          %s327 = sshll.u32 %s3, 4
          %s328 = int_to_ptr.vmem [resolvable:$true] %s327
          %330 = dma.vmem_to_smem %s328, 16, [#allocation7], [#allocation6]
        $region24: #{burst_align_stn_forward.1} parent=11 // pred_fallthru
          _
        // Predicated region
        $region25: #{burst_align_stn_forward.1} parent=11 // pred_check
          %p331 = pneg %p143
        $region26: #{burst_align_stn_forward.1} parent=11 // pred_check_branch
          %333 = sbr.rel (%p331) target = $region28
        $region27: #{burst_align_stn_forward.1} parent=11 // pred_region
          %s335 = ssub.s32 16, 16
          %336 = vsyncadd [#allocation9], %s335
          %s338 = sshll.u32 %s4, 4
          %s339 = int_to_ptr.vmem [resolvable:$true] %s338
          %341 = dma.vmem_to_smem %s339, 16, [#allocation8], [#allocation9]
        $region28: #{burst_align_stn_forward.1} parent=11 // pred_fallthru
          _
      $region12: #{burst_align_stn_forward.1} parent=5 // pred_fallthru
        _
      %p342 = scmp.lt.s32.totalorder %s19, 2
      // Predicated region
      $region29: #{burst_align_stn_forward.1} parent=5 // pred_check
        %p343 = pneg %p342
      $region30: #{burst_align_stn_forward.1} parent=5 // pred_check_branch
        %345 = sbr.rel (%p343) target = $region32
      $region31: #{burst_align_stn_forward.1} parent=5 // pred_region
        // Predicated region
        $region33: #{burst_align_stn_forward.1} parent=31 // pred_check
          %p346 = pneg %p53
        $region34: #{burst_align_stn_forward.1} parent=31 // pred_check_branch
          %348 = sbr.rel (%p346) target = $region36
        $region35: #{burst_align_stn_forward.1} parent=31 // pred_region
          %s349 = sand.u32 %s43, 1
          %s350 = sand.u32 %s43, 1
          %s351 = smul.addr %s350, 30
          %s352 = scalar_lea.vmem [#allocation2], %s351
          %s353 = smul.addr %s26, 3
          %s354 = sadd.s32 %s27, %s353
          %s355 = smul.addr %s354, 2
          %s356 = scalar_lea.vmem %s0, %s355
          // Predicated region
          $region37: #{burst_align_stn_forward.1} parent=35 // pred_check
            _
          $region38: #{burst_align_stn_forward.1} parent=35 // pred_check_branch
            %358 = sbr.rel (0) target = $region40
          $region39: #{burst_align_stn_forward.1} parent=35 // pred_region
            // Predicated region
            $region41: #{burst_align_stn_forward.1} parent=39 // pred_check
              _
            $region42: #{burst_align_stn_forward.1} parent=39 // pred_check_branch
              %360 = sbr.rel target = $region44
            $region43: #{burst_align_stn_forward.1} parent=39 // pred_region
              // Predicated region
              $region56: #{burst_align_stn_forward.1} parent=43 // pred_check
                _
              $region57: #{burst_align_stn_forward.1} parent=43 // pred_check_branch
                %403 = sbr.rel (0) target = $region59
              $region58: #{burst_align_stn_forward.1} parent=43 // pred_region
                loop: start=0, step=1, limit=1
                $region60: #{burst_align_stn_forward.1} parent=58 // loop_pre_header
                  _
                $region61: #{burst_align_stn_forward.1} parent=58 // loop_header
                  %s405 = sphi 0, %s409
                  %p406 = scmp.ge.s32.totalorder %s405, 1
                  %s410 = sphi %s356, %s356
                  %s411 = sphi %s352, %s352
                $region62: #{burst_align_stn_forward.1} parent=58 // loop_header_branch
                  %408 = sbr.rel (%p406) target = $region66
                $region63: #{burst_align_stn_forward.1} parent=58 // loop_body
                  _
                $region64: #{burst_align_stn_forward.1} parent=58 // loop_footer
                  %s409 = sadd.s32 1, %s405
                $region65: #{burst_align_stn_forward.1} parent=58 // loop_footer_branch
                  %404 = sbr.rel target = $region61
                $region66: #{burst_align_stn_forward.1} parent=58 // loop_exit
                  _
                loop: start=0, step=1, limit=1
                $region67: #{burst_align_stn_forward.1} parent=58 // loop_pre_header
                  _
                $region68: #{burst_align_stn_forward.1} parent=58 // loop_header
                  %s414 = sphi 0, %s418
                  %p415 = scmp.ge.s32.totalorder %s414, 1
                  %s419 = sphi %s356, %s356
                  %s420 = sphi %s352, %s352
                $region69: #{burst_align_stn_forward.1} parent=58 // loop_header_branch
                  %417 = sbr.rel (%p415) target = $region73
                $region70: #{burst_align_stn_forward.1} parent=58 // loop_body
                  %v421 = vld [vmem:[%s419] sm:$0x3]
                  %422 = vst [vmem:[%s420] sm:$0x3] %v421
                  %v423 = vld [vmem:[%s419 + $0x2] sm:$0x3]
                  %424 = vst [vmem:[%s420 + $0x2] sm:$0x3] %v423
                  %v425 = vld [vmem:[%s419 + $0x4] sm:$0x3]
                  %426 = vst [vmem:[%s420 + $0x4] sm:$0x3] %v425
                  %v427 = vld [vmem:[%s419 + $0xc] sm:$0x3]
                  %428 = vst [vmem:[%s420 + $0x6] sm:$0x3] %v427
                  %v429 = vld [vmem:[%s419 + $0xe] sm:$0x3]
                  %430 = vst [vmem:[%s420 + $0x8] sm:$0x3] %v429
                  %v431 = vld [vmem:[%s419 + $0x10] sm:$0x3]
                  %432 = vst [vmem:[%s420 + $0xa] sm:$0x3] %v431
                  %v433 = vld [vmem:[%s419 + $0x18] sm:$0x3]
                  %434 = vst [vmem:[%s420 + $0xc] sm:$0x3] %v433
                  %v435 = vld [vmem:[%s419 + $0x1a] sm:$0x3]
                  %436 = vst [vmem:[%s420 + $0xe] sm:$0x3] %v435
                  %v437 = vld [vmem:[%s419 + $0x1c] sm:$0x3]
                  %438 = vst [vmem:[%s420 + $0x10] sm:$0x3] %v437
                  %v439 = vld [vmem:[%s419 + $0x24] sm:$0x3]
                  %440 = vst [vmem:[%s420 + $0x12] sm:$0x3] %v439
                  %v441 = vld [vmem:[%s419 + $0x26] sm:$0x3]
                  %442 = vst [vmem:[%s420 + $0x14] sm:$0x3] %v441
                  %v443 = vld [vmem:[%s419 + $0x28] sm:$0x3]
                  %444 = vst [vmem:[%s420 + $0x16] sm:$0x3] %v443
                  %v445 = vld [vmem:[%s419 + $0x30] sm:$0x3]
                  %446 = vst [vmem:[%s420 + $0x18] sm:$0x3] %v445
                  %v447 = vld [vmem:[%s419 + $0x32] sm:$0x3]
                  %448 = vst [vmem:[%s420 + $0x1a] sm:$0x3] %v447
                  %v449 = vld [vmem:[%s419 + $0x34] sm:$0x3]
                  %450 = vst [vmem:[%s420 + $0x1c] sm:$0x3] %v449
                $region71: #{burst_align_stn_forward.1} parent=58 // loop_footer
                  %s418 = sadd.s32 1, %s414
                $region72: #{burst_align_stn_forward.1} parent=58 // loop_footer_branch
                  %413 = sbr.rel target = $region68
                $region73: #{burst_align_stn_forward.1} parent=58 // loop_exit
                  _
              $region59: #{burst_align_stn_forward.1} parent=43 // pred_fallthru
                _
            $region44: #{burst_align_stn_forward.1} parent=39 // pred_fallthru
              _
            // Predicated region
            $region45: #{burst_align_stn_forward.1} parent=39 // pred_check
              _
            $region46: #{burst_align_stn_forward.1} parent=39 // pred_check_branch
              %362 = sbr.rel (0) target = $region48
            $region47: #{burst_align_stn_forward.1} parent=39 // pred_region
              loop: start=0, step=1, limit=1
              $region49: #{burst_align_stn_forward.1} parent=47 // loop_pre_header
                _
              $region50: #{burst_align_stn_forward.1} parent=47 // loop_header
                %s365 = sphi 0, %s369
                %p366 = scmp.ge.s32.totalorder %s365, 1
                %s370 = sphi %s356, %s356
                %s371 = sphi %s352, %s352
              $region51: #{burst_align_stn_forward.1} parent=47 // loop_header_branch
                %368 = sbr.rel (%p366) target = $region55
              $region52: #{burst_align_stn_forward.1} parent=47 // loop_body
                %v372 = vld [vmem:[%s370] sm:$0x3]
                %373 = vst [vmem:[%s371] sm:$0x3] %v372
                %v374 = vld [vmem:[%s370 + $0x2] sm:$0x3]
                %375 = vst [vmem:[%s371 + $0x2] sm:$0x3] %v374
                %v376 = vld [vmem:[%s370 + $0x4] sm:$0x3]
                %377 = vst [vmem:[%s371 + $0x4] sm:$0x3] %v376
                %v378 = vld [vmem:[%s370 + $0xc] sm:$0x3]
                %379 = vst [vmem:[%s371 + $0x6] sm:$0x3] %v378
                %v380 = vld [vmem:[%s370 + $0xe] sm:$0x3]
                %381 = vst [vmem:[%s371 + $0x8] sm:$0x3] %v380
                %v382 = vld [vmem:[%s370 + $0x10] sm:$0x3]
                %383 = vst [vmem:[%s371 + $0xa] sm:$0x3] %v382
                %v384 = vld [vmem:[%s370 + $0x18] sm:$0x3]
                %385 = vst [vmem:[%s371 + $0xc] sm:$0x3] %v384
                %v386 = vld [vmem:[%s370 + $0x1a] sm:$0x3]
                %387 = vst [vmem:[%s371 + $0xe] sm:$0x3] %v386
                %v388 = vld [vmem:[%s370 + $0x1c] sm:$0x3]
                %389 = vst [vmem:[%s371 + $0x10] sm:$0x3] %v388
                %v390 = vld [vmem:[%s370 + $0x24] sm:$0x3]
                %391 = vst [vmem:[%s371 + $0x12] sm:$0x3] %v390
                %v392 = vld [vmem:[%s370 + $0x26] sm:$0x3]
                %393 = vst [vmem:[%s371 + $0x14] sm:$0x3] %v392
                %v394 = vld [vmem:[%s370 + $0x28] sm:$0x3]
                %395 = vst [vmem:[%s371 + $0x16] sm:$0x3] %v394
                %v396 = vld [vmem:[%s370 + $0x30] sm:$0x3]
                %397 = vst [vmem:[%s371 + $0x18] sm:$0x3] %v396
                %v398 = vld [vmem:[%s370 + $0x32] sm:$0x3]
                %399 = vst [vmem:[%s371 + $0x1a] sm:$0x3] %v398
                %v400 = vld [vmem:[%s370 + $0x34] sm:$0x3]
                %401 = vst [vmem:[%s371 + $0x1c] sm:$0x3] %v400
              $region53: #{burst_align_stn_forward.1} parent=47 // loop_footer
                %s369 = sadd.s32 1, %s365
              $region54: #{burst_align_stn_forward.1} parent=47 // loop_footer_branch
                %364 = sbr.rel target = $region50
              $region55: #{burst_align_stn_forward.1} parent=47 // loop_exit
                _
            $region48: #{burst_align_stn_forward.1} parent=39 // pred_fallthru
              _
          $region40: #{burst_align_stn_forward.1} parent=35 // pred_fallthru
            _
          %451 = vnop
        $region36: #{burst_align_stn_forward.1} parent=31 // pred_fallthru
          _
      $region32: #{burst_align_stn_forward.1} parent=5 // pred_fallthru
        _
      %p452 = scmp.le.s32.totalorder 1, %s19
      %p453 = scmp.lt.s32.totalorder %s19, 3
      %p454 = pnand %p452, %p453
      %p455 = pneg %p454
      // Predicated region
      $region74: #{burst_align_stn_forward.1} parent=5 // pred_check
        _
      $region75: #{burst_align_stn_forward.1} parent=5 // pred_check_branch
        %457 = sbr.rel (%p454) target = $region77
      $region76: #{burst_align_stn_forward.1} parent=5 // pred_region
        %s458 = ssub.s32 %s19, 1
        %s459 = sand.u32 %s46, 1
        %s460 = sand.u32 %s46, 1
        %s461 = smul.addr %s460, 30
        %s462 = scalar_lea.vmem [#allocation2], %s461
        // Predicated region
        $region78: #{burst_align_stn_forward.1} parent=76 // pred_check
          %p463 = pneg %p59
        $region79: #{burst_align_stn_forward.1} parent=76 // pred_check_branch
          %465 = sbr.rel (%p463) target = $region81
        $region80: #{burst_align_stn_forward.1} parent=76 // pred_region
          _
        $region81: #{burst_align_stn_forward.1} parent=76 // pred_fallthru
          _
        // Predicated region
        $region82: #{burst_align_stn_forward.1} parent=76 // pred_check
          %p466 = pneg %p80
        $region83: #{burst_align_stn_forward.1} parent=76 // pred_check_branch
          %468 = sbr.rel (%p466) target = $region85
        $region84: #{burst_align_stn_forward.1} parent=76 // pred_region
          %469 = dma.done [#allocation4], 16
        $region85: #{burst_align_stn_forward.1} parent=76 // pred_fallthru
          _
        // Predicated region
        $region86: #{burst_align_stn_forward.1} parent=76 // pred_check
          %p470 = pneg %p101
        $region87: #{burst_align_stn_forward.1} parent=76 // pred_check_branch
          %472 = sbr.rel (%p470) target = $region89
        $region88: #{burst_align_stn_forward.1} parent=76 // pred_region
          %473 = dma.done [#allocation6], 16
        $region89: #{burst_align_stn_forward.1} parent=76 // pred_fallthru
          _
        // Predicated region
        $region90: #{burst_align_stn_forward.1} parent=76 // pred_check
          %p474 = pneg %p122
        $region91: #{burst_align_stn_forward.1} parent=76 // pred_check_branch
          %476 = sbr.rel (%p474) target = $region93
        $region92: #{burst_align_stn_forward.1} parent=76 // pred_region
          %477 = dma.done [#allocation6], 16
        $region93: #{burst_align_stn_forward.1} parent=76 // pred_fallthru
          _
        // Predicated region
        $region94: #{burst_align_stn_forward.1} parent=76 // pred_check
          %p478 = pneg %p143
        $region95: #{burst_align_stn_forward.1} parent=76 // pred_check_branch
          %480 = sbr.rel (%p478) target = $region97
        $region96: #{burst_align_stn_forward.1} parent=76 // pred_region
          %481 = dma.done [#allocation9], 16
        $region97: #{burst_align_stn_forward.1} parent=76 // pred_fallthru
          _
        %482 = sfence
        %s483 = sand.u32 %s46, 1
        %s484 = sand.u32 %s46, 1
        %s485 = smul.addr %s484, 30
        %s486 = scalar_lea.vmem [#allocation2], %s485
        %p487 = pneg %p59
        %p488 = pneg %p56
        %p489 = pneg %p80
        %p490 = pneg %p77
        %p491 = pneg %p101
        %p492 = pneg %p98
        %p493 = pneg %p122
        %p494 = pneg %p119
        %p495 = pneg %p143
        %p496 = pneg %p140
        %p497 = pneg %p171
        %p498 = pneg %p168
        %p499 = scmp.lt.s32.totalorder %s28, 1
        %s500 = scalar_select %p499, %s28, 1
        %p501 = scmp.lt.s32.totalorder %s29, 0
        %s502 = scalar_select %p501, %s29, 0
        %s503 = smul.addr %s500, 15
        %s504 = sadd.s32 %s502, %s503
        %s505 = smul.addr %s504, 2
        %s506 = scalar_lea.vmem %s5, %s505
        %p507 = pneg %p199
        %p508 = pneg %p196
        %p509 = scmp.lt.s32.totalorder %s28, 1
        %s510 = scalar_select %p509, %s28, 1
        %p511 = scmp.lt.s32.totalorder %s29, 0
        %s512 = scalar_select %p511, %s29, 0
        %s513 = smul.addr %s510, 3
        %s514 = sadd.s32 %s512, %s513
        %s515 = smul.addr %s514, 2
        %s516 = scalar_lea.vmem %s6, %s515
        %p517 = pneg %p227
        %p518 = pneg %p224
        %p519 = scmp.lt.s32.totalorder %s28, 1
        %s520 = scalar_select %p519, %s28, 1
        %p521 = scmp.lt.s32.totalorder %s29, 0
        %s522 = scalar_select %p521, %s29, 0
        %s523 = smul.addr %s520, 15
        %s524 = sadd.s32 %s522, %s523
        %s525 = smul.addr %s524, 2
        %s526 = scalar_lea.vmem %s7, %s525
        %p527 = pneg %p255
        %p528 = pneg %p252
        %p529 = scmp.lt.s32.totalorder %s28, 1
        %s530 = scalar_select %p529, %s28, 1
        %p531 = scmp.lt.s32.totalorder %s29, 0
        %s532 = scalar_select %p531, %s29, 0
        %s533 = smul.addr %s530, 3
        %s534 = sadd.s32 %s532, %s533
        %s535 = smul.addr %s534, 2
        %s536 = scalar_lea.vmem %s8, %s535
        %p537 = pneg %p283
        %p538 = pneg %p280
        %p539 = scmp.lt.s32.totalorder %s28, 1
        %s540 = scalar_select %p539, %s28, 1
        %p541 = scmp.lt.s32.totalorder %s29, 0
        %s542 = scalar_select %p541, %s29, 0
        %s543 = smul.addr %s540, 5
        %s544 = sadd.s32 %s542, %s543
        %s545 = smul.addr %s544, 2
        %s546 = scalar_lea.vmem %s9, %s545
        %p547 = scmp.lt.s32.totalorder %s28, 1
        %s548 = scalar_select %p547, %s28, 1
        %p549 = scmp.lt.s32.totalorder %s29, 0
        %s550 = scalar_select %p549, %s29, 0
        %s551 = smul.addr %s548, 15
        %s552 = sadd.s32 %s550, %s551
        %s553 = smul.addr %s552, 2
        %s554 = scalar_lea.vmem %s5, %s553
        %p555 = scmp.lt.s32.totalorder %s28, 1
        %s556 = scalar_select %p555, %s28, 1
        %p557 = scmp.lt.s32.totalorder %s29, 0
        %s558 = scalar_select %p557, %s29, 0
        %s559 = smul.addr %s556, 3
        %s560 = sadd.s32 %s558, %s559
        %s561 = smul.addr %s560, 2
        %s562 = scalar_lea.vmem %s6, %s561
        %p563 = scmp.lt.s32.totalorder %s28, 1
        %s564 = scalar_select %p563, %s28, 1
        %p565 = scmp.lt.s32.totalorder %s29, 0
        %s566 = scalar_select %p565, %s29, 0
        %s567 = smul.addr %s564, 15
        %s568 = sadd.s32 %s566, %s567
        %s569 = smul.addr %s568, 2
        %s570 = scalar_lea.vmem %s7, %s569
        %p571 = scmp.lt.s32.totalorder %s28, 1
        %s572 = scalar_select %p571, %s28, 1
        %p573 = scmp.lt.s32.totalorder %s29, 0
        %s574 = scalar_select %p573, %s29, 0
        %s575 = smul.addr %s572, 3
        %s576 = sadd.s32 %s574, %s575
        %s577 = smul.addr %s576, 2
        %s578 = scalar_lea.vmem %s8, %s577
        %p579 = scmp.lt.s32.totalorder %s28, 1
        %s580 = scalar_select %p579, %s28, 1
        %p581 = scmp.lt.s32.totalorder %s29, 0
        %s582 = scalar_select %p581, %s29, 0
        %s583 = smul.addr %s580, 5
        %s584 = sadd.s32 %s582, %s583
        %s585 = smul.addr %s584, 2
        %s586 = scalar_lea.vmem %s9, %s585
        %v587 = vld [vmem:[%s462] sm:$0x3]
        %s588 = scalar_lea.vmem %s462, 2 [#allocation2]
        %v589 = vld [vmem:[%s588] sm:$0x3]
        %s590 = scalar_lea.vmem %s462, 4 [#allocation2]
        %v591 = vld [vmem:[%s590] sm:$0x3]
        %s592 = sld [smem:[#allocation3]]
        %v593 = vstv %s592
        %v594 = vmul.f32 %v587, %v593
        %s595 = sld [smem:[#allocation3 + $0x1]]
        %v596 = vstv %s595
        %v597 = vmul.f32 %v589, %v596
        %v598 = vadd.f32 %v594, %v597
        %s599 = sld [smem:[#allocation3 + $0x2]]
        %v600 = vstv %s599
        %v601 = vmul.f32 %v591, %v600
        %v602 = vadd.f32 %v598, %v601
        %s603 = sld [smem:[#allocation5]]
        %v604 = vstv %s603
        %v605 = vadd.f32 %v602, %v604
        %606 = vst [vmem:[%s554] sm:$0x3] %v605
        %s607 = sld [smem:[#allocation3 + $0x3]]
        %v608 = vstv %s607
        %v609 = vmul.f32 %v587, %v608
        %s610 = sld [smem:[#allocation3 + $0x4]]
        %v611 = vstv %s610
        %v612 = vmul.f32 %v589, %v611
        %v613 = vadd.f32 %v609, %v612
        %s614 = sld [smem:[#allocation3 + $0x5]]
        %v615 = vstv %s614
        %v616 = vmul.f32 %v591, %v615
        %v617 = vadd.f32 %v613, %v616
        %s618 = sld [smem:[#allocation5 + $0x1]]
        %v619 = vstv %s618
        %v620 = vadd.f32 %v617, %v619
        %s621 = scalar_lea.vmem %s554, 2
        %622 = vst [vmem:[%s621] sm:$0x3] %v620
        %s623 = sld [smem:[#allocation3 + $0x6]]
        %v624 = vstv %s623
        %v625 = vmul.f32 %v587, %v624
        %s626 = sld [smem:[#allocation3 + $0x7]]
        %v627 = vstv %s626
        %v628 = vmul.f32 %v589, %v627
        %v629 = vadd.f32 %v625, %v628
        %s630 = sld [smem:[#allocation3 + $0x8]]
        %v631 = vstv %s630
        %v632 = vmul.f32 %v591, %v631
        %v633 = vadd.f32 %v629, %v632
        %s634 = sld [smem:[#allocation5 + $0x2]]
        %v635 = vstv %s634
        %v636 = vadd.f32 %v633, %v635
        %s637 = scalar_lea.vmem %s554, 4
        %638 = vst [vmem:[%s637] sm:$0x3] %v636
        %s639 = scalar_lea.vmem %s462, 6 [#allocation2]
        %v640 = vld [vmem:[%s639] sm:$0x3]
        %s641 = scalar_lea.vmem %s462, 8 [#allocation2]
        %v642 = vld [vmem:[%s641] sm:$0x3]
        %s643 = scalar_lea.vmem %s462, 10 [#allocation2]
        %v644 = vld [vmem:[%s643] sm:$0x3]
        %s645 = sld [smem:[#allocation3]]
        %v646 = vstv %s645
        %v647 = vmul.f32 %v640, %v646
        %s648 = sld [smem:[#allocation3 + $0x1]]
        %v649 = vstv %s648
        %v650 = vmul.f32 %v642, %v649
        %v651 = vadd.f32 %v647, %v650
        %s652 = sld [smem:[#allocation3 + $0x2]]
        %v653 = vstv %s652
        %v654 = vmul.f32 %v644, %v653
        %v655 = vadd.f32 %v651, %v654
        %s656 = sld [smem:[#allocation5]]
        %v657 = vstv %s656
        %v658 = vadd.f32 %v655, %v657
        %s659 = scalar_lea.vmem %s554, 6
        %660 = vst [vmem:[%s659] sm:$0x3] %v658
        %s661 = sld [smem:[#allocation3 + $0x3]]
        %v662 = vstv %s661
        %v663 = vmul.f32 %v640, %v662
        %s664 = sld [smem:[#allocation3 + $0x4]]
        %v665 = vstv %s664
        %v666 = vmul.f32 %v642, %v665
        %v667 = vadd.f32 %v663, %v666
        %s668 = sld [smem:[#allocation3 + $0x5]]
        %v669 = vstv %s668
        %v670 = vmul.f32 %v644, %v669
        %v671 = vadd.f32 %v667, %v670
        %s672 = sld [smem:[#allocation5 + $0x1]]
        %v673 = vstv %s672
        %v674 = vadd.f32 %v671, %v673
        %s675 = scalar_lea.vmem %s554, 8
        %676 = vst [vmem:[%s675] sm:$0x3] %v674
        %s677 = sld [smem:[#allocation3 + $0x6]]
        %v678 = vstv %s677
        %v679 = vmul.f32 %v640, %v678
        %s680 = sld [smem:[#allocation3 + $0x7]]
        %v681 = vstv %s680
        %v682 = vmul.f32 %v642, %v681
        %v683 = vadd.f32 %v679, %v682
        %s684 = sld [smem:[#allocation3 + $0x8]]
        %v685 = vstv %s684
        %v686 = vmul.f32 %v644, %v685
        %v687 = vadd.f32 %v683, %v686
        %s688 = sld [smem:[#allocation5 + $0x2]]
        %v689 = vstv %s688
        %v690 = vadd.f32 %v687, %v689
        %s691 = scalar_lea.vmem %s554, 10
        %692 = vst [vmem:[%s691] sm:$0x3] %v690
        %s693 = scalar_lea.vmem %s462, 12 [#allocation2]
        %v694 = vld [vmem:[%s693] sm:$0x3]
        %s695 = scalar_lea.vmem %s462, 14 [#allocation2]
        %v696 = vld [vmem:[%s695] sm:$0x3]
        %s697 = scalar_lea.vmem %s462, 16 [#allocation2]
        %v698 = vld [vmem:[%s697] sm:$0x3]
        %s699 = sld [smem:[#allocation3]]
        %v700 = vstv %s699
        %v701 = vmul.f32 %v694, %v700
        %s702 = sld [smem:[#allocation3 + $0x1]]
        %v703 = vstv %s702
        %v704 = vmul.f32 %v696, %v703
        %v705 = vadd.f32 %v701, %v704
        %s706 = sld [smem:[#allocation3 + $0x2]]
        %v707 = vstv %s706
        %v708 = vmul.f32 %v698, %v707
        %v709 = vadd.f32 %v705, %v708
        %s710 = sld [smem:[#allocation5]]
        %v711 = vstv %s710
        %v712 = vadd.f32 %v709, %v711
        %s713 = scalar_lea.vmem %s554, 12
        %714 = vst [vmem:[%s713] sm:$0x3] %v712
        %s715 = sld [smem:[#allocation3 + $0x3]]
        %v716 = vstv %s715
        %v717 = vmul.f32 %v694, %v716
        %s718 = sld [smem:[#allocation3 + $0x4]]
        %v719 = vstv %s718
        %v720 = vmul.f32 %v696, %v719
        %v721 = vadd.f32 %v717, %v720
        %s722 = sld [smem:[#allocation3 + $0x5]]
        %v723 = vstv %s722
        %v724 = vmul.f32 %v698, %v723
        %v725 = vadd.f32 %v721, %v724
        %s726 = sld [smem:[#allocation5 + $0x1]]
        %v727 = vstv %s726
        %v728 = vadd.f32 %v725, %v727
        %s729 = scalar_lea.vmem %s554, 14
        %730 = vst [vmem:[%s729] sm:$0x3] %v728
        %s731 = sld [smem:[#allocation3 + $0x6]]
        %v732 = vstv %s731
        %v733 = vmul.f32 %v694, %v732
        %s734 = sld [smem:[#allocation3 + $0x7]]
        %v735 = vstv %s734
        %v736 = vmul.f32 %v696, %v735
        %v737 = vadd.f32 %v733, %v736
        %s738 = sld [smem:[#allocation3 + $0x8]]
        %v739 = vstv %s738
        %v740 = vmul.f32 %v698, %v739
        %v741 = vadd.f32 %v737, %v740
        %s742 = sld [smem:[#allocation5 + $0x2]]
        %v743 = vstv %s742
        %v744 = vadd.f32 %v741, %v743
        %s745 = scalar_lea.vmem %s554, 16
        %746 = vst [vmem:[%s745] sm:$0x3] %v744
        %s747 = scalar_lea.vmem %s462, 18 [#allocation2]
        %v748 = vld [vmem:[%s747] sm:$0x3]
        %s749 = scalar_lea.vmem %s462, 20 [#allocation2]
        %v750 = vld [vmem:[%s749] sm:$0x3]
        %s751 = scalar_lea.vmem %s462, 22 [#allocation2]
        %v752 = vld [vmem:[%s751] sm:$0x3]
        %s753 = sld [smem:[#allocation3]]
        %v754 = vstv %s753
        %v755 = vmul.f32 %v748, %v754
        %s756 = sld [smem:[#allocation3 + $0x1]]
        %v757 = vstv %s756
        %v758 = vmul.f32 %v750, %v757
        %v759 = vadd.f32 %v755, %v758
        %s760 = sld [smem:[#allocation3 + $0x2]]
        %v761 = vstv %s760
        %v762 = vmul.f32 %v752, %v761
        %v763 = vadd.f32 %v759, %v762
        %s764 = sld [smem:[#allocation5]]
        %v765 = vstv %s764
        %v766 = vadd.f32 %v763, %v765
        %s767 = scalar_lea.vmem %s554, 18
        %768 = vst [vmem:[%s767] sm:$0x3] %v766
        %s769 = sld [smem:[#allocation3 + $0x3]]
        %v770 = vstv %s769
        %v771 = vmul.f32 %v748, %v770
        %s772 = sld [smem:[#allocation3 + $0x4]]
        %v773 = vstv %s772
        %v774 = vmul.f32 %v750, %v773
        %v775 = vadd.f32 %v771, %v774
        %s776 = sld [smem:[#allocation3 + $0x5]]
        %v777 = vstv %s776
        %v778 = vmul.f32 %v752, %v777
        %v779 = vadd.f32 %v775, %v778
        %s780 = sld [smem:[#allocation5 + $0x1]]
        %v781 = vstv %s780
        %v782 = vadd.f32 %v779, %v781
        %s783 = scalar_lea.vmem %s554, 20
        %784 = vst [vmem:[%s783] sm:$0x3] %v782
        %s785 = sld [smem:[#allocation3 + $0x6]]
        %v786 = vstv %s785
        %v787 = vmul.f32 %v748, %v786
        %s788 = sld [smem:[#allocation3 + $0x7]]
        %v789 = vstv %s788
        %v790 = vmul.f32 %v750, %v789
        %v791 = vadd.f32 %v787, %v790
        %s792 = sld [smem:[#allocation3 + $0x8]]
        %v793 = vstv %s792
        %v794 = vmul.f32 %v752, %v793
        %v795 = vadd.f32 %v791, %v794
        %s796 = sld [smem:[#allocation5 + $0x2]]
        %v797 = vstv %s796
        %v798 = vadd.f32 %v795, %v797
        %s799 = scalar_lea.vmem %s554, 22
        %800 = vst [vmem:[%s799] sm:$0x3] %v798
        %s801 = scalar_lea.vmem %s462, 24 [#allocation2]
        %v802 = vld [vmem:[%s801] sm:$0x3]
        %s803 = scalar_lea.vmem %s462, 26 [#allocation2]
        %v804 = vld [vmem:[%s803] sm:$0x3]
        %s805 = scalar_lea.vmem %s462, 28 [#allocation2]
        %v806 = vld [vmem:[%s805] sm:$0x3]
        %s807 = sld [smem:[#allocation3]]
        %v808 = vstv %s807
        %v809 = vmul.f32 %v802, %v808
        %s810 = sld [smem:[#allocation3 + $0x1]]
        %v811 = vstv %s810
        %v812 = vmul.f32 %v804, %v811
        %v813 = vadd.f32 %v809, %v812
        %s814 = sld [smem:[#allocation3 + $0x2]]
        %v815 = vstv %s814
        %v816 = vmul.f32 %v806, %v815
        %v817 = vadd.f32 %v813, %v816
        %s818 = sld [smem:[#allocation5]]
        %v819 = vstv %s818
        %v820 = vadd.f32 %v817, %v819
        %s821 = scalar_lea.vmem %s554, 24
        %822 = vst [vmem:[%s821] sm:$0x3] %v820
        %s823 = sld [smem:[#allocation3 + $0x3]]
        %v824 = vstv %s823
        %v825 = vmul.f32 %v802, %v824
        %s826 = sld [smem:[#allocation3 + $0x4]]
        %v827 = vstv %s826
        %v828 = vmul.f32 %v804, %v827
        %v829 = vadd.f32 %v825, %v828
        %s830 = sld [smem:[#allocation3 + $0x5]]
        %v831 = vstv %s830
        %v832 = vmul.f32 %v806, %v831
        %v833 = vadd.f32 %v829, %v832
        %s834 = sld [smem:[#allocation5 + $0x1]]
        %v835 = vstv %s834
        %v836 = vadd.f32 %v833, %v835
        %s837 = scalar_lea.vmem %s554, 26
        %838 = vst [vmem:[%s837] sm:$0x3] %v836
        %s839 = sld [smem:[#allocation3 + $0x6]]
        %v840 = vstv %s839
        %v841 = vmul.f32 %v802, %v840
        %s842 = sld [smem:[#allocation3 + $0x7]]
        %v843 = vstv %s842
        %v844 = vmul.f32 %v804, %v843
        %v845 = vadd.f32 %v841, %v844
        %s846 = sld [smem:[#allocation3 + $0x8]]
        %v847 = vstv %s846
        %v848 = vmul.f32 %v806, %v847
        %v849 = vadd.f32 %v845, %v848
        %s850 = sld [smem:[#allocation5 + $0x2]]
        %v851 = vstv %s850
        %v852 = vadd.f32 %v849, %v851
        %s853 = scalar_lea.vmem %s554, 28
        %854 = vst [vmem:[%s853] sm:$0x3] %v852
        %v855 = vld [vmem:[%s554] sm:$0x3]
        %v856 = vld [vmem:[%s659] sm:$0x3]
        %v857 = vadd.f32 %v855, %v856
        %v858 = vld [vmem:[%s713] sm:$0x3]
        %v859 = vadd.f32 %v857, %v858
        %v860 = vld [vmem:[%s767] sm:$0x3]
        %v861 = vadd.f32 %v859, %v860
        %v862 = vld [vmem:[%s821] sm:$0x3]
        %v863 = vadd.f32 %v861, %v862
        %v864 = vmul.f32 %v863, 0.2
        %865 = vst [vmem:[%s562] sm:$0x3] %v864
        %v866 = vld [vmem:[%s621] sm:$0x3]
        %v867 = vld [vmem:[%s675] sm:$0x3]
        %v868 = vadd.f32 %v866, %v867
        %v869 = vld [vmem:[%s729] sm:$0x3]
        %v870 = vadd.f32 %v868, %v869
        %v871 = vld [vmem:[%s783] sm:$0x3]
        %v872 = vadd.f32 %v870, %v871
        %v873 = vld [vmem:[%s837] sm:$0x3]
        %v874 = vadd.f32 %v872, %v873
        %v875 = vmul.f32 %v874, 0.2
        %s876 = scalar_lea.vmem %s562, 2
        %877 = vst [vmem:[%s876] sm:$0x3] %v875
        %v878 = vld [vmem:[%s637] sm:$0x3]
        %v879 = vld [vmem:[%s691] sm:$0x3]
        %v880 = vadd.f32 %v878, %v879
        %v881 = vld [vmem:[%s745] sm:$0x3]
        %v882 = vadd.f32 %v880, %v881
        %v883 = vld [vmem:[%s799] sm:$0x3]
        %v884 = vadd.f32 %v882, %v883
        %v885 = vld [vmem:[%s853] sm:$0x3]
        %v886 = vadd.f32 %v884, %v885
        %v887 = vmul.f32 %v886, 0.2
        %s888 = scalar_lea.vmem %s562, 4
        %889 = vst [vmem:[%s888] sm:$0x3] %v887
        %v890 = vld [vmem:[%s462] sm:$0x3]
        %s891 = sld [smem:[#allocation7]]
        %v892 = vstv %s891
        %v893 = vmul.f32 %v890, %v892
        %v894 = vld [vmem:[%s588] sm:$0x3]
        %s895 = sld [smem:[#allocation7 + $0x1]]
        %v896 = vstv %s895
        %v897 = vmul.f32 %v894, %v896
        %v898 = vadd.f32 %v893, %v897
        %v899 = vld [vmem:[%s590] sm:$0x3]
        %s900 = sld [smem:[#allocation7 + $0x2]]
        %v901 = vstv %s900
        %v902 = vmul.f32 %v899, %v901
        %v903 = vadd.f32 %v898, %v902
        %v904 = vld [vmem:[%s639] sm:$0x3]
        %s905 = sld [smem:[#allocation7 + $0xf]]
        %v906 = vstv %s905
        %v907 = vmul.f32 %v904, %v906
        %v908 = vadd.f32 %v903, %v907
        %v909 = vld [vmem:[%s641] sm:$0x3]
        %s910 = sld [smem:[#allocation7 + $0x10]]
        %v911 = vstv %s910
        %v912 = vmul.f32 %v909, %v911
        %v913 = vadd.f32 %v908, %v912
        %v914 = vld [vmem:[%s643] sm:$0x3]
        %s915 = sld [smem:[#allocation7 + $0x11]]
        %v916 = vstv %s915
        %v917 = vmul.f32 %v914, %v916
        %v918 = vadd.f32 %v913, %v917
        %v919 = vld [vmem:[%s693] sm:$0x3]
        %s920 = sld [smem:[#allocation7 + $0x1e]]
        %v921 = vstv %s920
        %v922 = vmul.f32 %v919, %v921
        %v923 = vadd.f32 %v918, %v922
        %v924 = vld [vmem:[%s695] sm:$0x3]
        %s925 = sld [smem:[#allocation7 + $0x1f]]
        %v926 = vstv %s925
        %v927 = vmul.f32 %v924, %v926
        %v928 = vadd.f32 %v923, %v927
        %v929 = vld [vmem:[%s697] sm:$0x3]
        %s930 = sld [smem:[#allocation7 + $0x20]]
        %v931 = vstv %s930
        %v932 = vmul.f32 %v929, %v931
        %v933 = vadd.f32 %v928, %v932
        %v934 = vld [vmem:[%s747] sm:$0x3]
        %s935 = sld [smem:[#allocation7 + $0x2d]]
        %v936 = vstv %s935
        %v937 = vmul.f32 %v934, %v936
        %v938 = vadd.f32 %v933, %v937
        %v939 = vld [vmem:[%s749] sm:$0x3]
        %s940 = sld [smem:[#allocation7 + $0x2e]]
        %v941 = vstv %s940
        %v942 = vmul.f32 %v939, %v941
        %v943 = vadd.f32 %v938, %v942
        %v944 = vld [vmem:[%s751] sm:$0x3]
        %s945 = sld [smem:[#allocation7 + $0x2f]]
        %v946 = vstv %s945
        %v947 = vmul.f32 %v944, %v946
        %v948 = vadd.f32 %v943, %v947
        %v949 = vld [vmem:[%s801] sm:$0x3]
        %s950 = sld [smem:[#allocation7 + $0x3c]]
        %v951 = vstv %s950
        %v952 = vmul.f32 %v949, %v951
        %v953 = vadd.f32 %v948, %v952
        %v954 = vld [vmem:[%s803] sm:$0x3]
        %s955 = sld [smem:[#allocation7 + $0x3d]]
        %v956 = vstv %s955
        %v957 = vmul.f32 %v954, %v956
        %v958 = vadd.f32 %v953, %v957
        %v959 = vld [vmem:[%s805] sm:$0x3]
        %s960 = sld [smem:[#allocation7 + $0x3e]]
        %v961 = vstv %s960
        %v962 = vmul.f32 %v959, %v961
        %v963 = vadd.f32 %v958, %v962
        %s964 = sld [smem:[#allocation8]]
        %v965 = vstv %s964
        %v966 = vadd.f32 %v963, %v965
        %s967 = sld [smem:[#allocation7 + $0x3]]
        %v968 = vstv %s967
        %v969 = vmul.f32 %v890, %v968
        %s970 = sld [smem:[#allocation7 + $0x4]]
        %v971 = vstv %s970
        %v972 = vmul.f32 %v894, %v971
        %v973 = vadd.f32 %v969, %v972
        %s974 = sld [smem:[#allocation7 + $0x5]]
        %v975 = vstv %s974
        %v976 = vmul.f32 %v899, %v975
        %v977 = vadd.f32 %v973, %v976
        %s978 = sld [smem:[#allocation7 + $0x12]]
        %v979 = vstv %s978
        %v980 = vmul.f32 %v904, %v979
        %v981 = vadd.f32 %v977, %v980
        %s982 = sld [smem:[#allocation7 + $0x13]]
        %v983 = vstv %s982
        %v984 = vmul.f32 %v909, %v983
        %v985 = vadd.f32 %v981, %v984
        %s986 = sld [smem:[#allocation7 + $0x14]]
        %v987 = vstv %s986
        %v988 = vmul.f32 %v914, %v987
        %v989 = vadd.f32 %v985, %v988
        %s990 = sld [smem:[#allocation7 + $0x21]]
        %v991 = vstv %s990
        %v992 = vmul.f32 %v919, %v991
        %v993 = vadd.f32 %v989, %v992
        %s994 = sld [smem:[#allocation7 + $0x22]]
        %v995 = vstv %s994
        %v996 = vmul.f32 %v924, %v995
        %v997 = vadd.f32 %v993, %v996
        %s998 = sld [smem:[#allocation7 + $0x23]]
        %v999 = vstv %s998
        %v1000 = vmul.f32 %v929, %v999
        %v1001 = vadd.f32 %v997, %v1000
        %s1002 = sld [smem:[#allocation7 + $0x30]]
        %v1003 = vstv %s1002
        %v1004 = vmul.f32 %v934, %v1003
        %v1005 = vadd.f32 %v1001, %v1004
        %s1006 = sld [smem:[#allocation7 + $0x31]]
        %v1007 = vstv %s1006
        %v1008 = vmul.f32 %v939, %v1007
        %v1009 = vadd.f32 %v1005, %v1008
        %s1010 = sld [smem:[#allocation7 + $0x32]]
        %v1011 = vstv %s1010
        %v1012 = vmul.f32 %v944, %v1011
        %v1013 = vadd.f32 %v1009, %v1012
        %s1014 = sld [smem:[#allocation7 + $0x3f]]
        %v1015 = vstv %s1014
        %v1016 = vmul.f32 %v949, %v1015
        %v1017 = vadd.f32 %v1013, %v1016
        %s1018 = sld [smem:[#allocation7 + $0x40]]
        %v1019 = vstv %s1018
        %v1020 = vmul.f32 %v954, %v1019
        %v1021 = vadd.f32 %v1017, %v1020
        %s1022 = sld [smem:[#allocation7 + $0x41]]
        %v1023 = vstv %s1022
        %v1024 = vmul.f32 %v959, %v1023
        %v1025 = vadd.f32 %v1021, %v1024
        %s1026 = sld [smem:[#allocation8 + $0x1]]
        %v1027 = vstv %s1026
        %v1028 = vadd.f32 %v1025, %v1027
        %s1029 = sld [smem:[#allocation7 + $0x6]]
        %v1030 = vstv %s1029
        %v1031 = vmul.f32 %v890, %v1030
        %s1032 = sld [smem:[#allocation7 + $0x7]]
        %v1033 = vstv %s1032
        %v1034 = vmul.f32 %v894, %v1033
        %v1035 = vadd.f32 %v1031, %v1034
        %s1036 = sld [smem:[#allocation7 + $0x8]]
        %v1037 = vstv %s1036
        %v1038 = vmul.f32 %v899, %v1037
        %v1039 = vadd.f32 %v1035, %v1038
        %s1040 = sld [smem:[#allocation7 + $0x15]]
        %v1041 = vstv %s1040
        %v1042 = vmul.f32 %v904, %v1041
        %v1043 = vadd.f32 %v1039, %v1042
        %s1044 = sld [smem:[#allocation7 + $0x16]]
        %v1045 = vstv %s1044
        %v1046 = vmul.f32 %v909, %v1045
        %v1047 = vadd.f32 %v1043, %v1046
        %s1048 = sld [smem:[#allocation7 + $0x17]]
        %v1049 = vstv %s1048
        %v1050 = vmul.f32 %v914, %v1049
        %v1051 = vadd.f32 %v1047, %v1050
        %s1052 = sld [smem:[#allocation7 + $0x24]]
        %v1053 = vstv %s1052
        %v1054 = vmul.f32 %v919, %v1053
        %v1055 = vadd.f32 %v1051, %v1054
        %s1056 = sld [smem:[#allocation7 + $0x25]]
        %v1057 = vstv %s1056
        %v1058 = vmul.f32 %v924, %v1057
        %v1059 = vadd.f32 %v1055, %v1058
        %s1060 = sld [smem:[#allocation7 + $0x26]]
        %v1061 = vstv %s1060
        %v1062 = vmul.f32 %v929, %v1061
        %v1063 = vadd.f32 %v1059, %v1062
        %s1064 = sld [smem:[#allocation7 + $0x33]]
        %v1065 = vstv %s1064
        %v1066 = vmul.f32 %v934, %v1065
        %v1067 = vadd.f32 %v1063, %v1066
        %s1068 = sld [smem:[#allocation7 + $0x34]]
        %v1069 = vstv %s1068
        %v1070 = vmul.f32 %v939, %v1069
        %v1071 = vadd.f32 %v1067, %v1070
        %s1072 = sld [smem:[#allocation7 + $0x35]]
        %v1073 = vstv %s1072
        %v1074 = vmul.f32 %v944, %v1073
        %v1075 = vadd.f32 %v1071, %v1074
        %s1076 = sld [smem:[#allocation7 + $0x42]]
        %v1077 = vstv %s1076
        %v1078 = vmul.f32 %v949, %v1077
        %v1079 = vadd.f32 %v1075, %v1078
        %s1080 = sld [smem:[#allocation7 + $0x43]]
        %v1081 = vstv %s1080
        %v1082 = vmul.f32 %v954, %v1081
        %v1083 = vadd.f32 %v1079, %v1082
        %s1084 = sld [smem:[#allocation7 + $0x44]]
        %v1085 = vstv %s1084
        %v1086 = vmul.f32 %v959, %v1085
        %v1087 = vadd.f32 %v1083, %v1086
        %s1088 = sld [smem:[#allocation8 + $0x2]]
        %v1089 = vstv %s1088
        %v1090 = vadd.f32 %v1087, %v1089
        %s1091 = sld [smem:[#allocation7 + $0x9]]
        %v1092 = vstv %s1091
        %v1093 = vmul.f32 %v890, %v1092
        %s1094 = sld [smem:[#allocation7 + $0xa]]
        %v1095 = vstv %s1094
        %v1096 = vmul.f32 %v894, %v1095
        %v1097 = vadd.f32 %v1093, %v1096
        %s1098 = sld [smem:[#allocation7 + $0xb]]
        %v1099 = vstv %s1098
        %v1100 = vmul.f32 %v899, %v1099
        %v1101 = vadd.f32 %v1097, %v1100
        %s1102 = sld [smem:[#allocation7 + $0x18]]
        %v1103 = vstv %s1102
        %v1104 = vmul.f32 %v904, %v1103
        %v1105 = vadd.f32 %v1101, %v1104
        %s1106 = sld [smem:[#allocation7 + $0x19]]
        %v1107 = vstv %s1106
        %v1108 = vmul.f32 %v909, %v1107
        %v1109 = vadd.f32 %v1105, %v1108
        %s1110 = sld [smem:[#allocation7 + $0x1a]]
        %v1111 = vstv %s1110
        %v1112 = vmul.f32 %v914, %v1111
        %v1113 = vadd.f32 %v1109, %v1112
        %s1114 = sld [smem:[#allocation7 + $0x27]]
        %v1115 = vstv %s1114
        %v1116 = vmul.f32 %v919, %v1115
        %v1117 = vadd.f32 %v1113, %v1116
        %s1118 = sld [smem:[#allocation7 + $0x28]]
        %v1119 = vstv %s1118
        %v1120 = vmul.f32 %v924, %v1119
        %v1121 = vadd.f32 %v1117, %v1120
        %s1122 = sld [smem:[#allocation7 + $0x29]]
        %v1123 = vstv %s1122
        %v1124 = vmul.f32 %v929, %v1123
        %v1125 = vadd.f32 %v1121, %v1124
        %s1126 = sld [smem:[#allocation7 + $0x36]]
        %v1127 = vstv %s1126
        %v1128 = vmul.f32 %v934, %v1127
        %v1129 = vadd.f32 %v1125, %v1128
        %s1130 = sld [smem:[#allocation7 + $0x37]]
        %v1131 = vstv %s1130
        %v1132 = vmul.f32 %v939, %v1131
        %v1133 = vadd.f32 %v1129, %v1132
        %s1134 = sld [smem:[#allocation7 + $0x38]]
        %v1135 = vstv %s1134
        %v1136 = vmul.f32 %v944, %v1135
        %v1137 = vadd.f32 %v1133, %v1136
        %s1138 = sld [smem:[#allocation7 + $0x45]]
        %v1139 = vstv %s1138
        %v1140 = vmul.f32 %v949, %v1139
        %v1141 = vadd.f32 %v1137, %v1140
        %s1142 = sld [smem:[#allocation7 + $0x46]]
        %v1143 = vstv %s1142
        %v1144 = vmul.f32 %v954, %v1143
        %v1145 = vadd.f32 %v1141, %v1144
        %s1146 = sld [smem:[#allocation7 + $0x47]]
        %v1147 = vstv %s1146
        %v1148 = vmul.f32 %v959, %v1147
        %v1149 = vadd.f32 %v1145, %v1148
        %s1150 = sld [smem:[#allocation8 + $0x3]]
        %v1151 = vstv %s1150
        %v1152 = vadd.f32 %v1149, %v1151
        %s1153 = sld [smem:[#allocation7 + $0xc]]
        %v1154 = vstv %s1153
        %v1155 = vmul.f32 %v890, %v1154
        %s1156 = sld [smem:[#allocation7 + $0xd]]
        %v1157 = vstv %s1156
        %v1158 = vmul.f32 %v894, %v1157
        %v1159 = vadd.f32 %v1155, %v1158
        %s1160 = sld [smem:[#allocation7 + $0xe]]
        %v1161 = vstv %s1160
        %v1162 = vmul.f32 %v899, %v1161
        %v1163 = vadd.f32 %v1159, %v1162
        %s1164 = sld [smem:[#allocation7 + $0x1b]]
        %v1165 = vstv %s1164
        %v1166 = vmul.f32 %v904, %v1165
        %v1167 = vadd.f32 %v1163, %v1166
        %s1168 = sld [smem:[#allocation7 + $0x1c]]
        %v1169 = vstv %s1168
        %v1170 = vmul.f32 %v909, %v1169
        %v1171 = vadd.f32 %v1167, %v1170
        %s1172 = sld [smem:[#allocation7 + $0x1d]]
        %v1173 = vstv %s1172
        %v1174 = vmul.f32 %v914, %v1173
        %v1175 = vadd.f32 %v1171, %v1174
        %s1176 = sld [smem:[#allocation7 + $0x2a]]
        %v1177 = vstv %s1176
        %v1178 = vmul.f32 %v919, %v1177
        %v1179 = vadd.f32 %v1175, %v1178
        %s1180 = sld [smem:[#allocation7 + $0x2b]]
        %v1181 = vstv %s1180
        %v1182 = vmul.f32 %v924, %v1181
        %v1183 = vadd.f32 %v1179, %v1182
        %s1184 = sld [smem:[#allocation7 + $0x2c]]
        %v1185 = vstv %s1184
        %v1186 = vmul.f32 %v929, %v1185
        %v1187 = vadd.f32 %v1183, %v1186
        %s1188 = sld [smem:[#allocation7 + $0x39]]
        %v1189 = vstv %s1188
        %v1190 = vmul.f32 %v934, %v1189
        %v1191 = vadd.f32 %v1187, %v1190
        %s1192 = sld [smem:[#allocation7 + $0x3a]]
        %v1193 = vstv %s1192
        %v1194 = vmul.f32 %v939, %v1193
        %v1195 = vadd.f32 %v1191, %v1194
        %s1196 = sld [smem:[#allocation7 + $0x3b]]
        %v1197 = vstv %s1196
        %v1198 = vmul.f32 %v944, %v1197
        %v1199 = vadd.f32 %v1195, %v1198
        %s1200 = sld [smem:[#allocation7 + $0x48]]
        %v1201 = vstv %s1200
        %v1202 = vmul.f32 %v949, %v1201
        %v1203 = vadd.f32 %v1199, %v1202
        %s1204 = sld [smem:[#allocation7 + $0x49]]
        %v1205 = vstv %s1204
        %v1206 = vmul.f32 %v954, %v1205
        %v1207 = vadd.f32 %v1203, %v1206
        %s1208 = sld [smem:[#allocation7 + $0x4a]]
        %v1209 = vstv %s1208
        %v1210 = vmul.f32 %v959, %v1209
        %v1211 = vadd.f32 %v1207, %v1210
        %s1212 = sld [smem:[#allocation8 + $0x4]]
        %v1213 = vstv %s1212
        %v1214 = vadd.f32 %v1211, %v1213
        %v1215 = vmax.f32 %v966, %v1028
        %v1216 = vmax.f32 %v1215, %v1090
        %v1217 = vmax.f32 %v1216, %v1152
        %v1218 = vmax.f32 %v1217, %v1214
        %v1219 = vsub.f32 %v966, %v1218
        %v1220 = vmul.f32 %v1219, 1.442695
        %v1221 = vpow.pop %v1220
        %v1222 = vsub.f32 %v1028, %v1218
        %v1223 = vmul.f32 %v1222, 1.442695
        %v1224 = vpow.pop %v1223
        %v1225 = vsub.f32 %v1090, %v1218
        %v1226 = vmul.f32 %v1225, 1.442695
        %v1227 = vpow.pop %v1226
        %v1228 = vsub.f32 %v1152, %v1218
        %v1229 = vmul.f32 %v1228, 1.442695
        %v1230 = vpow.pop %v1229
        %v1231 = vsub.f32 %v1214, %v1218
        %v1232 = vmul.f32 %v1231, 1.442695
        %v1233 = vpow.pop %v1232
        %v1234 = vadd.f32 %v1221, %v1224
        %v1235 = vadd.f32 %v1234, %v1227
        %v1236 = vadd.f32 %v1235, %v1230
        %v1237 = vadd.f32 %v1236, %v1233
        %v1238 = vrcp.pop %v1237
        %v1239 = vmul.f32 %v1221, %v1238
        %1240 = vst [vmem:[%s586] sm:$0x3] %v1239
        %v1241 = vld [vmem:[%s554] sm:$0x3]
        %v1242 = vmul.f32 %v1239, %v1241
        %1243 = vst [vmem:[%s570] sm:$0x3] %v1242
        %v1244 = vld [vmem:[%s621] sm:$0x3]
        %v1245 = vmul.f32 %v1239, %v1244
        %s1246 = scalar_lea.vmem %s570, 2
        %1247 = vst [vmem:[%s1246] sm:$0x3] %v1245
        %v1248 = vld [vmem:[%s637] sm:$0x3]
        %v1249 = vmul.f32 %v1239, %v1248
        %s1250 = scalar_lea.vmem %s570, 4
        %1251 = vst [vmem:[%s1250] sm:$0x3] %v1249
        %v1252 = vmul.f32 %v1224, %v1238
        %s1253 = scalar_lea.vmem %s586, 2
        %1254 = vst [vmem:[%s1253] sm:$0x3] %v1252
        %v1255 = vld [vmem:[%s659] sm:$0x3]
        %v1256 = vmul.f32 %v1252, %v1255
        %s1257 = scalar_lea.vmem %s570, 6
        %1258 = vst [vmem:[%s1257] sm:$0x3] %v1256
        %v1259 = vld [vmem:[%s675] sm:$0x3]
        %v1260 = vmul.f32 %v1252, %v1259
        %s1261 = scalar_lea.vmem %s570, 8
        %1262 = vst [vmem:[%s1261] sm:$0x3] %v1260
        %v1263 = vld [vmem:[%s691] sm:$0x3]
        %v1264 = vmul.f32 %v1252, %v1263
        %s1265 = scalar_lea.vmem %s570, 10
        %1266 = vst [vmem:[%s1265] sm:$0x3] %v1264
        %v1267 = vmul.f32 %v1227, %v1238
        %s1268 = scalar_lea.vmem %s586, 4
        %1269 = vst [vmem:[%s1268] sm:$0x3] %v1267
        %v1270 = vld [vmem:[%s713] sm:$0x3]
        %v1271 = vmul.f32 %v1267, %v1270
        %s1272 = scalar_lea.vmem %s570, 12
        %1273 = vst [vmem:[%s1272] sm:$0x3] %v1271
        %v1274 = vld [vmem:[%s729] sm:$0x3]
        %v1275 = vmul.f32 %v1267, %v1274
        %s1276 = scalar_lea.vmem %s570, 14
        %1277 = vst [vmem:[%s1276] sm:$0x3] %v1275
        %v1278 = vld [vmem:[%s745] sm:$0x3]
        %v1279 = vmul.f32 %v1267, %v1278
        %s1280 = scalar_lea.vmem %s570, 16
        %1281 = vst [vmem:[%s1280] sm:$0x3] %v1279
        %v1282 = vmul.f32 %v1230, %v1238
        %s1283 = scalar_lea.vmem %s586, 6
        %1284 = vst [vmem:[%s1283] sm:$0x3] %v1282
        %v1285 = vld [vmem:[%s767] sm:$0x3]
        %v1286 = vmul.f32 %v1282, %v1285
        %s1287 = scalar_lea.vmem %s570, 18
        %1288 = vst [vmem:[%s1287] sm:$0x3] %v1286
        %v1289 = vld [vmem:[%s783] sm:$0x3]
        %v1290 = vmul.f32 %v1282, %v1289
        %s1291 = scalar_lea.vmem %s570, 20
        %1292 = vst [vmem:[%s1291] sm:$0x3] %v1290
        %v1293 = vld [vmem:[%s799] sm:$0x3]
        %v1294 = vmul.f32 %v1282, %v1293
        %s1295 = scalar_lea.vmem %s570, 22
        %1296 = vst [vmem:[%s1295] sm:$0x3] %v1294
        %v1297 = vmul.f32 %v1233, %v1238
        %s1298 = scalar_lea.vmem %s586, 8
        %1299 = vst [vmem:[%s1298] sm:$0x3] %v1297
        %v1300 = vld [vmem:[%s821] sm:$0x3]
        %v1301 = vmul.f32 %v1297, %v1300
        %s1302 = scalar_lea.vmem %s570, 24
        %1303 = vst [vmem:[%s1302] sm:$0x3] %v1301
        %v1304 = vld [vmem:[%s837] sm:$0x3]
        %v1305 = vmul.f32 %v1297, %v1304
        %s1306 = scalar_lea.vmem %s570, 26
        %1307 = vst [vmem:[%s1306] sm:$0x3] %v1305
        %v1308 = vld [vmem:[%s853] sm:$0x3]
        %v1309 = vmul.f32 %v1297, %v1308
        %s1310 = scalar_lea.vmem %s570, 28
        %1311 = vst [vmem:[%s1310] sm:$0x3] %v1309
        %v1312 = vld [vmem:[%s570] sm:$0x3]
        %v1313 = vld [vmem:[%s1257] sm:$0x3]
        %v1314 = vadd.f32 %v1312, %v1313
        %v1315 = vld [vmem:[%s1272] sm:$0x3]
        %v1316 = vadd.f32 %v1314, %v1315
        %v1317 = vld [vmem:[%s1287] sm:$0x3]
        %v1318 = vadd.f32 %v1316, %v1317
        %v1319 = vld [vmem:[%s1302] sm:$0x3]
        %v1320 = vadd.f32 %v1318, %v1319
        %v1321 = vmul.f32 %v1320, 0.2
        %1322 = vst [vmem:[%s578] sm:$0x3] %v1321
        %v1323 = vld [vmem:[%s1246] sm:$0x3]
        %v1324 = vld [vmem:[%s1261] sm:$0x3]
        %v1325 = vadd.f32 %v1323, %v1324
        %v1326 = vld [vmem:[%s1276] sm:$0x3]
        %v1327 = vadd.f32 %v1325, %v1326
        %v1328 = vld [vmem:[%s1291] sm:$0x3]
        %v1329 = vadd.f32 %v1327, %v1328
        %v1330 = vld [vmem:[%s1306] sm:$0x3]
        %v1331 = vadd.f32 %v1329, %v1330
        %v1332 = vmul.f32 %v1331, 0.2
        %s1333 = scalar_lea.vmem %s578, 2
        %1334 = vst [vmem:[%s1333] sm:$0x3] %v1332
        %v1335 = vld [vmem:[%s1250] sm:$0x3]
        %v1336 = vld [vmem:[%s1265] sm:$0x3]
        %v1337 = vadd.f32 %v1335, %v1336
        %v1338 = vld [vmem:[%s1280] sm:$0x3]
        %v1339 = vadd.f32 %v1337, %v1338
        %v1340 = vld [vmem:[%s1295] sm:$0x3]
        %v1341 = vadd.f32 %v1339, %v1340
        %v1342 = vld [vmem:[%s1310] sm:$0x3]
        %v1343 = vadd.f32 %v1341, %v1342
        %v1344 = vmul.f32 %v1343, 0.2
        %s1345 = scalar_lea.vmem %s578, 4
        %1346 = vst [vmem:[%s1345] sm:$0x3] %v1344
        %p1347 = scmp.lt.s32.totalorder %s28, 1
        %s1348 = scalar_select %p1347, %s28, 1
        %p1349 = scmp.lt.s32.totalorder %s29, 0
        %s1350 = scalar_select %p1349, %s29, 0
        %s1351 = smul.addr %s1348, 15
        %s1352 = sadd.s32 %s1350, %s1351
        %s1353 = smul.addr %s1352, 2
        %s1354 = scalar_lea.vmem %s5, %s1353
        %p1355 = scmp.lt.s32.totalorder %s28, 1
        %s1356 = scalar_select %p1355, %s28, 1
        %p1357 = scmp.lt.s32.totalorder %s29, 0
        %s1358 = scalar_select %p1357, %s29, 0
        %s1359 = smul.addr %s1356, 3
        %s1360 = sadd.s32 %s1358, %s1359
        %s1361 = smul.addr %s1360, 2
        %s1362 = scalar_lea.vmem %s6, %s1361
        %p1363 = scmp.lt.s32.totalorder %s28, 1
        %s1364 = scalar_select %p1363, %s28, 1
        %p1365 = scmp.lt.s32.totalorder %s29, 0
        %s1366 = scalar_select %p1365, %s29, 0
        %s1367 = smul.addr %s1364, 15
        %s1368 = sadd.s32 %s1366, %s1367
        %s1369 = smul.addr %s1368, 2
        %s1370 = scalar_lea.vmem %s7, %s1369
        %p1371 = scmp.lt.s32.totalorder %s28, 1
        %s1372 = scalar_select %p1371, %s28, 1
        %p1373 = scmp.lt.s32.totalorder %s29, 0
        %s1374 = scalar_select %p1373, %s29, 0
        %s1375 = smul.addr %s1372, 3
        %s1376 = sadd.s32 %s1374, %s1375
        %s1377 = smul.addr %s1376, 2
        %s1378 = scalar_lea.vmem %s8, %s1377
        %p1379 = scmp.lt.s32.totalorder %s28, 1
        %s1380 = scalar_select %p1379, %s28, 1
        %p1381 = scmp.lt.s32.totalorder %s29, 0
        %s1382 = scalar_select %p1381, %s29, 0
        %s1383 = smul.addr %s1380, 5
        %s1384 = sadd.s32 %s1382, %s1383
        %s1385 = smul.addr %s1384, 2
        %s1386 = scalar_lea.vmem %s9, %s1385
        // Predicated region
        $region98: #{burst_align_stn_forward.1} parent=76 // pred_check
          %p1387 = pneg %p168
        $region99: #{burst_align_stn_forward.1} parent=76 // pred_check_branch
          %1389 = sbr.rel (%p1387) target = $region101
        $region100: #{burst_align_stn_forward.1} parent=76 // pred_region
          _
        $region101: #{burst_align_stn_forward.1} parent=76 // pred_fallthru
          _
        // Predicated region
        $region102: #{burst_align_stn_forward.1} parent=76 // pred_check
          %p1390 = pneg %p196
        $region103: #{burst_align_stn_forward.1} parent=76 // pred_check_branch
          %1392 = sbr.rel (%p1390) target = $region105
        $region104: #{burst_align_stn_forward.1} parent=76 // pred_region
          _
        $region105: #{burst_align_stn_forward.1} parent=76 // pred_fallthru
          _
        // Predicated region
        $region106: #{burst_align_stn_forward.1} parent=76 // pred_check
          %p1393 = pneg %p224
        $region107: #{burst_align_stn_forward.1} parent=76 // pred_check_branch
          %1395 = sbr.rel (%p1393) target = $region109
        $region108: #{burst_align_stn_forward.1} parent=76 // pred_region
          _
        $region109: #{burst_align_stn_forward.1} parent=76 // pred_fallthru
          _
        // Predicated region
        $region110: #{burst_align_stn_forward.1} parent=76 // pred_check
          %p1396 = pneg %p252
        $region111: #{burst_align_stn_forward.1} parent=76 // pred_check_branch
          %1398 = sbr.rel (%p1396) target = $region113
        $region112: #{burst_align_stn_forward.1} parent=76 // pred_region
          _
        $region113: #{burst_align_stn_forward.1} parent=76 // pred_fallthru
          _
        // Predicated region
        $region114: #{burst_align_stn_forward.1} parent=76 // pred_check
          %p1399 = pneg %p280
        $region115: #{burst_align_stn_forward.1} parent=76 // pred_check_branch
          %1401 = sbr.rel (%p1399) target = $region117
        $region116: #{burst_align_stn_forward.1} parent=76 // pred_region
          _
        $region117: #{burst_align_stn_forward.1} parent=76 // pred_fallthru
          _
      $region77: #{burst_align_stn_forward.1} parent=5 // pred_fallthru
        _
      %p1402 = scmp.le.s32.totalorder 2, %s19
      // Predicated region
      $region118: #{burst_align_stn_forward.1} parent=5 // pred_check
        %p1403 = pneg %p1402
      $region119: #{burst_align_stn_forward.1} parent=5 // pred_check_branch
        %1405 = sbr.rel (%p1403) target = $region121
      $region120: #{burst_align_stn_forward.1} parent=5 // pred_region
        %s1406 = ssub.s32 %s19, 2
        // Predicated region
        $region122: #{burst_align_stn_forward.1} parent=120 // pred_check
          %p1407 = pneg %p174
        $region123: #{burst_align_stn_forward.1} parent=120 // pred_check_branch
          %1409 = sbr.rel (%p1407) target = $region125
        $region124: #{burst_align_stn_forward.1} parent=120 // pred_region
          %p1410 = scmp.lt.s32.totalorder %s30, 1
          %s1411 = scalar_select %p1410, %s30, 1
          %p1412 = scmp.lt.s32.totalorder %s31, 0
          %s1413 = scalar_select %p1412, %s31, 0
          %s1414 = smul.addr %s1411, 15
          %s1415 = sadd.s32 %s1413, %s1414
          %s1416 = smul.addr %s1415, 2
          %s1417 = scalar_lea.vmem %s5, %s1416
        $region125: #{burst_align_stn_forward.1} parent=120 // pred_fallthru
          _
        // Predicated region
        $region126: #{burst_align_stn_forward.1} parent=120 // pred_check
          %p1418 = pneg %p202
        $region127: #{burst_align_stn_forward.1} parent=120 // pred_check_branch
          %1420 = sbr.rel (%p1418) target = $region129
        $region128: #{burst_align_stn_forward.1} parent=120 // pred_region
          %p1421 = scmp.lt.s32.totalorder %s30, 1
          %s1422 = scalar_select %p1421, %s30, 1
          %p1423 = scmp.lt.s32.totalorder %s31, 0
          %s1424 = scalar_select %p1423, %s31, 0
          %s1425 = smul.addr %s1422, 3
          %s1426 = sadd.s32 %s1424, %s1425
          %s1427 = smul.addr %s1426, 2
          %s1428 = scalar_lea.vmem %s6, %s1427
        $region129: #{burst_align_stn_forward.1} parent=120 // pred_fallthru
          _
        // Predicated region
        $region130: #{burst_align_stn_forward.1} parent=120 // pred_check
          %p1429 = pneg %p230
        $region131: #{burst_align_stn_forward.1} parent=120 // pred_check_branch
          %1431 = sbr.rel (%p1429) target = $region133
        $region132: #{burst_align_stn_forward.1} parent=120 // pred_region
          %p1432 = scmp.lt.s32.totalorder %s30, 1
          %s1433 = scalar_select %p1432, %s30, 1
          %p1434 = scmp.lt.s32.totalorder %s31, 0
          %s1435 = scalar_select %p1434, %s31, 0
          %s1436 = smul.addr %s1433, 15
          %s1437 = sadd.s32 %s1435, %s1436
          %s1438 = smul.addr %s1437, 2
          %s1439 = scalar_lea.vmem %s7, %s1438
        $region133: #{burst_align_stn_forward.1} parent=120 // pred_fallthru
          _
        // Predicated region
        $region134: #{burst_align_stn_forward.1} parent=120 // pred_check
          %p1440 = pneg %p258
        $region135: #{burst_align_stn_forward.1} parent=120 // pred_check_branch
          %1442 = sbr.rel (%p1440) target = $region137
        $region136: #{burst_align_stn_forward.1} parent=120 // pred_region
          %p1443 = scmp.lt.s32.totalorder %s30, 1
          %s1444 = scalar_select %p1443, %s30, 1
          %p1445 = scmp.lt.s32.totalorder %s31, 0
          %s1446 = scalar_select %p1445, %s31, 0
          %s1447 = smul.addr %s1444, 3
          %s1448 = sadd.s32 %s1446, %s1447
          %s1449 = smul.addr %s1448, 2
          %s1450 = scalar_lea.vmem %s8, %s1449
        $region137: #{burst_align_stn_forward.1} parent=120 // pred_fallthru
          _
        // Predicated region
        $region138: #{burst_align_stn_forward.1} parent=120 // pred_check
          %p1451 = pneg %p286
        $region139: #{burst_align_stn_forward.1} parent=120 // pred_check_branch
          %1453 = sbr.rel (%p1451) target = $region141
        $region140: #{burst_align_stn_forward.1} parent=120 // pred_region
          %p1454 = scmp.lt.s32.totalorder %s30, 1
          %s1455 = scalar_select %p1454, %s30, 1
          %p1456 = scmp.lt.s32.totalorder %s31, 0
          %s1457 = scalar_select %p1456, %s31, 0
          %s1458 = smul.addr %s1455, 5
          %s1459 = sadd.s32 %s1457, %s1458
          %s1460 = smul.addr %s1459, 2
          %s1461 = scalar_lea.vmem %s9, %s1460
        $region141: #{burst_align_stn_forward.1} parent=120 // pred_fallthru
          _
      $region121: #{burst_align_stn_forward.1} parent=5 // pred_fallthru
        _
    $region6: #{burst_align_stn_forward.1} parent=1 // loop_footer
      %s23 = sadd.s32 1, %s19
    $region7: #{burst_align_stn_forward.1} parent=1 // loop_footer_branch
      %18 = sbr.rel target = $region3
    $region8: #{burst_align_stn_forward.1} parent=1 // loop_exit
      _
    %1462 = vsyncpa [#allocation4], 1
    %s1463 = scalar_lea.sflag [#allocation4], 1
    %1464 = vsyncpa %s1463, 1
    %1465 = vsyncpa [#allocation6], 1
    %1466 = vsyncpa [#allocation9], 1

</llo_original>
